<compile_context>
chip_gen: v5e
topology: v5e:2x2
jax: 0.10.0
libtpu: 0.0.40
codegen_flags: <defaults>
</compile_context>

<pallas_src>
import math
import functools

import jax
import jax.numpy as jnp
from jax import lax
from jax.experimental import pallas as pl
from jax.experimental.pallas import tpu as pltpu


# ----------------------------------------------------------------------------
# Pallas kernels
# ----------------------------------------------------------------------------

def _mm_bias_kernel(x_ref, w_ref, b_ref, o_ref, *, activation):
    acc = jnp.dot(x_ref[...], w_ref[...], preferred_element_type=jnp.float32)
    acc = acc + b_ref[...]
    if activation == "leaky_relu":
        acc = jnp.where(acc >= 0, acc, 0.2 * acc)
    o_ref[...] = acc


def matmul_bias(x_bf16, w_bf16, b_f32, activation=None):
    """(M,K)bf16 @ (K,N)bf16 + b (f32 accum), optional fused LeakyReLU(0.2)."""
    M, _ = x_bf16.shape
    N = w_bf16.shape[1]
    return pl.pallas_call(
        functools.partial(_mm_bias_kernel, activation=activation),
        out_shape=jax.ShapeDtypeStruct((M, N), jnp.float32),
    )(x_bf16, w_bf16, b_f32)


def _ln(x, g, b, eps):
    """LayerNorm over the whole 2-D per-sample slab (all elements)."""
    mean = jnp.mean(x, keepdims=True)
    c = x - mean
    var = jnp.mean(c * c, keepdims=True)
    return c * lax.rsqrt(var + eps) * g + b


def _cell_stage1_kernel(ps_ref, pt_ref, ws_ref, bs_ref, wtn_ref, btn_ref,
                        g_sn_ref, b_sn_ref, g_sc_ref, b_sc_ref, g_tn_ref, b_tn_ref,
                        s_att_ref, t_att_ref, tt_ref, o_ref,
                        *, B, nh, hw, tau, inv_sqrt_d, eps):
    """Fused: [conv_s_next|conv_s] matmul (N=4*nh lane-dense), conv_t_next matmul,
    3 LayerNorms, tau-softmax attention, t_att gate, T_fusion blend.
    Output columns: [0:nh] = T_fusion, [nh:4nh] = LN(S_concat)."""
    s_out = jnp.dot(ps_ref[...], ws_ref[...],
                    preferred_element_type=jnp.float32) + bs_ref[...]      # (M, 4nh)
    t_out = jnp.dot(pt_ref[...], wtn_ref[...],
                    preferred_element_type=jnp.float32) + btn_ref[...]     # (M, nh)

    g_sn, b_sn = g_sn_ref[...], b_sn_ref[...]
    g_sc, b_sc = g_sc_ref[...], b_sc_ref[...]
    g_tn, b_tn = g_tn_ref[...], b_tn_ref[...]

    for b in range(B):                       # B is tiny & static -> unrolled
        r0, r1 = b * hw, (b + 1) * hw
        s_next = _ln(s_out[r0:r1, :nh], g_sn, b_sn, eps)                   # (hw, nh)
        s_conc = _ln(s_out[r0:r1, nh:], g_sc, b_sc, eps)                   # (hw, 3nh)
        t_next = _ln(t_out[r0:r1, :], g_tn, b_tn, eps)                     # (hw, nh)

        # attention weights over the tau-step spatial history (per sample)
        logits = []
        for i in range(tau):
            logits.append(jnp.sum(s_att_ref[i * B + b] * s_next,
                                  keepdims=True) * inv_sqrt_d)             # (1, 1)
        logits = jnp.concatenate(logits, axis=-1)                          # (1, tau)
        m = jnp.max(logits, axis=-1, keepdims=True)
        e = jnp.exp(logits - m)
        wts = e * pl.reciprocal(jnp.sum(e, axis=-1, keepdims=True), approx=True)

        trend = jnp.zeros_like(s_next)
        for i in range(tau):
            trend = trend + t_att_ref[i * B + b] * wts[:, i:i + 1]         # T_trend
        gate = jax.nn.sigmoid(t_next)                                      # t_att_gate
        t_fusion = tt_ref[b] * gate + (1.0 - gate) * trend                 # T_fusion

        o_ref[r0:r1, :] = jnp.concatenate([t_fusion, s_conc], axis=-1)     # lane-dense 4nh


def _cell_stage2_kernel(ptf_ref, wt_ref, bt_ref, g_tc_ref, b_tc_ref,
                        s1_ref, st_ref, tnew_ref, snew_ref,
                        *, B, nh, hw, eps, residual):
    """Fused: conv_t(T_fusion) matmul + LayerNorm + final T/S gating (channel-group
    splits done in-kernel on resident slabs)."""
    t_out = jnp.dot(ptf_ref[...], wt_ref[...],
                    preferred_element_type=jnp.float32) + bt_ref[...]      # (M, 3nh)
    g_tc, b_tc = g_tc_ref[...], b_tc_ref[...]
    s1 = s1_ref[...]                                                       # (M, 4nh)

    for b in range(B):
        r0, r1 = b * hw, (b + 1) * hw
        t_conc = _ln(t_out[r0:r1, :], g_tc, b_tc, eps)                     # (hw, 3nh)
        s_conc = s1[r0:r1, nh:]                                            # (hw, 3nh)
        t_g, t_t, t_s = t_conc[:, :nh], t_conc[:, nh:2 * nh], t_conc[:, 2 * nh:]
        s_g, s_t, s_s = s_conc[:, :nh], s_conc[:, nh:2 * nh], s_conc[:, 2 * nh:]
        Tg = jax.nn.sigmoid(t_g)
        Sg = jax.nn.sigmoid(s_g)
        tnew_ref[r0:r1, :] = Tg * t_t + (1.0 - Tg) * s_t
        s_new = Sg * s_s + (1.0 - Sg) * t_s
        if residual:
            s_new = s_new + st_ref[r0:r1, :]
        snew_ref[r0:r1, :] = s_new


# ----------------------------------------------------------------------------
# Conv glue (im2col / dilation in plain JAX, matmul on the MXU via Pallas)
# ----------------------------------------------------------------------------

def im2col(x, kh, kw, stride, padding):
    """NHWC im2col, column order (ki, kj, cin); output cast to bf16 for the MXU."""
    B, H, W, C = x.shape
    x = x.astype(jnp.bfloat16)
    if padding > 0:
        x = jnp.pad(x, ((0, 0), (padding, padding), (padding, padding), (0, 0)))
    Ho = (H + 2 * padding - kh) // stride + 1
    Wo = (W + 2 * padding - kw) // stride + 1
    cols = []
    for i in range(kh):
        for j in range(kw):
            cols.append(x[:, i:i + Ho * stride:stride, j:j + Wo * stride:stride, :])
    patches = jnp.concatenate(cols, axis=-1)          # (B, Ho, Wo, kh*kw*C)
    return patches.reshape(B * Ho * Wo, kh * kw * C), Ho, Wo


def conv2d(x, pconv, stride=1, padding=0, activation=None):
    B = x.shape[0]
    patches, Ho, Wo = im2col(x, pconv["kh"], pconv["kw"], stride, padding)
    out = matmul_bias(patches, pconv["wm"], pconv["b"], activation)
    return out.reshape(B, Ho, Wo, pconv["wm"].shape[1])


def conv_transpose2d(x, pconv, stride, padding, output_padding, activation=None):
    """ConvTranspose2d as dilate + pad + forward conv (weight stored in conv form)."""
    B, H, W, C = x.shape
    kh = pconv["kh"]
    Hd = (H - 1) * stride + 1
    Wd = (W - 1) * stride + 1
    xd = jnp.zeros((B, Hd, Wd, C), x.dtype).at[:, ::stride, ::stride, :].set(x)
    pad_lo = kh - 1 - padding
    pad_hi = pad_lo + output_padding
    xd = jnp.pad(xd, ((0, 0), (pad_lo, pad_hi), (pad_lo, pad_hi), (0, 0)))
    return conv2d(xd, pconv, stride=1, padding=0, activation=activation)


# ----------------------------------------------------------------------------
# MAUCell (2 fused Pallas kernels per cell)
# ----------------------------------------------------------------------------

def mau_cell(pc, T_t, S_t, t_att, s_att, cfg):
    B, Hc, Wc, nh = S_t.shape
    tau = t_att.shape[0]
    fs = cfg["filter_size"]
    pad = fs // 2
    stride = cfg["stride"]
    hw = Hc * Wc
    M = B * hw

    ps, _, _ = im2col(S_t, fs, fs, stride, pad)       # (M, fs*fs*nh) bf16
    pt, _, _ = im2col(T_t, fs, fs, stride, pad)

    stage1 = pl.pallas_call(
        functools.partial(_cell_stage1_kernel, B=B, nh=nh, hw=hw, tau=tau,
                          inv_sqrt_d=1.0 / math.sqrt(nh * hw), eps=1e-5),
        out_shape=jax.ShapeDtypeStruct((M, 4 * nh), jnp.float32),
    )(ps, pt, pc["w_s_comb"], pc["b_s_comb"], pc["w_tn"], pc["b_tn"],
      pc["g_sn"], pc["be_sn"], pc["g_sc"], pc["be_sc"], pc["g_tn"], pc["be_tn"],
      s_att.reshape(tau * B, hw, nh), t_att.reshape(tau * B, hw, nh),
      T_t.reshape(B, hw, nh))

    t_fusion = stage1[:, :nh].reshape(B, Hc, Wc, nh)
    ptf, _, _ = im2col(t_fusion, fs, fs, stride, pad)

    t_new, s_new = pl.pallas_call(
        functools.partial(_cell_stage2_kernel, B=B, nh=nh, hw=hw, eps=1e-5,
                          residual=(cfg["cell_mode"] == "residual")),
        out_shape=(jax.ShapeDtypeStruct((M, nh), jnp.float32),
                   jax.ShapeDtypeStruct((M, nh), jnp.float32)),
    )(ptf, pc["w_t"], pc["b_t"], pc["g_tc"], pc["be_tc"],
      stage1, S_t.reshape(M, nh))

    return t_new.reshape(B, Hc, Wc, nh), s_new.reshape(B, Hc, Wc, nh)


# ----------------------------------------------------------------------------
# Parameter preparation (reshape to matmul layout, cast MXU operands to bf16)
# ----------------------------------------------------------------------------

def prepare_params(params, cfg):
    C, H, W = cfg["in_shape"]
    p = cfg["patch_size"]
    sr = cfg["sr_size"]
    height = (H // p) // sr
    width = (W // p) // sr
    hw = height * width

    def prep_conv(c):
        kh, kw, cin, cout = c["w"].shape
        return {"wm": c["w"].reshape(kh * kw * cin, cout).astype(jnp.bfloat16),
                "b": c["b"].reshape(1, cout).astype(jnp.float32),
                "kh": kh, "kw": kw}

    pp = {"enc": [prep_conv(c) for c in params["enc"]],
          "dec": [prep_conv(c) for c in params["dec"]],
          "srcnn": prep_conv(params["srcnn"]),
          "cells": []}

    for cp in params["cells"]:
        kh, kw, cin, nh = cp["w_s_next"].shape
        khT, kwT, cinT, _ = cp["w_t_next"].shape
        # fuse conv_s_next (nh out) + conv_s (3nh out) -> one lane-dense N=4nh matmul
        w_s_comb = jnp.concatenate([cp["w_s_next"], cp["w_s"]], axis=-1)
        b_s_comb = jnp.concatenate([cp["b_s_next"], cp["b_s"]], axis=-1)
        pp["cells"].append({
            "w_s_comb": w_s_comb.reshape(kh * kw * cin, 4 * nh).astype(jnp.bfloat16),
            "b_s_comb": b_s_comb.reshape(1, 4 * nh).astype(jnp.float32),
            "w_tn": cp["w_t_next"].reshape(khT * kwT * cinT, nh).astype(jnp.bfloat16),
            "b_tn": cp["b_t_next"].reshape(1, nh).astype(jnp.float32),
            "w_t": cp["w_t"].reshape(khT * kwT * cinT, 3 * nh).astype(jnp.bfloat16),
            "b_t": cp["b_t"].reshape(1, 3 * nh).astype(jnp.float32),
            # LayerNorm params presented in (H*W, C) HWC layout (gamma=1/beta=0 at init;
            # importing torch checkpoints would require a CHW->HWC permutation).
            "g_sn": cp["ln_s_next_g"].reshape(hw, nh),
            "be_sn": cp["ln_s_next_b"].reshape(hw, nh),
            "g_sc": cp["ln_s_g"].reshape(hw, 3 * nh),
            "be_sc": cp["ln_s_b"].reshape(hw, 3 * nh),
            "g_tn": cp["ln_t_next_g"].reshape(hw, nh),
            "be_tn": cp["ln_t_next_b"].reshape(hw, nh),
            "g_tc": cp["ln_t_g"].reshape(hw, 3 * nh),
            "be_tc": cp["ln_t_b"].reshape(hw, 3 * nh),
        })
    return pp


# ----------------------------------------------------------------------------
# MAU model forward (jit + lax.scan over time)
# ----------------------------------------------------------------------------

def mau_forward(params, cfg, input_frames, target_frames, train=True):
    frames = jnp.concatenate([input_frames, target_frames], axis=1)   # (B,T,C,H,W)
    B, T, C, H, W = frames.shape
    p = cfg["patch_size"]
    h, w = H // p, W // p
    frame_channel = C * p * p

    # F.unfold(kernel=patch, stride=patch) == space-to-depth, channel order (c, ki, kj)
    fr = frames.reshape(B, T, C, h, p, w, p).transpose(0, 1, 2, 4, 6, 3, 5)
    fr = fr.reshape(B, T, frame_channel, h, w)
    fr = jnp.transpose(fr, (0, 1, 3, 4, 2))                           # (B, T, h, w, Cf)

    sr = cfg["sr_size"]
    n_sr = int(math.log2(sr))
    height, width = h // sr, w // sr
    num_layers = cfg["num_layers"]
    num_hidden = cfg["num_hidden"]
    tau = cfg["tau"]
    Tsteps = cfg["total_length"] - 1

    pp = prepare_params(params, cfg)                                  # bf16 weights, once
    ndec = len(pp["dec"])

    xs_frames = jnp.transpose(fr[:, :Tsteps], (1, 0, 2, 3, 4))        # (Tsteps,B,h,w,Cf)
    use_input = jnp.arange(Tsteps) < cfg["pre_seq_length"]

    def zeros_state(i):
        return jnp.zeros((B, height, width, num_hidden[i]), jnp.float32)

    carry0 = (
        jnp.zeros((B, h, w, frame_channel), jnp.float32),             # x_gen
        tuple(zeros_state(i) for i in range(num_layers)),             # T_t
        tuple(jnp.zeros((tau, B, height, width, num_hidden[i]), jnp.float32)
              for i in range(num_layers)),                            # T history (tau)
        tuple(jnp.zeros((tau, B, height, width, num_hidden[i]), jnp.float32)
              for i in range(num_layers)),                            # S history (tau)
    )

    def step(carry, xs):
        x_gen, T_t, t_hist, s_hist = carry
        frame_t, use_in = xs
        net = jnp.where(use_in, frame_t, x_gen)

        # encoder stack
        feat = conv2d(net, pp["enc"][0], stride=1, padding=0, activation="leaky_relu")
        encoded = [feat]
        for i in range(1, n_sr + 1):
            feat = conv2d(feat, pp["enc"][i], stride=2, padding=1,
                          activation="leaky_relu")
            encoded.append(feat)

        S_t = feat
        new_Tt, new_th, new_sh = [], [], []
        for i in range(num_layers):
            s_hist_i = jnp.concatenate([s_hist[i][1:], S_t[None]], axis=0)
            T_new, S_t = mau_cell(pp["cells"][i], T_t[i], S_t,
                                  t_hist[i], s_hist[i], cfg)
            t_hist_i = jnp.concatenate([t_hist[i][1:], T_new[None]], axis=0)
            new_Tt.append(T_new)
            new_th.append(t_hist_i)
            new_sh.append(s_hist_i)

        out = S_t
        for i in range(ndec):
            act = "leaky_relu" if i < ndec - 1 else None
            out = conv_transpose2d(out, pp["dec"][i], stride=2, padding=1,
                                   output_padding=1, activation=act)
            if cfg["model_mode"] == "recall":
                out = out + encoded[-2 - i]

        x_gen_new = conv2d(out, pp["srcnn"], stride=1, padding=0, activation=None)
        return (x_gen_new, tuple(new_Tt), tuple(new_th), tuple(new_sh)), x_gen_new

    _, gen = lax.scan(step, carry0, (xs_frames, use_input))           # (Tsteps,B,h,w,Cf)

    # F.fold == depth-to-space (inverse of the unfold above)
    nf = jnp.transpose(gen, (1, 0, 4, 2, 3))                          # (B,Tsteps,Cf,h,w)
    nf = nf.reshape(B, Tsteps, C, p, p, h, w).transpose(0, 1, 2, 5, 3, 6, 4)
    nf = nf.reshape(B, Tsteps, C, H, W)
    if not train:
        nf = nf[:, -cfg["aft_seq_length"]:]
    return nf


# ----------------------------------------------------------------------------
# Deterministic parameter init (shapes per MAU_Model.__init__ / MAUCell)
# ----------------------------------------------------------------------------

def init_params(key, cfg):
    C, H, W = cfg["in_shape"]
    p = cfg["patch_size"]
    frame_channel = C * p * p
    num_hidden = cfg["num_hidden"]
    num_layers = cfg["num_layers"]
    sr = cfg["sr_size"]
    n_sr = int(math.log2(sr))
    h, w = H // p, W // p
    height, width = h // sr, w // sr
    fs = cfg["filter_size"]

    keys = iter(jax.random.split(key, 256))

    def conv_init(kh, kw, cin, cout):
        k1, k2 = jax.random.split(next(keys))
        bound = 1.0 / math.sqrt(kh * kw * cin)
        w_ = jax.random.uniform(k1, (kh, kw, cin, cout), jnp.float32, -bound, bound)
        b_ = jax.random.uniform(k2, (cout,), jnp.float32, -bound, bound)
        return {"w": w_, "b": b_}

    params = {}
    enc = [conv_init(1, 1, frame_channel, num_hidden[0])]
    for _ in range(n_sr):
        enc.append(conv_init(3, 3, num_hidden[0], num_hidden[0]))
    params["enc"] = enc

    dec = []
    for _ in range(n_sr):       # ConvTranspose2d weights stored in equivalent-conv form
        dec.append(conv_init(3, 3, num_hidden[-1], num_hidden[-1]))
    params["dec"] = dec

    params["srcnn"] = conv_init(1, 1, num_hidden[-1], frame_channel)
    # NOTE: self.merge / self.conv_last_sr are unused in forward -> not initialized.

    cells = []
    for i in range(num_layers):
        in_ch = num_hidden[i - 1]
        nh = num_hidden[i]
        D1 = nh * height * width
        D3 = 3 * nh * height * width
        ct, ctn = conv_init(fs, fs, in_ch, 3 * nh), conv_init(fs, fs, in_ch, nh)
        cs, csn = conv_init(fs, fs, nh, 3 * nh), conv_init(fs, fs, nh, nh)
        cells.append({
            "w_t": ct["w"], "b_t": ct["b"],
            "w_t_next": ctn["w"], "b_t_next": ctn["b"],
            "w_s": cs["w"], "b_s": cs["b"],
            "w_s_next": csn["w"], "b_s_next": csn["b"],
            "ln_t_g": jnp.ones((D3,), jnp.float32), "ln_t_b": jnp.zeros((D3,), jnp.float32),
            "ln_t_next_g": jnp.ones((D1,), jnp.float32), "ln_t_next_b": jnp.zeros((D1,), jnp.float32),
            "ln_s_g": jnp.ones((D3,), jnp.float32), "ln_s_b": jnp.zeros((D3,), jnp.float32),
            "ln_s_next_g": jnp.ones((D1,), jnp.float32), "ln_s_next_b": jnp.zeros((D1,), jnp.float32),
        })
    params["cells"] = cells
    return params


# ----------------------------------------------------------------------------
# Main
# ----------------------------------------------------------------------------

if __name__ == "__main__":
    cfg = dict(
        in_shape=(1, 16, 16),      # (C, H, W)
        num_layers=2,
        num_hidden=[32, 32],
        patch_size=2,
        unfoldstride=2,            # == patch_size -> unfold is space-to-depth
        sr_size=2,
        tau=4,
        cell_mode="normal",
        model_mode="recall",
        filter_size=3,
        stride=1,
        pre_seq_length=4,
        aft_seq_length=4,
        total_length=8,
    )

    key = jax.random.PRNGKey(0)
    kp, ki, kt = jax.random.split(key, 3)
    params = init_params(kp, cfg)

    C, H, W = cfg["in_shape"]
    B = 2
    x = jax.random.normal(ki, (B, cfg["pre_seq_length"], C, H, W), jnp.float32)
    y = jax.random.normal(kt, (B, cfg["aft_seq_length"], C, H, W), jnp.float32)

    fwd = jax.jit(lambda prm, xin, yin: mau_forward(prm, cfg, xin, yin, train=True))
    out = jax.block_until_ready(fwd(params, x, y))

    assert out.shape == (B, cfg["total_length"] - 1, C, H, W), out.shape
    assert bool(jnp.all(jnp.isfinite(out)))
    print("KERNEL_OK")
</pallas_src>

<mosaic_0001>
module attributes {stable_mosaic.version = 11 : i64} {
  func.func @_mm_bias_kernel(%arg0: memref<128x4xbf16, #tpu.memory_space<vmem>>, %arg1: memref<4x32xbf16, #tpu.memory_space<vmem>>, %arg2: memref<1x32xf32, #tpu.memory_space<vmem>>, %arg3: memref<128x32xf32, #tpu.memory_space<vmem>>) attributes {dimension_semantics = [], scalar_prefetch = 0 : i64, scratch_operands = 0 : i64, tpu.core_type = #tpu.core_type<tc>} {
    %c0 = arith.constant 0 : index
    %c0_0 = arith.constant 0 : index
    %0 = vector.load %arg0[%c0, %c0_0] : memref<128x4xbf16, #tpu.memory_space<vmem>>, vector<128x4xbf16>
    %c0_1 = arith.constant 0 : index
    %c0_2 = arith.constant 0 : index
    %1 = vector.load %arg1[%c0_1, %c0_2] : memref<4x32xbf16, #tpu.memory_space<vmem>>, vector<4x32xbf16>
    %cst = arith.constant dense<0.000000e+00> : vector<128x32xf32>
    %2 = tpu.matmul %0, %1, %cst {dimension_numbers = #tpu.dot_dimension_numbers<[1], [0], [0], [1], [0, 0, 1, 1], [], []>} : vector<128x4xbf16>, vector<4x32xbf16>, vector<128x32xf32> -> vector<128x32xf32>
    %c0_3 = arith.constant 0 : index
    %c0_4 = arith.constant 0 : index
    %3 = vector.load %arg2[%c0_3, %c0_4] : memref<1x32xf32, #tpu.memory_space<vmem>>, vector<1x32xf32>
    %4 = vector.broadcast %3 : vector<1x32xf32> to vector<128x32xf32>
    %5 = arith.addf %2, %4 : vector<128x32xf32>
    %cst_5 = arith.constant 0.000000e+00 : f32
    %6 = vector.broadcast %cst_5 : f32 to vector<128x32xf32>
    %7 = arith.cmpf oge, %5, %6 : vector<128x32xf32>
    %cst_6 = arith.constant 2.000000e-01 : f32
    %8 = vector.broadcast %cst_6 : f32 to vector<128x32xf32>
    %9 = arith.mulf %8, %5 : vector<128x32xf32>
    %10 = arith.select %7, %5, %9 : vector<128x32xi1>, vector<128x32xf32>
    %c0_7 = arith.constant 0 : index
    %c0_8 = arith.constant 0 : index
    %11 = vector.load %arg3[%c0_7, %c0_8] : memref<128x32xf32, #tpu.memory_space<vmem>>, vector<128x32xf32>
    tpu.vector_store %arg3[%c0_7, %c0_8], %10 {strides = array<i32>} : memref<128x32xf32, #tpu.memory_space<vmem>>, vector<128x32xf32>,
    return
  }
}

module attributes {stable_mosaic.version = 11 : i64} {
  func.func @_mm_bias_kernel(%arg0: memref<32x288xbf16, #tpu.memory_space<vmem>>, %arg1: memref<288x32xbf16, #tpu.memory_space<vmem>>, %arg2: memref<1x32xf32, #tpu.memory_space<vmem>>, %arg3: memref<32x32xf32, #tpu.memory_space<vmem>>) attributes {dimension_semantics = [], scalar_prefetch = 0 : i64, scratch_operands = 0 : i64, tpu.core_type = #tpu.core_type<tc>} {
    %c0 = arith.constant 0 : index
    %c0_0 = arith.constant 0 : index
    %0 = vector.load %arg0[%c0, %c0_0] : memref<32x288xbf16, #tpu.memory_space<vmem>>, vector<32x288xbf16>
    %c0_1 = arith.constant 0 : index
    %c0_2 = arith.constant 0 : index
    %1 = vector.load %arg1[%c0_1, %c0_2] : memref<288x32xbf16, #tpu.memory_space<vmem>>, vector<288x32xbf16>
    %cst = arith.constant dense<0.000000e+00> : vector<32x32xf32>
    %2 = tpu.matmul %0, %1, %cst {dimension_numbers = #tpu.dot_dimension_numbers<[1], [0], [0], [1], [0, 0, 1, 1], [], []>} : vector<32x288xbf16>, vector<288x32xbf16>, vector<32x32xf32> -> vector<32x32xf32>
    %c0_3 = arith.constant 0 : index
    %c0_4 = arith.constant 0 : index
    %3 = vector.load %arg2[%c0_3, %c0_4] : memref<1x32xf32, #tpu.memory_space<vmem>>, vector<1x32xf32>
    %4 = vector.broadcast %3 : vector<1x32xf32> to vector<32x32xf32>
    %5 = arith.addf %2, %4 : vector<32x32xf32>
    %cst_5 = arith.constant 0.000000e+00 : f32
    %6 = vector.broadcast %cst_5 : f32 to vector<32x32xf32>
    %7 = arith.cmpf oge, %5, %6 : vector<32x32xf32>
    %cst_6 = arith.constant 2.000000e-01 : f32
    %8 = vector.broadcast %cst_6 : f32 to vector<32x32xf32>
    %9 = arith.mulf %8, %5 : vector<32x32xf32>
    %10 = arith.select %7, %5, %9 : vector<32x32xi1>, vector<32x32xf32>
    %c0_7 = arith.constant 0 : index
    %c0_8 = arith.constant 0 : index
    %11 = vector.load %arg3[%c0_7, %c0_8] : memref<32x32xf32, #tpu.memory_space<vmem>>, vector<32x32xf32>
    tpu.vector_store %arg3[%c0_7, %c0_8], %10 {strides = array<i32>} : memref<32x32xf32, #tpu.memory_space<vmem>>, vector<32x32xf32>,
    return
  }
}

module attributes {stable_mosaic.version = 11 : i64} {
  func.func @_cell_stage1_kernel(%arg0: memref<32x288xbf16, #tpu.memory_space<vmem>>, %arg1: memref<32x288xbf16, #tpu.memory_space<vmem>>, %arg2: memref<288x128xbf16, #tpu.memory_space<vmem>>, %arg3: memref<1x128xf32, #tpu.memory_space<vmem>>, %arg4: memref<288x32xbf16, #tpu.memory_space<vmem>>, %arg5: memref<1x32xf32, #tpu.memory_space<vmem>>, %arg6: memref<16x32xf32, #tpu.memory_space<vmem>>, %arg7: memref<16x32xf32, #tpu.memory_space<vmem>>, %arg8: memref<16x96xf32, #tpu.memory_space<vmem>>, %arg9: memref<16x96xf32, #tpu.memory_space<vmem>>, %arg10: memref<16x32xf32, #tpu.memory_space<vmem>>, %arg11: memref<16x32xf32, #tpu.memory_space<vmem>>, %arg12: memref<8x16x32xf32, #tpu.memory_space<vmem>>, %arg13: memref<8x16x32xf32, #tpu.memory_space<vmem>>, %arg14: memref<2x16x32xf32, #tpu.memory_space<vmem>>, %arg15: memref<32x128xf32, #tpu.memory_space<vmem>>) attributes {dimension_semantics = [], scalar_prefetch = 0 : i64, scratch_operands = 0 : i64, tpu.core_type = #tpu.core_type<tc>} {
    %c0 = arith.constant 0 : index
    %c0_0 = arith.constant 0 : index
    %0 = vector.load %arg0[%c0, %c0_0] : memref<32x288xbf16, #tpu.memory_space<vmem>>, vector<32x288xbf16>
    %c0_1 = arith.constant 0 : index
    %c0_2 = arith.constant 0 : index
    %1 = vector.load %arg2[%c0_1, %c0_2] : memref<288x128xbf16, #tpu.memory_space<vmem>>, vector<288x128xbf16>
    %cst = arith.constant dense<0.000000e+00> : vector<32x128xf32>
    %2 = tpu.matmul %0, %1, %cst {dimension_numbers = #tpu.dot_dimension_numbers<[1], [0], [0], [1], [0, 0, 1, 1], [], []>} : vector<32x288xbf16>, vector<288x128xbf16>, vector<32x128xf32> -> vector<32x128xf32>
    %c0_3 = arith.constant 0 : index
    %c0_4 = arith.constant 0 : index
    %3 = vector.load %arg3[%c0_3, %c0_4] : memref<1x128xf32, #tpu.memory_space<vmem>>, vector<1x128xf32>
    %4 = vector.broadcast %3 : vector<1x128xf32> to vector<32x128xf32>
    %5 = arith.addf %2, %4 : vector<32x128xf32>
    %c0_5 = arith.constant 0 : index
    %c0_6 = arith.constant 0 : index
    %6 = vector.load %arg1[%c0_5, %c0_6] : memref<32x288xbf16, #tpu.memory_space<vmem>>, vector<32x288xbf16>
    %c0_7 = arith.constant 0 : index
    %c0_8 = arith.constant 0 : index
    %7 = vector.load %arg4[%c0_7, %c0_8] : memref<288x32xbf16, #tpu.memory_space<vmem>>, vector<288x32xbf16>
    %cst_9 = arith.constant dense<0.000000e+00> : vector<32x32xf32>
    %8 = tpu.matmul %6, %7, %cst_9 {dimension_numbers = #tpu.dot_dimension_numbers<[1], [0], [0], [1], [0, 0, 1, 1], [], []>} : vector<32x288xbf16>, vector<288x32xbf16>, vector<32x32xf32> -> vector<32x32xf32>
    %c0_10 = arith.constant 0 : index
    %c0_11 = arith.constant 0 : index
    %9 = vector.load %arg5[%c0_10, %c0_11] : memref<1x32xf32, #tpu.memory_space<vmem>>, vector<1x32xf32>
    %10 = vector.broadcast %9 : vector<1x32xf32> to vector<32x32xf32>
    %11 = arith.addf %8, %10 : vector<32x32xf32>
    %c0_12 = arith.constant 0 : index
    %c0_13 = arith.constant 0 : index
    %12 = vector.load %arg6[%c0_12, %c0_13] : memref<16x32xf32, #tpu.memory_space<vmem>>, vector<16x32xf32>
    %c0_14 = arith.constant 0 : index
    %c0_15 = arith.constant 0 : index
    %13 = vector.load %arg7[%c0_14, %c0_15] : memref<16x32xf32, #tpu.memory_space<vmem>>, vector<16x32xf32>
    %c0_16 = arith.constant 0 : index
    %c0_17 = arith.constant 0 : index
    %14 = vector.load %arg8[%c0_16, %c0_17] : memref<16x96xf32, #tpu.memory_space<vmem>>, vector<16x96xf32>
    %c0_18 = arith.constant 0 : index
    %c0_19 = arith.constant 0 : index
    %15 = vector.load %arg9[%c0_18, %c0_19] : memref<16x96xf32, #tpu.memory_space<vmem>>, vector<16x96xf32>
    %c0_20 = arith.constant 0 : index
    %c0_21 = arith.constant 0 : index
    %16 = vector.load %arg10[%c0_20, %c0_21] : memref<16x32xf32, #tpu.memory_space<vmem>>, vector<16x32xf32>
    %c0_22 = arith.constant 0 : index
    %c0_23 = arith.constant 0 : index
    %17 = vector.load %arg11[%c0_22, %c0_23] : memref<16x32xf32, #tpu.memory_space<vmem>>, vector<16x32xf32>
    %18 = vector.extract_strided_slice %5 {offsets = [0, 0], sizes = [16, 32], strides = [1, 1]} : vector<32x128xf32> to vector<16x32xf32>
    %19 = vector.shape_cast %18 : vector<16x32xf32> to vector<1x16x32xf32>
    %cst_24 = arith.constant dense<0.000000e+00> : vector<1xf32>
    %20 = vector.multi_reduction <add>, %19, %cst_24 [1, 2] : vector<1x16x32xf32> to vector<1xf32>
    %21 = vector.shape_cast %20 : vector<1xf32> to vector<1x1x1xf32>
    %22 = vector.extract %21[0, 0, 0] : f32 from vector<1x1x1xf32>
    %23 = vector.broadcast %22 : f32 to vector<1x1xf32>
    %cst_25 = arith.constant 5.120000e+02 : f32
    %24 = vector.broadcast %cst_25 : f32 to vector<1x1xf32>
    %25 = arith.divf %23, %24 : vector<1x1xf32>
    %26 = vector.broadcast %25 : vector<1x1xf32> to vector<16x32xf32>
    %27 = arith.subf %18, %26 : vector<16x32xf32>
    %28 = arith.mulf %27, %27 : vector<16x32xf32>
    %29 = vector.shape_cast %28 : vector<16x32xf32> to vector<1x16x32xf32>
    %cst_26 = arith.constant dense<0.000000e+00> : vector<1xf32>
    %30 = vector.multi_reduction <add>, %29, %cst_26 [1, 2] : vector<1x16x32xf32> to vector<1xf32>
    %31 = vector.shape_cast %30 : vector<1xf32> to vector<1x1x1xf32>
    %32 = vector.extract %31[0, 0, 0] : f32 from vector<1x1x1xf32>
    %33 = vector.broadcast %32 : f32 to vector<1x1xf32>
    %cst_27 = arith.constant 5.120000e+02 : f32
    %34 = vector.broadcast %cst_27 : f32 to vector<1x1xf32>
    %35 = arith.divf %33, %34 : vector<1x1xf32>
    %cst_28 = arith.constant 9.99999974E-6 : f32
    %36 = vector.broadcast %cst_28 : f32 to vector<1x1xf32>
    %37 = arith.addf %35, %36 : vector<1x1xf32>
    %38 = math.rsqrt %37 : vector<1x1xf32>
    %39 = vector.broadcast %38 : vector<1x1xf32> to vector<16x32xf32>
    %40 = arith.mulf %27, %39 : vector<16x32xf32>
    %41 = arith.mulf %40, %12 : vector<16x32xf32>
    %42 = arith.addf %41, %13 : vector<16x32xf32>
    %43 = vector.extract_strided_slice %5 {offsets = [0, 32], sizes = [16, 96], strides = [1, 1]} : vector<32x128xf32> to vector<16x96xf32>
    %44 = vector.shape_cast %43 : vector<16x96xf32> to vector<1x16x96xf32>
    %cst_29 = arith.constant dense<0.000000e+00> : vector<1xf32>
    %45 = vector.multi_reduction <add>, %44, %cst_29 [1, 2] : vector<1x16x96xf32> to vector<1xf32>
    %46 = vector.shape_cast %45 : vector<1xf32> to vector<1x1x1xf32>
    %47 = vector.extract %46[0, 0, 0] : f32 from vector<1x1x1xf32>
    %48 = vector.broadcast %47 : f32 to vector<1x1xf32>
    %cst_30 = arith.constant 1.536000e+03 : f32
    %49 = vector.broadcast %cst_30 : f32 to vector<1x1xf32>
    %50 = arith.divf %48, %49 : vector<1x1xf32>
    %51 = vector.broadcast %50 : vector<1x1xf32> to vector<16x96xf32>
    %52 = arith.subf %43, %51 : vector<16x96xf32>
    %53 = arith.mulf %52, %52 : vector<16x96xf32>
    %54 = vector.shape_cast %53 : vector<16x96xf32> to vector<1x16x96xf32>
    %cst_31 = arith.constant dense<0.000000e+00> : vector<1xf32>
    %55 = vector.multi_reduction <add>, %54, %cst_31 [1, 2] : vector<1x16x96xf32> to vector<1xf32>
    %56 = vector.shape_cast %55 : vector<1xf32> to vector<1x1x1xf32>
    %57 = vector.extract %56[0, 0, 0] : f32 from vector<1x1x1xf32>
    %58 = vector.broadcast %57 : f32 to vector<1x1xf32>
    %cst_32 = arith.constant 1.536000e+03 : f32
    %59 = vector.broadcast %cst_32 : f32 to vector<1x1xf32>
    %60 = arith.divf %58, %59 : vector<1x1xf32>
    %cst_33 = arith.constant 9.99999974E-6 : f32
    %61 = vector.broadcast %cst_33 : f32 to vector<1x1xf32>
    %62 = arith.addf %60, %61 : vector<1x1xf32>
    %63 = math.rsqrt %62 : vector<1x1xf32>
    %64 = vector.broadcast %63 : vector<1x1xf32> to vector<16x96xf32>
    %65 = arith.mulf %52, %64 : vector<16x96xf32>
    %66 = arith.mulf %65, %14 : vector<16x96xf32>
    %67 = arith.addf %66, %15 : vector<16x96xf32>
    %68 = vector.extract_strided_slice %11 {offsets = [0, 0], sizes = [16, 32], strides = [1, 1]} : vector<32x32xf32> to vector<16x32xf32>
    %69 = vector.shape_cast %68 : vector<16x32xf32> to vector<1x16x32xf32>
    %cst_34 = arith.constant dense<0.000000e+00> : vector<1xf32>
    %70 = vector.multi_reduction <add>, %69, %cst_34 [1, 2] : vector<1x16x32xf32> to vector<1xf32>
    %71 = vector.shape_cast %70 : vector<1xf32> to vector<1x1x1xf32>
    %72 = vector.extract %71[0, 0, 0] : f32 from vector<1x1x1xf32>
    %73 = vector.broadcast %72 : f32 to vector<1x1xf32>
    %cst_35 = arith.constant 5.120000e+02 : f32
    %74 = vector.broadcast %cst_35 : f32 to vector<1x1xf32>
    %75 = arith.divf %73, %74 : vector<1x1xf32>
    %76 = vector.broadcast %75 : vector<1x1xf32> to vector<16x32xf32>
    %77 = arith.subf %68, %76 : vector<16x32xf32>
    %78 = arith.mulf %77, %77 : vector<16x32xf32>
    %79 = vector.shape_cast %78 : vector<16x32xf32> to vector<1x16x32xf32>
    %cst_36 = arith.constant dense<0.000000e+00> : vector<1xf32>
    %80 = vector.multi_reduction <add>, %79, %cst_36 [1, 2] : vector<1x16x32xf32> to vector<1xf32>
    %81 = vector.shape_cast %80 : vector<1xf32> to vector<1x1x1xf32>
    %82 = vector.extract %81[0, 0, 0] : f32 from vector<1x1x1xf32>
    %83 = vector.broadcast %82 : f32 to vector<1x1xf32>
    %cst_37 = arith.constant 5.120000e+02 : f32
    %84 = vector.broadcast %cst_37 : f32 to vector<1x1xf32>
    %85 = arith.divf %83, %84 : vector<1x1xf32>
    %cst_38 = arith.constant 9.99999974E-6 : f32
    %86 = vector.broadcast %cst_38 : f32 to vector<1x1xf32>
    %87 = arith.addf %85, %86 : vector<1x1xf32>
    %88 = math.rsqrt %87 : vector<1x1xf32>
    %89 = vector.broadcast %88 : vector<1x1xf32> to vector<16x32xf32>
    %90 = arith.mulf %77, %89 : vector<16x32xf32>
    %91 = arith.mulf %90, %16 : vector<16x32xf32>
    %92 = arith.addf %91, %17 : vector<16x32xf32>
    %c0_39 = arith.constant 0 : index
    %c0_40 = arith.constant 0 : index
    %c0_41 = arith.constant 0 : index
    %93 = vector.load %arg12[%c0_39, %c0_40, %c0_41] : memref<8x16x32xf32, #tpu.memory_space<vmem>>, vector<1x16x32xf32>
    %94 = vector.shape_cast %93 : vector<1x16x32xf32> to vector<16x32xf32>
    %95 = arith.mulf %94, %42 : vector<16x32xf32>
    %96 = vector.shape_cast %95 : vector<16x32xf32> to vector<1x16x32xf32>
    %cst_42 = arith.constant dense<0.000000e+00> : vector<1xf32>
    %97 = vector.multi_reduction <add>, %96, %cst_42 [1, 2] : vector<1x16x32xf32> to vector<1xf32>
    %98 = vector.shape_cast %97 : vector<1xf32> to vector<1x1x1xf32>
    %99 = vector.extract %98[0, 0, 0] : f32 from vector<1x1x1xf32>
    %100 = vector.broadcast %99 : f32 to vector<1x1xf32>
    %cst_43 = arith.constant 0.0441941731 : f32
    %101 = vector.broadcast %cst_43 : f32 to vector<1x1xf32>
    %102 = arith.mulf %100, %101 : vector<1x1xf32>
    %c2 = arith.constant 2 : index
    %c0_44 = arith.constant 0 : index
    %c0_45 = arith.constant 0 : index
    %103 = vector.load %arg12[%c2, %c0_44, %c0_45] : memref<8x16x32xf32, #tpu.memory_space<vmem>>, vector<1x16x32xf32>
    %104 = vector.shape_cast %103 : vector<1x16x32xf32> to vector<16x32xf32>
    %105 = arith.mulf %104, %42 : vector<16x32xf32>
    %106 = vector.shape_cast %105 : vector<16x32xf32> to vector<1x16x32xf32>
    %cst_46 = arith.constant dense<0.000000e+00> : vector<1xf32>
    %107 = vector.multi_reduction <add>, %106, %cst_46 [1, 2] : vector<1x16x32xf32> to vector<1xf32>
    %108 = vector.shape_cast %107 : vector<1xf32> to vector<1x1x1xf32>
    %109 = vector.extract %108[0, 0, 0] : f32 from vector<1x1x1xf32>
    %110 = vector.broadcast %109 : f32 to vector<1x1xf32>
    %cst_47 = arith.constant 0.0441941731 : f32
    %111 = vector.broadcast %cst_47 : f32 to vector<1x1xf32>
    %112 = arith.mulf %110, %111 : vector<1x1xf32>
    %c4 = arith.constant 4 : index
    %c0_48 = arith.constant 0 : index
    %c0_49 = arith.constant 0 : index
    %113 = vector.load %arg12[%c4, %c0_48, %c0_49] : memref<8x16x32xf32, #tpu.memory_space<vmem>>, vector<1x16x32xf32>
    %114 = vector.shape_cast %113 : vector<1x16x32xf32> to vector<16x32xf32>
    %115 = arith.mulf %114, %42 : vector<16x32xf32>
    %116 = vector.shape_cast %115 : vector<16x32xf32> to vector<1x16x32xf32>
    %cst_50 = arith.constant dense<0.000000e+00> : vector<1xf32>
    %117 = vector.multi_reduction <add>, %116, %cst_50 [1, 2] : vector<1x16x32xf32> to vector<1xf32>
    %118 = vector.shape_cast %117 : vector<1xf32> to vector<1x1x1xf32>
    %119 = vector.extract %118[0, 0, 0] : f32 from vector<1x1x1xf32>
    %120 = vector.broadcast %119 : f32 to vector<1x1xf32>
    %cst_51 = arith.constant 0.0441941731 : f32
    %121 = vector.broadcast %cst_51 : f32 to vector<1x1xf32>
    %122 = arith.mulf %120, %121 : vector<1x1xf32>
    %c6 = arith.constant 6 : index
    %c0_52 = arith.constant 0 : index
    %c0_53 = arith.constant 0 : index
    %123 = vector.load %arg12[%c6, %c0_52, %c0_53] : memref<8x16x32xf32, #tpu.memory_space<vmem>>, vector<1x16x32xf32>
    %124 = vector.shape_cast %123 : vector<1x16x32xf32> to vector<16x32xf32>
    %125 = arith.mulf %124, %42 : vector<16x32xf32>
    %126 = vector.shape_cast %125 : vector<16x32xf32> to vector<1x16x32xf32>
    %cst_54 = arith.constant dense<0.000000e+00> : vector<1xf32>
    %127 = vector.multi_reduction <add>, %126, %cst_54 [1, 2] : vector<1x16x32xf32> to vector<1xf32>
    %128 = vector.shape_cast %127 : vector<1xf32> to vector<1x1x1xf32>
    %129 = vector.extract %128[0, 0, 0] : f32 from vector<1x1x1xf32>
    %130 = vector.broadcast %129 : f32 to vector<1x1xf32>
    %cst_55 = arith.constant 0.0441941731 : f32
    %131 = vector.broadcast %cst_55 : f32 to vector<1x1xf32>
    %132 = arith.mulf %130, %131 : vector<1x1xf32>
    %133 = tpu.concatenate %102, %112, %122, %132 in 1 : vector<1x1xf32>, vector<1x1xf32>, vector<1x1xf32>, vector<1x1xf32> -> vector<1x4xf32>
    %cst_56 = arith.constant dense<0xFF800000> : vector<1xf32>
    %134 = vector.multi_reduction <maximumf>, %133, %cst_56 [1] : vector<1x4xf32> to vector<1xf32>
    %135 = vector.shape_cast %134 : vector<1xf32> to vector<1x1xf32>
    %136 = vector.broadcast %135 : vector<1x1xf32> to vector<1x4xf32>
    %137 = arith.subf %133, %136 : vector<1x4xf32>
    %138 = math.exp %137 : vector<1x4xf32>
    %cst_57 = arith.constant dense<0.000000e+00> : vector<1xf32>
    %139 = vector.multi_reduction <add>, %138, %cst_57 [1] : vector<1x4xf32> to vector<1xf32>
    %140 = vector.shape_cast %139 : vector<1xf32> to vector<1x1xf32>
    %141 = tpu.reciprocal %140 {approx = true} : vector<1x1xf32> -> vector<1x1xf32>
    %142 = vector.broadcast %141 : vector<1x1xf32> to vector<1x4xf32>
    %143 = arith.mulf %138, %142 : vector<1x4xf32>
    %cst_58 = arith.constant 0.000000e+00 : f32
    %144 = vector.broadcast %cst_58 : f32 to vector<16x32xf32>
    %c0_59 = arith.constant 0 : index
    %c0_60 = arith.constant 0 : index
    %c0_61 = arith.constant 0 : index
    %145 = vector.load %arg13[%c0_59, %c0_60, %c0_61] : memref<8x16x32xf32, #tpu.memory_space<vmem>>, vector<1x16x32xf32>
    %146 = vector.shape_cast %145 : vector<1x16x32xf32> to vector<16x32xf32>
    %147 = vector.extract_strided_slice %143 {offsets = [0, 0], sizes = [1, 1], strides = [1, 1]} : vector<1x4xf32> to vector<1x1xf32>
    %148 = vector.broadcast %147 : vector<1x1xf32> to vector<16x32xf32>
    %149 = arith.mulf %146, %148 : vector<16x32xf32>
    %150 = arith.addf %144, %149 : vector<16x32xf32>
    %c2_62 = arith.constant 2 : index
    %c0_63 = arith.constant 0 : index
    %c0_64 = arith.constant 0 : index
    %151 = vector.load %arg13[%c2_62, %c0_63, %c0_64] : memref<8x16x32xf32, #tpu.memory_space<vmem>>, vector<1x16x32xf32>
    %152 = vector.shape_cast %151 : vector<1x16x32xf32> to vector<16x32xf32>
    %153 = vector.extract_strided_slice %143 {offsets = [0, 1], sizes = [1, 1], strides = [1, 1]} : vector<1x4xf32> to vector<1x1xf32>
    %154 = vector.broadcast %153 : vector<1x1xf32> to vector<16x32xf32>
    %155 = arith.mulf %152, %154 : vector<16x32xf32>
    %156 = arith.addf %150, %155 : vector<16x32xf32>
    %c4_65 = arith.constant 4 : index
    %c0_66 = arith.constant 0 : index
    %c0_67 = arith.constant 0 : index
    %157 = vector.load %arg13[%c4_65, %c0_66, %c0_67] : memref<8x16x32xf32, #tpu.memory_space<vmem>>, vector<1x16x32xf32>
    %158 = vector.shape_cast %157 : vector<1x16x32xf32> to vector<16x32xf32>
    %159 = vector.extract_strided_slice %143 {offsets = [0, 2], sizes = [1, 1], strides = [1, 1]} : vector<1x4xf32> to vector<1x1xf32>
    %160 = vector.broadcast %159 : vector<1x1xf32> to vector<16x32xf32>
    %161 = arith.mulf %158, %160 : vector<16x32xf32>
    %162 = arith.addf %156, %161 : vector<16x32xf32>
    %c6_68 = arith.constant 6 : index
    %c0_69 = arith.constant 0 : index
    %c0_70 = arith.constant 0 : index
    %163 = vector.load %arg13[%c6_68, %c0_69, %c0_70] : memref<8x16x32xf32, #tpu.memory_space<vmem>>, vector<1x16x32xf32>
    %164 = vector.shape_cast %163 : vector<1x16x32xf32> to vector<16x32xf32>
    %165 = vector.extract_strided_slice %143 {offsets = [0, 3], sizes = [1, 1], strides = [1, 1]} : vector<1x4xf32> to vector<1x1xf32>
    %166 = vector.broadcast %165 : vector<1x1xf32> to vector<16x32xf32>
    %167 = arith.mulf %164, %166 : vector<16x32xf32>
    %168 = arith.addf %162, %167 : vector<16x32xf32>
    %169 = arith.negf %92 : vector<16x32xf32>
    %170 = math.exp %169 : vector<16x32xf32>
    %cst_71 = arith.constant 1.000000e+00 : f32
    %171 = vector.broadcast %cst_71 : f32 to vector<16x32xf32>
    %172 = arith.addf %171, %170 : vector<16x32xf32>
    %173 = arith.divf %171, %172 : vector<16x32xf32>
    %c0_72 = arith.constant 0 : index
    %c0_73 = arith.constant 0 : index
    %c0_74 = arith.constant 0 : index
    %174 = vector.load %arg14[%c0_72, %c0_73, %c0_74] : memref<2x16x32xf32, #tpu.memory_space<vmem>>, vector<1x16x32xf32>
    %175 = vector.shape_cast %174 : vector<1x16x32xf32> to vector<16x32xf32>
    %176 = arith.mulf %175, %173 : vector<16x32xf32>
    %cst_75 = arith.constant 1.000000e+00 : f32
    %177 = vector.broadcast %cst_75 : f32 to vector<16x32xf32>
    %178 = arith.subf %177, %173 : vector<16x32xf32>
    %179 = arith.mulf %178, %168 : vector<16x32xf32>
    %180 = arith.addf %176, %179 : vector<16x32xf32>
    %181 = tpu.concatenate %180, %67 in 1 : vector<16x32xf32>, vector<16x96xf32> -> vector<16x128xf32>
    %c0_76 = arith.constant 0 : index
    %c0_77 = arith.constant 0 : index
    %182 = vector.load %arg15[%c0_76, %c0_77] : memref<32x128xf32, #tpu.memory_space<vmem>>, vector<16x128xf32>
    tpu.vector_store %arg15[%c0_76, %c0_77], %181 {strides = array<i32>} : memref<32x128xf32, #tpu.memory_space<vmem>>, vector<16x128xf32>,
    %183 = vector.extract_strided_slice %5 {offsets = [16, 0], sizes = [16, 32], strides = [1, 1]} : vector<32x128xf32> to vector<16x32xf32>
    %184 = vector.shape_cast %183 : vector<16x32xf32> to vector<1x16x32xf32>
    %cst_78 = arith.constant dense<0.000000e+00> : vector<1xf32>
    %185 = vector.multi_reduction <add>, %184, %cst_78 [1, 2] : vector<1x16x32xf32> to vector<1xf32>
    %186 = vector.shape_cast %185 : vector<1xf32> to vector<1x1x1xf32>
    %187 = vector.extract %186[0, 0, 0] : f32 from vector<1x1x1xf32>
    %188 = vector.broadcast %187 : f32 to vector<1x1xf32>
    %cst_79 = arith.constant 5.120000e+02 : f32
    %189 = vector.broadcast %cst_79 : f32 to vector<1x1xf32>
    %190 = arith.divf %188, %189 : vector<1x1xf32>
    %191 = vector.broadcast %190 : vector<1x1xf32> to vector<16x32xf32>
    %192 = arith.subf %183, %191 : vector<16x32xf32>
    %193 = arith.mulf %192, %192 : vector<16x32xf32>
    %194 = vector.shape_cast %193 : vector<16x32xf32> to vector<1x16x32xf32>
    %cst_80 = arith.constant dense<0.000000e+00> : vector<1xf32>
    %195 = vector.multi_reduction <add>, %194, %cst_80 [1, 2] : vector<1x16x32xf32> to vector<1xf32>
    %196 = vector.shape_cast %195 : vector<1xf32> to vector<1x1x1xf32>
    %197 = vector.extract %196[0, 0, 0] : f32 from vector<1x1x1xf32>
    %198 = vector.broadcast %197 : f32 to vector<1x1xf32>
    %cst_81 = arith.constant 5.120000e+02 : f32
    %199 = vector.broadcast %cst_81 : f32 to vector<1x1xf32>
    %200 = arith.divf %198, %199 : vector<1x1xf32>
    %cst_82 = arith.constant 9.99999974E-6 : f32
    %201 = vector.broadcast %cst_82 : f32 to vector<1x1xf32>
    %202 = arith.addf %200, %201 : vector<1x1xf32>
    %203 = math.rsqrt %202 : vector<1x1xf32>
    %204 = vector.broadcast %203 : vector<1x1xf32> to vector<16x32xf32>
    %205 = arith.mulf %192, %204 : vector<16x32xf32>
    %206 = arith.mulf %205, %12 : vector<16x32xf32>
    %207 = arith.addf %206, %13 : vector<16x32xf32>
    %208 = vector.extract_strided_slice %5 {offsets = [16, 32], sizes = [16, 96], strides = [1, 1]} : vector<32x128xf32> to vector<16x96xf32>
    %209 = vector.shape_cast %208 : vector<16x96xf32> to vector<1x16x96xf32>
    %cst_83 = arith.constant dense<0.000000e+00> : vector<1xf32>
    %210 = vector.multi_reduction <add>, %209, %cst_83 [1, 2] : vector<1x16x96xf32> to vector<1xf32>
    %211 = vector.shape_cast %210 : vector<1xf32> to vector<1x1x1xf32>
    %212 = vector.extract %211[0, 0, 0] : f32 from vector<1x1x1xf32>
    %213 = vector.broadcast %212 : f32 to vector<1x1xf32>
    %cst_84 = arith.constant 1.536000e+03 : f32
    %214 = vector.broadcast %cst_84 : f32 to vector<1x1xf32>
    %215 = arith.divf %213, %214 : vector<1x1xf32>
    %216 = vector.broadcast %215 : vector<1x1xf32> to vector<16x96xf32>
    %217 = arith.subf %208, %216 : vector<16x96xf32>
    %218 = arith.mulf %217, %217 : vector<16x96xf32>
    %219 = vector.shape_cast %218 : vector<16x96xf32> to vector<1x16x96xf32>
    %cst_85 = arith.constant dense<0.000000e+00> : vector<1xf32>
    %220 = vector.multi_reduction <add>, %219, %cst_85 [1, 2] : vector<1x16x96xf32> to vector<1xf32>
    %221 = vector.shape_cast %220 : vector<1xf32> to vector<1x1x1xf32>
    %222 = vector.extract %221[0, 0, 0] : f32 from vector<1x1x1xf32>
    %223 = vector.broadcast %222 : f32 to vector<1x1xf32>
    %cst_86 = arith.constant 1.536000e+03 : f32
    %224 = vector.broadcast %cst_86 : f32 to vector<1x1xf32>
    %225 = arith.divf %223, %224 : vector<1x1xf32>
    %cst_87 = arith.constant 9.99999974E-6 : f32
    %226 = vector.broadcast %cst_87 : f32 to vector<1x1xf32>
    %227 = arith.addf %225, %226 : vector<1x1xf32>
    %228 = math.rsqrt %227 : vector<1x1xf32>
    %229 = vector.broadcast %228 : vector<1x1xf32> to vector<16x96xf32>
    %230 = arith.mulf %217, %229 : vector<16x96xf32>
    %231 = arith.mulf %230, %14 : vector<16x96xf32>
    %232 = arith.addf %231, %15 : vector<16x96xf32>
    %233 = vector.extract_strided_slice %11 {offsets = [16, 0], sizes = [16, 32], strides = [1, 1]} : vector<32x32xf32> to vector<16x32xf32>
    %234 = vector.shape_cast %233 : vector<16x32xf32> to vector<1x16x32xf32>
    %cst_88 = arith.constant dense<0.000000e+00> : vector<1xf32>
    %235 = vector.multi_reduction <add>, %234, %cst_88 [1, 2] : vector<1x16x32xf32> to vector<1xf32>
    %236 = vector.shape_cast %235 : vector<1xf32> to vector<1x1x1xf32>
    %237 = vector.extract %236[0, 0, 0] : f32 from vector<1x1x1xf32>
    %238 = vector.broadcast %237 : f32 to vector<1x1xf32>
    %cst_89 = arith.constant 5.120000e+02 : f32
    %239 = vector.broadcast %cst_89 : f32 to vector<1x1xf32>
    %240 = arith.divf %238, %239 : vector<1x1xf32>
    %241 = vector.broadcast %240 : vector<1x1xf32> to vector<16x32xf32>
    %242 = arith.subf %233, %241 : vector<16x32xf32>
    %243 = arith.mulf %242, %242 : vector<16x32xf32>
    %244 = vector.shape_cast %243 : vector<16x32xf32> to vector<1x16x32xf32>
    %cst_90 = arith.constant dense<0.000000e+00> : vector<1xf32>
    %245 = vector.multi_reduction <add>, %244, %cst_90 [1, 2] : vector<1x16x32xf32> to vector<1xf32>
    %246 = vector.shape_cast %245 : vector<1xf32> to vector<1x1x1xf32>
    %247 = vector.extract %246[0, 0, 0] : f32 from vector<1x1x1xf32>
    %248 = vector.broadcast %247 : f32 to vector<1x1xf32>
    %cst_91 = arith.constant 5.120000e+02 : f32
    %249 = vector.broadcast %cst_91 : f32 to vector<1x1xf32>
    %250 = arith.divf %248, %249 : vector<1x1xf32>
    %cst_92 = arith.constant 9.99999974E-6 : f32
    %251 = vector.broadcast %cst_92 : f32 to vector<1x1xf32>
    %252 = arith.addf %250, %251 : vector<1x1xf32>
    %253 = math.rsqrt %252 : vector<1x1xf32>
    %254 = vector.broadcast %253 : vector<1x1xf32> to vector<16x32xf32>
    %255 = arith.mulf %242, %254 : vector<16x32xf32>
    %256 = arith.mulf %255, %16 : vector<16x32xf32>
    %257 = arith.addf %256, %17 : vector<16x32xf32>
    %c1 = arith.constant 1 : index
    %c0_93 = arith.constant 0 : index
    %c0_94 = arith.constant 0 : index
    %258 = vector.load %arg12[%c1, %c0_93, %c0_94] : memref<8x16x32xf32, #tpu.memory_space<vmem>>, vector<1x16x32xf32>
    %259 = vector.shape_cast %258 : vector<1x16x32xf32> to vector<16x32xf32>
    %260 = arith.mulf %259, %207 : vector<16x32xf32>
    %261 = vector.shape_cast %260 : vector<16x32xf32> to vector<1x16x32xf32>
    %cst_95 = arith.constant dense<0.000000e+00> : vector<1xf32>
    %262 = vector.multi_reduction <add>, %261, %cst_95 [1, 2] : vector<1x16x32xf32> to vector<1xf32>
    %263 = vector.shape_cast %262 : vector<1xf32> to vector<1x1x1xf32>
    %264 = vector.extract %263[0, 0, 0] : f32 from vector<1x1x1xf32>
    %265 = vector.broadcast %264 : f32 to vector<1x1xf32>
    %cst_96 = arith.constant 0.0441941731 : f32
    %266 = vector.broadcast %cst_96 : f32 to vector<1x1xf32>
    %267 = arith.mulf %265, %266 : vector<1x1xf32>
    %c3 = arith.constant 3 : index
    %c0_97 = arith.constant 0 : index
    %c0_98 = arith.constant 0 : index
    %268 = vector.load %arg12[%c3, %c0_97, %c0_98] : memref<8x16x32xf32, #tpu.memory_space<vmem>>, vector<1x16x32xf32>
    %269 = vector.shape_cast %268 : vector<1x16x32xf32> to vector<16x32xf32>
    %270 = arith.mulf %269, %207 : vector<16x32xf32>
    %271 = vector.shape_cast %270 : vector<16x32xf32> to vector<1x16x32xf32>
    %cst_99 = arith.constant dense<0.000000e+00> : vector<1xf32>
    %272 = vector.multi_reduction <add>, %271, %cst_99 [1, 2] : vector<1x16x32xf32> to vector<1xf32>
    %273 = vector.shape_cast %272 : vector<1xf32> to vector<1x1x1xf32>
    %274 = vector.extract %273[0, 0, 0] : f32 from vector<1x1x1xf32>
    %275 = vector.broadcast %274 : f32 to vector<1x1xf32>
    %cst_100 = arith.constant 0.0441941731 : f32
    %276 = vector.broadcast %cst_100 : f32 to vector<1x1xf32>
    %277 = arith.mulf %275, %276 : vector<1x1xf32>
    %c5 = arith.constant 5 : index
    %c0_101 = arith.constant 0 : index
    %c0_102 = arith.constant 0 : index
    %278 = vector.load %arg12[%c5, %c0_101, %c0_102] : memref<8x16x32xf32, #tpu.memory_space<vmem>>, vector<1x16x32xf32>
    %279 = vector.shape_cast %278 : vector<1x16x32xf32> to vector<16x32xf32>
    %280 = arith.mulf %279, %207 : vector<16x32xf32>
    %281 = vector.shape_cast %280 : vector<16x32xf32> to vector<1x16x32xf32>
    %cst_103 = arith.constant dense<0.000000e+00> : vector<1xf32>
    %282 = vector.multi_reduction <add>, %281, %cst_103 [1, 2] : vector<1x16x32xf32> to vector<1xf32>
    %283 = vector.shape_cast %282 : vector<1xf32> to vector<1x1x1xf32>
    %284 = vector.extract %283[0, 0, 0] : f32 from vector<1x1x1xf32>
    %285 = vector.broadcast %284 : f32 to vector<1x1xf32>
    %cst_104 = arith.constant 0.0441941731 : f32
    %286 = vector.broadcast %cst_104 : f32 to vector<1x1xf32>
    %287 = arith.mulf %285, %286 : vector<1x1xf32>
    %c7 = arith.constant 7 : index
    %c0_105 = arith.constant 0 : index
    %c0_106 = arith.constant 0 : index
    %288 = vector.load %arg12[%c7, %c0_105, %c0_106] : memref<8x16x32xf32, #tpu.memory_space<vmem>>, vector<1x16x32xf32>
    %289 = vector.shape_cast %288 : vector<1x16x32xf32> to vector<16x32xf32>
    %290 = arith.mulf %289, %207 : vector<16x32xf32>
    %291 = vector.shape_cast %290 : vector<16x32xf32> to vector<1x16x32xf32>
    %cst_107 = arith.constant dense<0.000000e+00> : vector<1xf32>
    %292 = vector.multi_reduction <add>, %291, %cst_107 [1, 2] : vector<1x16x32xf32> to vector<1xf32>
    %293 = vector.shape_cast %292 : vector<1xf32> to vector<1x1x1xf32>
    %294 = vector.extract %293[0, 0, 0] : f32 from vector<1x1x1xf32>
    %295 = vector.broadcast %294 : f32 to vector<1x1xf32>
    %cst_108 = arith.constant 0.0441941731 : f32
    %296 = vector.broadcast %cst_108 : f32 to vector<1x1xf32>
    %297 = arith.mulf %295, %296 : vector<1x1xf32>
    %298 = tpu.concatenate %267, %277, %287, %297 in 1 : vector<1x1xf32>, vector<1x1xf32>, vector<1x1xf32>, vector<1x1xf32> -> vector<1x4xf32>
    %cst_109 = arith.constant dense<0xFF800000> : vector<1xf32>
    %299 = vector.multi_reduction <maximumf>, %298, %cst_109 [1] : vector<1x4xf32> to vector<1xf32>
    %300 = vector.shape_cast %299 : vector<1xf32> to vector<1x1xf32>
    %301 = vector.broadcast %300 : vector<1x1xf32> to vector<1x4xf32>
    %302 = arith.subf %298, %301 : vector<1x4xf32>
    %303 = math.exp %302 : vector<1x4xf32>
    %cst_110 = arith.constant dense<0.000000e+00> : vector<1xf32>
    %304 = vector.multi_reduction <add>, %303, %cst_110 [1] : vector<1x4xf32> to vector<1xf32>
    %305 = vector.shape_cast %304 : vector<1xf32> to vector<1x1xf32>
    %306 = tpu.reciprocal %305 {approx = true} : vector<1x1xf32> -> vector<1x1xf32>
    %307 = vector.broadcast %306 : vector<1x1xf32> to vector<1x4xf32>
    %308 = arith.mulf %303, %307 : vector<1x4xf32>
    %cst_111 = arith.constant 0.000000e+00 : f32
    %309 = vector.broadcast %cst_111 : f32 to vector<16x32xf32>
    %c1_112 = arith.constant 1 : index
    %c0_113 = arith.constant 0 : index
    %c0_114 = arith.constant 0 : index
    %310 = vector.load %arg13[%c1_112, %c0_113, %c0_114] : memref<8x16x32xf32, #tpu.memory_space<vmem>>, vector<1x16x32xf32>
    %311 = vector.shape_cast %310 : vector<1x16x32xf32> to vector<16x32xf32>
    %312 = vector.extract_strided_slice %308 {offsets = [0, 0], sizes = [1, 1], strides = [1, 1]} : vector<1x4xf32> to vector<1x1xf32>
    %313 = vector.broadcast %312 : vector<1x1xf32> to vector<16x32xf32>
    %314 = arith.mulf %311, %313 : vector<16x32xf32>
    %315 = arith.addf %309, %314 : vector<16x32xf32>
    %c3_115 = arith.constant 3 : index
    %c0_116 = arith.constant 0 : index
    %c0_117 = arith.constant 0 : index
    %316 = vector.load %arg13[%c3_115, %c0_116, %c0_117] : memref<8x16x32xf32, #tpu.memory_space<vmem>>, vector<1x16x32xf32>
    %317 = vector.shape_cast %316 : vector<1x16x32xf32> to vector<16x32xf32>
    %318 = vector.extract_strided_slice %308 {offsets = [0, 1], sizes = [1, 1], strides = [1, 1]} : vector<1x4xf32> to vector<1x1xf32>
    %319 = vector.broadcast %318 : vector<1x1xf32> to vector<16x32xf32>
    %320 = arith.mulf %317, %319 : vector<16x32xf32>
    %321 = arith.addf %315, %320 : vector<16x32xf32>
    %c5_118 = arith.constant 5 : index
    %c0_119 = arith.constant 0 : index
    %c0_120 = arith.constant 0 : index
    %322 = vector.load %arg13[%c5_118, %c0_119, %c0_120] : memref<8x16x32xf32, #tpu.memory_space<vmem>>, vector<1x16x32xf32>
    %323 = vector.shape_cast %322 : vector<1x16x32xf32> to vector<16x32xf32>
    %324 = vector.extract_strided_slice %308 {offsets = [0, 2], sizes = [1, 1], strides = [1, 1]} : vector<1x4xf32> to vector<1x1xf32>
    %325 = vector.broadcast %324 : vector<1x1xf32> to vector<16x32xf32>
    %326 = arith.mulf %323, %325 : vector<16x32xf32>
    %327 = arith.addf %321, %326 : vector<16x32xf32>
    %c7_121 = arith.constant 7 : index
    %c0_122 = arith.constant 0 : index
    %c0_123 = arith.constant 0 : index
    %328 = vector.load %arg13[%c7_121, %c0_122, %c0_123] : memref<8x16x32xf32, #tpu.memory_space<vmem>>, vector<1x16x32xf32>
    %329 = vector.shape_cast %328 : vector<1x16x32xf32> to vector<16x32xf32>
    %330 = vector.extract_strided_slice %308 {offsets = [0, 3], sizes = [1, 1], strides = [1, 1]} : vector<1x4xf32> to vector<1x1xf32>
    %331 = vector.broadcast %330 : vector<1x1xf32> to vector<16x32xf32>
    %332 = arith.mulf %329, %331 : vector<16x32xf32>
    %333 = arith.addf %327, %332 : vector<16x32xf32>
    %334 = arith.negf %257 : vector<16x32xf32>
    %335 = math.exp %334 : vector<16x32xf32>
    %cst_124 = arith.constant 1.000000e+00 : f32
    %336 = vector.broadcast %cst_124 : f32 to vector<16x32xf32>
    %337 = arith.addf %336, %335 : vector<16x32xf32>
    %338 = arith.divf %336, %337 : vector<16x32xf32>
    %c1_125 = arith.constant 1 : index
    %c0_126 = arith.constant 0 : index
    %c0_127 = arith.constant 0 : index
    %339 = vector.load %arg14[%c1_125, %c0_126, %c0_127] : memref<2x16x32xf32, #tpu.memory_space<vmem>>, vector<1x16x32xf32>
    %340 = vector.shape_cast %339 : vector<1x16x32xf32> to vector<16x32xf32>
    %341 = arith.mulf %340, %338 : vector<16x32xf32>
    %cst_128 = arith.constant 1.000000e+00 : f32
    %342 = vector.broadcast %cst_128 : f32 to vector<16x32xf32>
    %343 = arith.subf %342, %338 : vector<16x32xf32>
    %344 = arith.mulf %343, %333 : vector<16x32xf32>
    %345 = arith.addf %341, %344 : vector<16x32xf32>
    %346 = tpu.concatenate %345, %232 in 1 : vector<16x32xf32>, vector<16x96xf32> -> vector<16x128xf32>
    %c16 = arith.constant 16 : index
    %c0_129 = arith.constant 0 : index
    %347 = vector.load %arg15[%c16, %c0_129] : memref<32x128xf32, #tpu.memory_space<vmem>>, vector<16x128xf32>
    tpu.vector_store %arg15[%c16, %c0_129], %346 {strides = array<i32>} : memref<32x128xf32, #tpu.memory_space<vmem>>, vector<16x128xf32>,
    return
  }
}

module attributes {stable_mosaic.version = 11 : i64} {
  func.func @_cell_stage2_kernel(%arg0: memref<32x288xbf16, #tpu.memory_space<vmem>>, %arg1: memref<288x96xbf16, #tpu.memory_space<vmem>>, %arg2: memref<1x96xf32, #tpu.memory_space<vmem>>, %arg3: memref<16x96xf32, #tpu.memory_space<vmem>>, %arg4: memref<16x96xf32, #tpu.memory_space<vmem>>, %arg5: memref<32x128xf32, #tpu.memory_space<vmem>>, %arg6: memref<32x32xf32, #tpu.memory_space<vmem>>, %arg7: memref<32x32xf32, #tpu.memory_space<vmem>>, %arg8: memref<32x32xf32, #tpu.memory_space<vmem>>) attributes {dimension_semantics = [], scalar_prefetch = 0 : i64, scratch_operands = 0 : i64, tpu.core_type = #tpu.core_type<tc>} {
    %c0 = arith.constant 0 : index
    %c0_0 = arith.constant 0 : index
    %0 = vector.load %arg0[%c0, %c0_0] : memref<32x288xbf16, #tpu.memory_space<vmem>>, vector<32x288xbf16>
    %c0_1 = arith.constant 0 : index
    %c0_2 = arith.constant 0 : index
    %1 = vector.load %arg1[%c0_1, %c0_2] : memref<288x96xbf16, #tpu.memory_space<vmem>>, vector<288x96xbf16>
    %cst = arith.constant dense<0.000000e+00> : vector<32x96xf32>
    %2 = tpu.matmul %0, %1, %cst {dimension_numbers = #tpu.dot_dimension_numbers<[1], [0], [0], [1], [0, 0, 1, 1], [], []>} : vector<32x288xbf16>, vector<288x96xbf16>, vector<32x96xf32> -> vector<32x96xf32>
    %c0_3 = arith.constant 0 : index
    %c0_4 = arith.constant 0 : index
    %3 = vector.load %arg2[%c0_3, %c0_4] : memref<1x96xf32, #tpu.memory_space<vmem>>, vector<1x96xf32>
    %4 = vector.broadcast %3 : vector<1x96xf32> to vector<32x96xf32>
    %5 = arith.addf %2, %4 : vector<32x96xf32>
    %c0_5 = arith.constant 0 : index
    %c0_6 = arith.constant 0 : index
    %6 = vector.load %arg3[%c0_5, %c0_6] : memref<16x96xf32, #tpu.memory_space<vmem>>, vector<16x96xf32>
    %c0_7 = arith.constant 0 : index
    %c0_8 = arith.constant 0 : index
    %7 = vector.load %arg4[%c0_7, %c0_8] : memref<16x96xf32, #tpu.memory_space<vmem>>, vector<16x96xf32>
    %c0_9 = arith.constant 0 : index
    %c0_10 = arith.constant 0 : index
    %8 = vector.load %arg5[%c0_9, %c0_10] : memref<32x128xf32, #tpu.memory_space<vmem>>, vector<32x128xf32>
    %9 = vector.extract_strided_slice %5 {offsets = [0, 0], sizes = [16, 96], strides = [1, 1]} : vector<32x96xf32> to vector<16x96xf32>
    %10 = vector.shape_cast %9 : vector<16x96xf32> to vector<1x16x96xf32>
    %cst_11 = arith.constant dense<0.000000e+00> : vector<1xf32>
    %11 = vector.multi_reduction <add>, %10, %cst_11 [1, 2] : vector<1x16x96xf32> to vector<1xf32>
    %12 = vector.shape_cast %11 : vector<1xf32> to vector<1x1x1xf32>
    %13 = vector.extract %12[0, 0, 0] : f32 from vector<1x1x1xf32>
    %14 = vector.broadcast %13 : f32 to vector<1x1xf32>
    %cst_12 = arith.constant 1.536000e+03 : f32
    %15 = vector.broadcast %cst_12 : f32 to vector<1x1xf32>
    %16 = arith.divf %14, %15 : vector<1x1xf32>
    %17 = vector.broadcast %16 : vector<1x1xf32> to vector<16x96xf32>
    %18 = arith.subf %9, %17 : vector<16x96xf32>
    %19 = arith.mulf %18, %18 : vector<16x96xf32>
    %20 = vector.shape_cast %19 : vector<16x96xf32> to vector<1x16x96xf32>
    %cst_13 = arith.constant dense<0.000000e+00> : vector<1xf32>
    %21 = vector.multi_reduction <add>, %20, %cst_13 [1, 2] : vector<1x16x96xf32> to vector<1xf32>
    %22 = vector.shape_cast %21 : vector<1xf32> to vector<1x1x1xf32>
    %23 = vector.extract %22[0, 0, 0] : f32 from vector<1x1x1xf32>
    %24 = vector.broadcast %23 : f32 to vector<1x1xf32>
    %cst_14 = arith.constant 1.536000e+03 : f32
    %25 = vector.broadcast %cst_14 : f32 to vector<1x1xf32>
    %26 = arith.divf %24, %25 : vector<1x1xf32>
    %cst_15 = arith.constant 9.99999974E-6 : f32
    %27 = vector.broadcast %cst_15 : f32 to vector<1x1xf32>
    %28 = arith.addf %26, %27 : vector<1x1xf32>
    %29 = math.rsqrt %28 : vector<1x1xf32>
    %30 = vector.broadcast %29 : vector<1x1xf32> to vector<16x96xf32>
    %31 = arith.mulf %18, %30 : vector<16x96xf32>
    %32 = arith.mulf %31, %6 : vector<16x96xf32>
    %33 = arith.addf %32, %7 : vector<16x96xf32>
    %34 = vector.extract_strided_slice %8 {offsets = [0, 32], sizes = [16, 96], strides = [1, 1]} : vector<32x128xf32> to vector<16x96xf32>
    %35 = vector.extract_strided_slice %33 {offsets = [0, 0], sizes = [16, 32], strides = [1, 1]} : vector<16x96xf32> to vector<16x32xf32>
    %36 = vector.extract_strided_slice %33 {offsets = [0, 32], sizes = [16, 32], strides = [1, 1]} : vector<16x96xf32> to vector<16x32xf32>
    %37 = vector.extract_strided_slice %33 {offsets = [0, 64], sizes = [16, 32], strides = [1, 1]} : vector<16x96xf32> to vector<16x32xf32>
    %38 = vector.extract_strided_slice %34 {offsets = [0, 0], sizes = [16, 32], strides = [1, 1]} : vector<16x96xf32> to vector<16x32xf32>
    %39 = vector.extract_strided_slice %34 {offsets = [0, 32], sizes = [16, 32], strides = [1, 1]} : vector<16x96xf32> to vector<16x32xf32>
    %40 = vector.extract_strided_slice %34 {offsets = [0, 64], sizes = [16, 32], strides = [1, 1]} : vector<16x96xf32> to vector<16x32xf32>
    %41 = arith.negf %35 : vector<16x32xf32>
    %42 = math.exp %41 : vector<16x32xf32>
    %cst_16 = arith.constant 1.000000e+00 : f32
    %43 = vector.broadcast %cst_16 : f32 to vector<16x32xf32>
    %44 = arith.addf %43, %42 : vector<16x32xf32>
    %45 = arith.divf %43, %44 : vector<16x32xf32>
    %46 = arith.negf %38 : vector<16x32xf32>
    %47 = math.exp %46 : vector<16x32xf32>
    %cst_17 = arith.constant 1.000000e+00 : f32
    %48 = vector.broadcast %cst_17 : f32 to vector<16x32xf32>
    %49 = arith.addf %48, %47 : vector<16x32xf32>
    %50 = arith.divf %48, %49 : vector<16x32xf32>
    %51 = arith.mulf %45, %36 : vector<16x32xf32>
    %cst_18 = arith.constant 1.000000e+00 : f32
    %52 = vector.broadcast %cst_18 : f32 to vector<16x32xf32>
    %53 = arith.subf %52, %45 : vector<16x32xf32>
    %54 = arith.mulf %53, %39 : vector<16x32xf32>
    %55 = arith.addf %51, %54 : vector<16x32xf32>
    %c0_19 = arith.constant 0 : index
    %c0_20 = arith.constant 0 : index
    %56 = vector.load %arg7[%c0_19, %c0_20] : memref<32x32xf32, #tpu.memory_space<vmem>>, vector<16x32xf32>
    tpu.vector_store %arg7[%c0_19, %c0_20], %55 {strides = array<i32>} : memref<32x32xf32, #tpu.memory_space<vmem>>, vector<16x32xf32>,
    %57 = arith.mulf %50, %40 : vector<16x32xf32>
    %cst_21 = arith.constant 1.000000e+00 : f32
    %58 = vector.broadcast %cst_21 : f32 to vector<16x32xf32>
    %59 = arith.subf %58, %50 : vector<16x32xf32>
    %60 = arith.mulf %59, %37 : vector<16x32xf32>
    %61 = arith.addf %57, %60 : vector<16x32xf32>
    %c0_22 = arith.constant 0 : index
    %c0_23 = arith.constant 0 : index
    %62 = vector.load %arg8[%c0_22, %c0_23] : memref<32x32xf32, #tpu.memory_space<vmem>>, vector<16x32xf32>
    tpu.vector_store %arg8[%c0_22, %c0_23], %61 {strides = array<i32>} : memref<32x32xf32, #tpu.memory_space<vmem>>, vector<16x32xf32>,
    %63 = vector.extract_strided_slice %5 {offsets = [16, 0], sizes = [16, 96], strides = [1, 1]} : vector<32x96xf32> to vector<16x96xf32>
    %64 = vector.shape_cast %63 : vector<16x96xf32> to vector<1x16x96xf32>
    %cst_24 = arith.constant dense<0.000000e+00> : vector<1xf32>
    %65 = vector.multi_reduction <add>, %64, %cst_24 [1, 2] : vector<1x16x96xf32> to vector<1xf32>
    %66 = vector.shape_cast %65 : vector<1xf32> to vector<1x1x1xf32>
    %67 = vector.extract %66[0, 0, 0] : f32 from vector<1x1x1xf32>
    %68 = vector.broadcast %67 : f32 to vector<1x1xf32>
    %cst_25 = arith.constant 1.536000e+03 : f32
    %69 = vector.broadcast %cst_25 : f32 to vector<1x1xf32>
    %70 = arith.divf %68, %69 : vector<1x1xf32>
    %71 = vector.broadcast %70 : vector<1x1xf32> to vector<16x96xf32>
    %72 = arith.subf %63, %71 : vector<16x96xf32>
    %73 = arith.mulf %72, %72 : vector<16x96xf32>
    %74 = vector.shape_cast %73 : vector<16x96xf32> to vector<1x16x96xf32>
    %cst_26 = arith.constant dense<0.000000e+00> : vector<1xf32>
    %75 = vector.multi_reduction <add>, %74, %cst_26 [1, 2] : vector<1x16x96xf32> to vector<1xf32>
    %76 = vector.shape_cast %75 : vector<1xf32> to vector<1x1x1xf32>
    %77 = vector.extract %76[0, 0, 0] : f32 from vector<1x1x1xf32>
    %78 = vector.broadcast %77 : f32 to vector<1x1xf32>
    %cst_27 = arith.constant 1.536000e+03 : f32
    %79 = vector.broadcast %cst_27 : f32 to vector<1x1xf32>
    %80 = arith.divf %78, %79 : vector<1x1xf32>
    %cst_28 = arith.constant 9.99999974E-6 : f32
    %81 = vector.broadcast %cst_28 : f32 to vector<1x1xf32>
    %82 = arith.addf %80, %81 : vector<1x1xf32>
    %83 = math.rsqrt %82 : vector<1x1xf32>
    %84 = vector.broadcast %83 : vector<1x1xf32> to vector<16x96xf32>
    %85 = arith.mulf %72, %84 : vector<16x96xf32>
    %86 = arith.mulf %85, %6 : vector<16x96xf32>
    %87 = arith.addf %86, %7 : vector<16x96xf32>
    %88 = vector.extract_strided_slice %8 {offsets = [16, 32], sizes = [16, 96], strides = [1, 1]} : vector<32x128xf32> to vector<16x96xf32>
    %89 = vector.extract_strided_slice %87 {offsets = [0, 0], sizes = [16, 32], strides = [1, 1]} : vector<16x96xf32> to vector<16x32xf32>
    %90 = vector.extract_strided_slice %87 {offsets = [0, 32], sizes = [16, 32], strides = [1, 1]} : vector<16x96xf32> to vector<16x32xf32>
    %91 = vector.extract_strided_slice %87 {offsets = [0, 64], sizes = [16, 32], strides = [1, 1]} : vector<16x96xf32> to vector<16x32xf32>
    %92 = vector.extract_strided_slice %88 {offsets = [0, 0], sizes = [16, 32], strides = [1, 1]} : vector<16x96xf32> to vector<16x32xf32>
    %93 = vector.extract_strided_slice %88 {offsets = [0, 32], sizes = [16, 32], strides = [1, 1]} : vector<16x96xf32> to vector<16x32xf32>
    %94 = vector.extract_strided_slice %88 {offsets = [0, 64], sizes = [16, 32], strides = [1, 1]} : vector<16x96xf32> to vector<16x32xf32>
    %95 = arith.negf %89 : vector<16x32xf32>
    %96 = math.exp %95 : vector<16x32xf32>
    %cst_29 = arith.constant 1.000000e+00 : f32
    %97 = vector.broadcast %cst_29 : f32 to vector<16x32xf32>
    %98 = arith.addf %97, %96 : vector<16x32xf32>
    %99 = arith.divf %97, %98 : vector<16x32xf32>
    %100 = arith.negf %92 : vector<16x32xf32>
    %101 = math.exp %100 : vector<16x32xf32>
    %cst_30 = arith.constant 1.000000e+00 : f32
    %102 = vector.broadcast %cst_30 : f32 to vector<16x32xf32>
    %103 = arith.addf %102, %101 : vector<16x32xf32>
    %104 = arith.divf %102, %103 : vector<16x32xf32>
    %105 = arith.mulf %99, %90 : vector<16x32xf32>
    %cst_31 = arith.constant 1.000000e+00 : f32
    %106 = vector.broadcast %cst_31 : f32 to vector<16x32xf32>
    %107 = arith.subf %106, %99 : vector<16x32xf32>
    %108 = arith.mulf %107, %93 : vector<16x32xf32>
    %109 = arith.addf %105, %108 : vector<16x32xf32>
    %c16 = arith.constant 16 : index
    %c0_32 = arith.constant 0 : index
    %110 = vector.load %arg7[%c16, %c0_32] : memref<32x32xf32, #tpu.memory_space<vmem>>, vector<16x32xf32>
    tpu.vector_store %arg7[%c16, %c0_32], %109 {strides = array<i32>} : memref<32x32xf32, #tpu.memory_space<vmem>>, vector<16x32xf32>,
    %111 = arith.mulf %104, %94 : vector<16x32xf32>
    %cst_33 = arith.constant 1.000000e+00 : f32
    %112 = vector.broadcast %cst_33 : f32 to vector<16x32xf32>
    %113 = arith.subf %112, %104 : vector<16x32xf32>
    %114 = arith.mulf %113, %91 : vector<16x32xf32>
    %115 = arith.addf %111, %114 : vector<16x32xf32>
    %c16_34 = arith.constant 16 : index
    %c0_35 = arith.constant 0 : index
    %116 = vector.load %arg8[%c16_34, %c0_35] : memref<32x32xf32, #tpu.memory_space<vmem>>, vector<16x32xf32>
    tpu.vector_store %arg8[%c16_34, %c0_35], %115 {strides = array<i32>} : memref<32x32xf32, #tpu.memory_space<vmem>>, vector<16x32xf32>,
    return
  }
}

module attributes {stable_mosaic.version = 11 : i64} {
  func.func @_mm_bias_kernel(%arg0: memref<128x288xbf16, #tpu.memory_space<vmem>>, %arg1: memref<288x32xbf16, #tpu.memory_space<vmem>>, %arg2: memref<1x32xf32, #tpu.memory_space<vmem>>, %arg3: memref<128x32xf32, #tpu.memory_space<vmem>>) attributes {dimension_semantics = [], scalar_prefetch = 0 : i64, scratch_operands = 0 : i64, tpu.core_type = #tpu.core_type<tc>} {
    %c0 = arith.constant 0 : index
    %c0_0 = arith.constant 0 : index
    %0 = vector.load %arg0[%c0, %c0_0] : memref<128x288xbf16, #tpu.memory_space<vmem>>, vector<128x288xbf16>
    %c0_1 = arith.constant 0 : index
    %c0_2 = arith.constant 0 : index
    %1 = vector.load %arg1[%c0_1, %c0_2] : memref<288x32xbf16, #tpu.memory_space<vmem>>, vector<288x32xbf16>
    %cst = arith.constant dense<0.000000e+00> : vector<128x32xf32>
    %2 = tpu.matmul %0, %1, %cst {dimension_numbers = #tpu.dot_dimension_numbers<[1], [0], [0], [1], [0, 0, 1, 1], [], []>} : vector<128x288xbf16>, vector<288x32xbf16>, vector<128x32xf32> -> vector<128x32xf32>
    %c0_3 = arith.constant 0 : index
    %c0_4 = arith.constant 0 : index
    %3 = vector.load %arg2[%c0_3, %c0_4] : memref<1x32xf32, #tpu.memory_space<vmem>>, vector<1x32xf32>
    %4 = vector.broadcast %3 : vector<1x32xf32> to vector<128x32xf32>
    %5 = arith.addf %2, %4 : vector<128x32xf32>
    %c0_5 = arith.constant 0 : index
    %c0_6 = arith.constant 0 : index
    %6 = vector.load %arg3[%c0_5, %c0_6] : memref<128x32xf32, #tpu.memory_space<vmem>>, vector<128x32xf32>
    tpu.vector_store %arg3[%c0_5, %c0_6], %5 {strides = array<i32>} : memref<128x32xf32, #tpu.memory_space<vmem>>, vector<128x32xf32>,
    return
  }
}

module attributes {stable_mosaic.version = 11 : i64} {
  func.func @_mm_bias_kernel(%arg0: memref<128x32xbf16, #tpu.memory_space<vmem>>, %arg1: memref<32x4xbf16, #tpu.memory_space<vmem>>, %arg2: memref<1x4xf32, #tpu.memory_space<vmem>>, %arg3: memref<128x4xf32, #tpu.memory_space<vmem>>) attributes {dimension_semantics = [], scalar_prefetch = 0 : i64, scratch_operands = 0 : i64, tpu.core_type = #tpu.core_type<tc>} {
    %c0 = arith.constant 0 : index
    %c0_0 = arith.constant 0 : index
    %0 = vector.load %arg0[%c0, %c0_0] : memref<128x32xbf16, #tpu.memory_space<vmem>>, vector<128x32xbf16>
    %c0_1 = arith.constant 0 : index
    %c0_2 = arith.constant 0 : index
    %1 = vector.load %arg1[%c0_1, %c0_2] : memref<32x4xbf16, #tpu.memory_space<vmem>>, vector<32x4xbf16>
    %cst = arith.constant dense<0.000000e+00> : vector<128x4xf32>
    %2 = tpu.matmul %0, %1, %cst {dimension_numbers = #tpu.dot_dimension_numbers<[1], [0], [0], [1], [0, 0, 1, 1], [], []>} : vector<128x32xbf16>, vector<32x4xbf16>, vector<128x4xf32> -> vector<128x4xf32>
    %c0_3 = arith.constant 0 : index
    %c0_4 = arith.constant 0 : index
    %3 = vector.load %arg2[%c0_3, %c0_4] : memref<1x4xf32, #tpu.memory_space<vmem>>, vector<1x4xf32>
    %4 = vector.broadcast %3 : vector<1x4xf32> to vector<128x4xf32>
    %5 = arith.addf %2, %4 : vector<128x4xf32>
    %c0_5 = arith.constant 0 : index
    %c0_6 = arith.constant 0 : index
    %6 = vector.load %arg3[%c0_5, %c0_6] : memref<128x4xf32, #tpu.memory_space<vmem>>, vector<128x4xf32>
    tpu.vector_store %arg3[%c0_5, %c0_6], %5 {strides = array<i32>} : memref<128x4xf32, #tpu.memory_space<vmem>>, vector<128x4xf32>,
    return
  }
}

</mosaic_0001>

<llo_original>
// kernel: custom-call.2
$region0: #{custom-call.2}
  %s0 = inlined_call_operand.vmem [shape: f32[7,2,8,8,4], index: 0, kind: output, shape index: {}]

// kernel: closed_call.57
$region0: #{closed_call.57}
  #allocation0 [shape = 'u32[]', space=smem, size = 0x4, offset = 0x4, fixed_abs, tag = 'smem constant byte address 0x4 - core index']
  #allocation1 [shape = 'u32[72,128]{1,0:T(1,128)}', space=vmem, size = 0x9000, scoped, tag = 'internal scratch']
  %s0 = inlined_call_operand.vmem [shape: bf16[128,4], index: 0, kind: input, shape index: {}]
  %s1 = inlined_call_operand.vmem [shape: bf16[4,32], index: 1, kind: input, shape index: {}]
  %s2 = inlined_call_operand.vmem [shape: f32[1,32], index: 2, kind: input, shape index: {}]
  %s3 = inlined_call_operand.vmem [shape: f32[128,32], index: 3, kind: output, shape index: {}]
  %s4 = sld [smem:[#allocation0]]
  $region22: #{closed_call.57} parent=0
    _
  %s6 = ssub.s32 1, %s4
  %s7 = scalar_select 0, %s6, %s4
  // Predicated region
  $region2: #{closed_call.57} parent=0 // pred_check
    _
  $region3: #{closed_call.57} parent=0 // pred_check_branch
    %9 = sbr.rel (0) target = $region5
  $region4: #{closed_call.57} parent=0 // pred_region
    _
  $region5: #{closed_call.57} parent=0 // pred_fallthru
    _
  // Predicated region
  $region6: #{closed_call.57} parent=0 // pred_check
    _
  $region7: #{closed_call.57} parent=0 // pred_check_branch
    %11 = sbr.rel (0) target = $region9
  $region8: #{closed_call.57} parent=0 // pred_region
    _
  $region9: #{closed_call.57} parent=0 // pred_fallthru
    _
  // Predicated region
  $region10: #{closed_call.57} parent=0 // pred_check
    _
  $region11: #{closed_call.57} parent=0 // pred_check_branch
    %13 = sbr.rel (0) target = $region13
  $region12: #{closed_call.57} parent=0 // pred_region
    _
  $region13: #{closed_call.57} parent=0 // pred_fallthru
    _
  %v15 = vld [vmem:[%s0] sm:$0xf]
  %v16 = vld [vmem:[%s0 + $0x4] sm:$0xf]
  %v17 = vld [vmem:[%s0 + $0x8] sm:$0xf]
  %v18 = vld [vmem:[%s0 + $0xc] sm:$0xf]
  %v19 = vld [vmem:[%s0 + $0x10] sm:$0xf]
  %v20 = vld [vmem:[%s0 + $0x14] sm:$0xf]
  %v21 = vld [vmem:[%s0 + $0x18] sm:$0xf]
  %v22 = vld [vmem:[%s0 + $0x1c] sm:$0xf]
  %v23 = vld [vmem:[%s0 + $0x20] sm:$0xf]
  %v24 = vld [vmem:[%s0 + $0x24] sm:$0xf]
  %v25 = vld [vmem:[%s0 + $0x28] sm:$0xf]
  %v26 = vld [vmem:[%s0 + $0x2c] sm:$0xf]
  %v27 = vld [vmem:[%s0 + $0x30] sm:$0xf]
  %v28 = vld [vmem:[%s0 + $0x34] sm:$0xf]
  %v29 = vld [vmem:[%s0 + $0x38] sm:$0xf]
  %v30 = vld [vmem:[%s0 + $0x3c] sm:$0xf]
  %v31 = vld [vmem:[%s1] sm:$0x3]
  %v32 = vld [vmem:[%s2] sm:$0x1]
  %v34 = vperm.slane %v32, 0
  %v52 = vunpack.c.l.b16 %v15
  %v53 = vunpack.c.l.b16 %v16
  %v54 = vunpack.c.l.b16 %v17
  %v55 = vunpack.c.l.b16 %v18
  %v56 = vunpack.c.l.b16 %v19
  %v57 = vunpack.c.l.b16 %v20
  %v58 = vunpack.c.l.b16 %v21
  %v59 = vunpack.c.l.b16 %v22
  %v60 = vunpack.c.l.b16 %v23
  %v61 = vunpack.c.l.b16 %v24
  %v62 = vunpack.c.l.b16 %v25
  %v63 = vunpack.c.l.b16 %v26
  %v64 = vunpack.c.l.b16 %v27
  %v65 = vunpack.c.l.b16 %v28
  %v66 = vunpack.c.l.b16 %v29
  %v67 = vunpack.c.l.b16 %v30
  %v68 = vpack.c.b16 %v53, %v52
  %v69 = vpack.c.b16 %v55, %v54
  %v70 = vpack.c.b16 %v57, %v56
  %v71 = vpack.c.b16 %v59, %v58
  %v72 = vpack.c.b16 %v61, %v60
  %v73 = vpack.c.b16 %v63, %v62
  %v74 = vpack.c.b16 %v65, %v64
  %v75 = vpack.c.b16 %v67, %v66
  %vm76 = vcmask 31744
  %v78 = vsel %vm76, %v68, 0
  %v81 = vsel %vm76, %v69, 0
  %v84 = vsel %vm76, %v70, 0
  %v87 = vsel %vm76, %v71, 0
  %v90 = vsel %vm76, %v72, 0
  %v93 = vsel %vm76, %v73, 0
  %v96 = vsel %vm76, %v74, 0
  %v99 = vsel %vm76, %v75, 0
  %vm101 = vcmask 1041408
  %v103 = vsel %vm101, %v31, 0
  %105 = vmatpush.bf16.msra.mxu0 0
  %106 = vmatpush.bf16.msra.mxu0 0
  %107 = vmatpush.bf16.msra.mxu0 0
  %108 = vmatpush.bf16.msra.mxu0 0
  %109 = vmatpush.bf16.msra.mxu0 0
  %110 = vmatpush.bf16.msra.mxu0 0
  %111 = vmatpush.bf16.msra.mxu0 0
  %112 = vmatpush.bf16.msra.mxu0 %v103
  %113 = vmatmul.bf16.gmra.mxu0 %v78
  %v114 = vpop.f32.mrf.mxu0
  %v115 = vadd.f32 %v34, %v114
  %v116 = vpop.f32.mrf.mxu0
  %v117 = vadd.f32 %v34, %v116
  %118 = vmatmul.bf16.gmra.mxu0 %v81
  %v119 = vpop.f32.mrf.mxu0
  %v120 = vadd.f32 %v34, %v119
  %v121 = vpop.f32.mrf.mxu0
  %v122 = vadd.f32 %v34, %v121
  %123 = vmatmul.bf16.gmra.mxu0 %v84
  %v124 = vpop.f32.mrf.mxu0
  %v125 = vadd.f32 %v34, %v124
  %v126 = vpop.f32.mrf.mxu0
  %v127 = vadd.f32 %v34, %v126
  %128 = vmatmul.bf16.gmra.mxu0 %v87
  %v129 = vpop.f32.mrf.mxu0
  %v130 = vadd.f32 %v34, %v129
  %v131 = vpop.f32.mrf.mxu0
  %v132 = vadd.f32 %v34, %v131
  %133 = vmatmul.bf16.gmra.mxu0 %v90
  %v134 = vpop.f32.mrf.mxu0
  %v135 = vadd.f32 %v34, %v134
  %v136 = vpop.f32.mrf.mxu0
  %v137 = vadd.f32 %v34, %v136
  %138 = vmatmul.bf16.gmra.mxu0 %v93
  %v139 = vpop.f32.mrf.mxu0
  %v140 = vadd.f32 %v34, %v139
  %v141 = vpop.f32.mrf.mxu0
  %v142 = vadd.f32 %v34, %v141
  %143 = vmatmul.bf16.gmra.mxu0 %v96
  %v144 = vpop.f32.mrf.mxu0
  %v145 = vadd.f32 %v34, %v144
  %v146 = vpop.f32.mrf.mxu0
  %v147 = vadd.f32 %v34, %v146
  %148 = vmatmul.bf16.gmra.mxu0 %v99
  %v149 = vpop.f32.mrf.mxu0
  %v150 = vadd.f32 %v34, %v149
  %v151 = vpop.f32.mrf.mxu0
  %v152 = vadd.f32 %v34, %v151
  %153 = vdwg.mxu0
  %vm154 = vcmp.ge.f32.partialorder %v115, 0.0
  %vm155 = vcmp.ge.f32.partialorder %v117, 0.0
  %vm156 = vcmp.ge.f32.partialorder %v120, 0.0
  %vm157 = vcmp.ge.f32.partialorder %v122, 0.0
  %vm158 = vcmp.ge.f32.partialorder %v125, 0.0
  %vm159 = vcmp.ge.f32.partialorder %v127, 0.0
  %vm160 = vcmp.ge.f32.partialorder %v130, 0.0
  %vm161 = vcmp.ge.f32.partialorder %v132, 0.0
  %vm162 = vcmp.ge.f32.partialorder %v135, 0.0
  %vm163 = vcmp.ge.f32.partialorder %v137, 0.0
  %vm164 = vcmp.ge.f32.partialorder %v140, 0.0
  %vm165 = vcmp.ge.f32.partialorder %v142, 0.0
  %vm166 = vcmp.ge.f32.partialorder %v145, 0.0
  %vm167 = vcmp.ge.f32.partialorder %v147, 0.0
  %vm168 = vcmp.ge.f32.partialorder %v150, 0.0
  %vm169 = vcmp.ge.f32.partialorder %v152, 0.0
  %v170 = vmul.f32 %v115, 0.2
  %v171 = vmul.f32 %v117, 0.2
  %v172 = vmul.f32 %v120, 0.2
  %v173 = vmul.f32 %v122, 0.2
  %v174 = vmul.f32 %v125, 0.2
  %v175 = vmul.f32 %v127, 0.2
  %v176 = vmul.f32 %v130, 0.2
  %v177 = vmul.f32 %v132, 0.2
  %v178 = vmul.f32 %v135, 0.2
  %v179 = vmul.f32 %v137, 0.2
  %v180 = vmul.f32 %v140, 0.2
  %v181 = vmul.f32 %v142, 0.2
  %v182 = vmul.f32 %v145, 0.2
  %v183 = vmul.f32 %v147, 0.2
  %v184 = vmul.f32 %v150, 0.2
  %v185 = vmul.f32 %v152, 0.2
  %v186 = vsel %vm154, %v115, %v170
  %v187 = vsel %vm155, %v117, %v171
  %v188 = vsel %vm156, %v120, %v172
  %v189 = vsel %vm157, %v122, %v173
  %v190 = vsel %vm158, %v125, %v174
  %v191 = vsel %vm159, %v127, %v175
  %v192 = vsel %vm160, %v130, %v176
  %v193 = vsel %vm161, %v132, %v177
  %v194 = vsel %vm162, %v135, %v178
  %v195 = vsel %vm163, %v137, %v179
  %v196 = vsel %vm164, %v140, %v180
  %v197 = vsel %vm165, %v142, %v181
  %v198 = vsel %vm166, %v145, %v182
  %v199 = vsel %vm167, %v147, %v183
  %v200 = vsel %vm168, %v150, %v184
  %v201 = vsel %vm169, %v152, %v185
  %vm202 = vcmask 261120
  %203 = vst.msk [vmem:[%s3] sm:$0xff] %vm202, %v186
  %204 = vst.msk [vmem:[%s3 + $0x8] sm:$0xff] %vm202, %v187
  %205 = vst.msk [vmem:[%s3 + $0x10] sm:$0xff] %vm202, %v188
  %206 = vst.msk [vmem:[%s3 + $0x18] sm:$0xff] %vm202, %v189
  %207 = vst.msk [vmem:[%s3 + $0x20] sm:$0xff] %vm202, %v190
  %208 = vst.msk [vmem:[%s3 + $0x28] sm:$0xff] %vm202, %v191
  %209 = vst.msk [vmem:[%s3 + $0x30] sm:$0xff] %vm202, %v192
  %210 = vst.msk [vmem:[%s3 + $0x38] sm:$0xff] %vm202, %v193
  %211 = vst.msk [vmem:[%s3 + $0x40] sm:$0xff] %vm202, %v194
  %212 = vst.msk [vmem:[%s3 + $0x48] sm:$0xff] %vm202, %v195
  %213 = vst.msk [vmem:[%s3 + $0x50] sm:$0xff] %vm202, %v196
  %214 = vst.msk [vmem:[%s3 + $0x58] sm:$0xff] %vm202, %v197
  %215 = vst.msk [vmem:[%s3 + $0x60] sm:$0xff] %vm202, %v198
  %216 = vst.msk [vmem:[%s3 + $0x68] sm:$0xff] %vm202, %v199
  %217 = vst.msk [vmem:[%s3 + $0x70] sm:$0xff] %vm202, %v200
  %218 = vst.msk [vmem:[%s3 + $0x78] sm:$0xff] %vm202, %v201
  // Predicated region
  $region14: #{closed_call.57} parent=0 // pred_check
    _
  $region15: #{closed_call.57} parent=0 // pred_check_branch
    %220 = sbr.rel (0) target = $region17
  $region16: #{closed_call.57} parent=0 // pred_region
    _
  $region17: #{closed_call.57} parent=0 // pred_fallthru
    _
  // Predicated region
  $region18: #{closed_call.57} parent=0 // pred_check
    _
  $region19: #{closed_call.57} parent=0 // pred_check_branch
    %222 = sbr.rel (0) target = $region21
  $region20: #{closed_call.57} parent=0 // pred_region
    _
  $region21: #{closed_call.57} parent=0 // pred_fallthru
    _

// kernel: closed_call.58
$region0: #{closed_call.58}
  #allocation0 [shape = 'u32[]', space=smem, size = 0x4, offset = 0x4, fixed_abs, tag = 'smem constant byte address 0x4 - core index']
  #allocation1 [shape = 'u32[72,128]{1,0:T(1,128)}', space=vmem, size = 0x9000, scoped, tag = 'internal scratch']
  %s0 = inlined_call_operand.vmem [shape: bf16[32,288], index: 0, kind: input, shape index: {}]
  %s1 = inlined_call_operand.vmem [shape: bf16[288,32], index: 1, kind: input, shape index: {}]
  %s2 = inlined_call_operand.vmem [shape: f32[1,32], index: 2, kind: input, shape index: {}]
  %s3 = inlined_call_operand.vmem [shape: f32[32,32], index: 3, kind: output, shape index: {}]
  %s4 = sld [smem:[#allocation0]]
  $region22: #{closed_call.58} parent=0
    _
  %s6 = ssub.s32 1, %s4
  %s7 = scalar_select 0, %s6, %s4
  // Predicated region
  $region2: #{closed_call.58} parent=0 // pred_check
    _
  $region3: #{closed_call.58} parent=0 // pred_check_branch
    %9 = sbr.rel (0) target = $region5
  $region4: #{closed_call.58} parent=0 // pred_region
    _
  $region5: #{closed_call.58} parent=0 // pred_fallthru
    _
  // Predicated region
  $region6: #{closed_call.58} parent=0 // pred_check
    _
  $region7: #{closed_call.58} parent=0 // pred_check_branch
    %11 = sbr.rel (0) target = $region9
  $region8: #{closed_call.58} parent=0 // pred_region
    _
  $region9: #{closed_call.58} parent=0 // pred_fallthru
    _
  // Predicated region
  $region10: #{closed_call.58} parent=0 // pred_check
    _
  $region11: #{closed_call.58} parent=0 // pred_check_branch
    %13 = sbr.rel (0) target = $region13
  $region12: #{closed_call.58} parent=0 // pred_region
    _
  $region13: #{closed_call.58} parent=0 // pred_fallthru
    _
  %v15 = vld [vmem:[%s0] sm:$0xff]
  %v16 = vld [vmem:[%s0 + $0x8] sm:$0xf]
  %v17 = vld [vmem:[%s0 + $0xc] sm:$0xff]
  %v18 = vld [vmem:[%s0 + $0x14] sm:$0xf]
  %v19 = vld [vmem:[%s0 + $0x18] sm:$0xff]
  %v20 = vld [vmem:[%s0 + $0x20] sm:$0xf]
  %v21 = vld [vmem:[%s0 + $0x24] sm:$0xff]
  %v22 = vld [vmem:[%s0 + $0x2c] sm:$0xf]
  %v23 = vld [vmem:[%s1] sm:$0xf]
  %v24 = vld [vmem:[%s1 + $0x4] sm:$0xf]
  %v25 = vld [vmem:[%s1 + $0x8] sm:$0xf]
  %v26 = vld [vmem:[%s1 + $0xc] sm:$0xf]
  %v27 = vld [vmem:[%s1 + $0x10] sm:$0xf]
  %v28 = vld [vmem:[%s1 + $0x14] sm:$0xf]
  %v29 = vld [vmem:[%s1 + $0x18] sm:$0xf]
  %v30 = vld [vmem:[%s1 + $0x1c] sm:$0xf]
  %v31 = vld [vmem:[%s1 + $0x20] sm:$0xf]
  %v32 = vld [vmem:[%s1 + $0x24] sm:$0xf]
  %v33 = vld [vmem:[%s1 + $0x28] sm:$0xf]
  %v34 = vld [vmem:[%s1 + $0x2c] sm:$0xf]
  %v35 = vld [vmem:[%s1 + $0x30] sm:$0xf]
  %v36 = vld [vmem:[%s1 + $0x34] sm:$0xf]
  %v37 = vld [vmem:[%s1 + $0x38] sm:$0xf]
  %v38 = vld [vmem:[%s1 + $0x3c] sm:$0xf]
  %v39 = vld [vmem:[%s1 + $0x40] sm:$0xf]
  %v40 = vld [vmem:[%s1 + $0x44] sm:$0xf]
  %v41 = vld [vmem:[%s1 + $0x48] sm:$0xf]
  %v42 = vld [vmem:[%s1 + $0x4c] sm:$0xf]
  %v43 = vld [vmem:[%s1 + $0x50] sm:$0xf]
  %v44 = vld [vmem:[%s1 + $0x54] sm:$0xf]
  %v45 = vld [vmem:[%s1 + $0x58] sm:$0xf]
  %v46 = vld [vmem:[%s1 + $0x5c] sm:$0xf]
  %v47 = vld [vmem:[%s1 + $0x60] sm:$0xf]
  %v48 = vld [vmem:[%s1 + $0x64] sm:$0xf]
  %v49 = vld [vmem:[%s1 + $0x68] sm:$0xf]
  %v50 = vld [vmem:[%s1 + $0x6c] sm:$0xf]
  %v51 = vld [vmem:[%s1 + $0x70] sm:$0xf]
  %v52 = vld [vmem:[%s1 + $0x74] sm:$0xf]
  %v53 = vld [vmem:[%s1 + $0x78] sm:$0xf]
  %v54 = vld [vmem:[%s1 + $0x7c] sm:$0xf]
  %v55 = vld [vmem:[%s1 + $0x80] sm:$0xf]
  %v56 = vld [vmem:[%s1 + $0x84] sm:$0xf]
  %v57 = vld [vmem:[%s1 + $0x88] sm:$0xf]
  %v58 = vld [vmem:[%s1 + $0x8c] sm:$0xf]
  %v59 = vld [vmem:[%s2] sm:$0x1]
  %v61 = vperm.slane %v59, 0
  %v71 = vunpack.c.l.b16 %v15
  %v72 = vunpack.c.h.b16 %v15
  %v73 = vunpack.c.l.b16 %v16
  %v74 = vunpack.c.l.b16 %v17
  %v75 = vunpack.c.h.b16 %v17
  %v76 = vunpack.c.l.b16 %v18
  %v77 = vunpack.c.l.b16 %v19
  %v78 = vunpack.c.h.b16 %v19
  %v79 = vunpack.c.l.b16 %v20
  %v80 = vunpack.c.l.b16 %v21
  %v81 = vunpack.c.h.b16 %v21
  %v82 = vunpack.c.l.b16 %v22
  %v83 = vpack.c.b16 %v74, %v71
  %v84 = vpack.c.b16 %v75, %v72
  %v85 = vpack.c.b16 %v76, %v73
  %v86 = vpack.c.b16 %v80, %v77
  %v87 = vpack.c.b16 %v81, %v78
  %v88 = vpack.c.b16 %v82, %v79
  %v129 = vunpack.c.l.b16 %v23
  %v130 = vunpack.c.l.b16 %v24
  %v131 = vunpack.c.l.b16 %v25
  %v132 = vunpack.c.l.b16 %v26
  %v133 = vunpack.c.l.b16 %v27
  %v134 = vunpack.c.l.b16 %v28
  %v135 = vunpack.c.l.b16 %v29
  %v136 = vunpack.c.l.b16 %v30
  %v137 = vunpack.c.l.b16 %v31
  %v138 = vunpack.c.l.b16 %v32
  %v139 = vunpack.c.l.b16 %v33
  %v140 = vunpack.c.l.b16 %v34
  %v141 = vunpack.c.l.b16 %v35
  %v142 = vunpack.c.l.b16 %v36
  %v143 = vunpack.c.l.b16 %v37
  %v144 = vunpack.c.l.b16 %v38
  %v145 = vunpack.c.l.b16 %v39
  %v146 = vunpack.c.l.b16 %v40
  %v147 = vunpack.c.l.b16 %v41
  %v148 = vunpack.c.l.b16 %v42
  %v149 = vunpack.c.l.b16 %v43
  %v150 = vunpack.c.l.b16 %v44
  %v151 = vunpack.c.l.b16 %v45
  %v152 = vunpack.c.l.b16 %v46
  %v153 = vunpack.c.l.b16 %v47
  %v154 = vunpack.c.l.b16 %v48
  %v155 = vunpack.c.l.b16 %v49
  %v156 = vunpack.c.l.b16 %v50
  %v157 = vunpack.c.l.b16 %v51
  %v158 = vunpack.c.l.b16 %v52
  %v159 = vunpack.c.l.b16 %v53
  %v160 = vunpack.c.l.b16 %v54
  %v161 = vunpack.c.l.b16 %v55
  %v162 = vunpack.c.l.b16 %v56
  %v163 = vunpack.c.l.b16 %v57
  %v164 = vunpack.c.l.b16 %v58
  %v165 = vpack.c.b16 %v130, %v129
  %v166 = vpack.c.b16 %v132, %v131
  %v167 = vpack.c.b16 %v134, %v133
  %v168 = vpack.c.b16 %v136, %v135
  %v169 = vpack.c.b16 %v138, %v137
  %v170 = vpack.c.b16 %v140, %v139
  %v171 = vpack.c.b16 %v142, %v141
  %v172 = vpack.c.b16 %v144, %v143
  %v173 = vpack.c.b16 %v146, %v145
  %v174 = vpack.c.b16 %v148, %v147
  %v175 = vpack.c.b16 %v150, %v149
  %v176 = vpack.c.b16 %v152, %v151
  %v177 = vpack.c.b16 %v154, %v153
  %v178 = vpack.c.b16 %v156, %v155
  %v179 = vpack.c.b16 %v158, %v157
  %v180 = vpack.c.b16 %v160, %v159
  %v181 = vpack.c.b16 %v162, %v161
  %v182 = vpack.c.b16 %v164, %v163
  %vm201 = vcmask 261120
  %v203 = vsel %vm201, %v85, 0
  %v206 = vsel %vm201, %v88, 0
  %208 = vmatpush.bf16.msra.mxu0 %v172
  %209 = vmatpush.bf16.msra.mxu0 %v171
  %210 = vmatpush.bf16.msra.mxu0 %v170
  %211 = vmatpush.bf16.msra.mxu0 %v169
  %212 = vmatpush.bf16.msra.mxu0 %v168
  %213 = vmatpush.bf16.msra.mxu0 %v167
  %214 = vmatpush.bf16.msra.mxu0 %v166
  %215 = vmatpush.bf16.msra.mxu0 %v165
  %216 = vmatmul.bf16.gmra.mxu0 %v83
  %v217 = vpop.f32.mrf.mxu0
  %v218 = vadd.f32 %v61, %v217
  %v219 = vpop.f32.mrf.mxu0
  %v220 = vadd.f32 %v61, %v219
  %221 = vmatmul.bf16.gmra.mxu0 %v86
  %v222 = vpop.f32.mrf.mxu0
  %v223 = vadd.f32 %v61, %v222
  %v224 = vpop.f32.mrf.mxu0
  %v225 = vadd.f32 %v61, %v224
  %226 = vdwg.mxu0
  %227 = vmatpush.bf16.msra.mxu0 %v180
  %228 = vmatpush.bf16.msra.mxu0 %v179
  %229 = vmatpush.bf16.msra.mxu0 %v178
  %230 = vmatpush.bf16.msra.mxu0 %v177
  %231 = vmatpush.bf16.msra.mxu0 %v176
  %232 = vmatpush.bf16.msra.mxu0 %v175
  %233 = vmatpush.bf16.msra.mxu0 %v174
  %234 = vmatpush.bf16.msra.mxu0 %v173
  %235 = vmatmul.bf16.gmra.mxu0 %v84
  %v236 = vpop.f32.mrf.mxu0
  %v237 = vadd.f32 %v218, %v236
  %v238 = vpop.f32.mrf.mxu0
  %v239 = vadd.f32 %v220, %v238
  %240 = vmatmul.bf16.gmra.mxu0 %v87
  %v241 = vpop.f32.mrf.mxu0
  %v242 = vadd.f32 %v223, %v241
  %v243 = vpop.f32.mrf.mxu0
  %v244 = vadd.f32 %v225, %v243
  %245 = vdwg.mxu0
  %246 = vmatpush.bf16.msra.mxu0 0
  %247 = vmatpush.bf16.msra.mxu0 0
  %248 = vmatpush.bf16.msra.mxu0 0
  %249 = vmatpush.bf16.msra.mxu0 0
  %250 = vmatpush.bf16.msra.mxu0 0
  %251 = vmatpush.bf16.msra.mxu0 0
  %252 = vmatpush.bf16.msra.mxu0 %v182
  %253 = vmatpush.bf16.msra.mxu0 %v181
  %254 = vmatmul.bf16.gmra.mxu0 %v203
  %v255 = vpop.f32.mrf.mxu0
  %v256 = vadd.f32 %v237, %v255
  %v257 = vpop.f32.mrf.mxu0
  %v258 = vadd.f32 %v239, %v257
  %259 = vmatmul.bf16.gmra.mxu0 %v206
  %v260 = vpop.f32.mrf.mxu0
  %v261 = vadd.f32 %v242, %v260
  %v262 = vpop.f32.mrf.mxu0
  %v263 = vadd.f32 %v244, %v262
  %264 = vdwg.mxu0
  %vm265 = vcmp.ge.f32.partialorder %v256, 0.0
  %vm266 = vcmp.ge.f32.partialorder %v258, 0.0
  %vm267 = vcmp.ge.f32.partialorder %v261, 0.0
  %vm268 = vcmp.ge.f32.partialorder %v263, 0.0
  %v269 = vmul.f32 %v256, 0.2
  %v270 = vmul.f32 %v258, 0.2
  %v271 = vmul.f32 %v261, 0.2
  %v272 = vmul.f32 %v263, 0.2
  %v273 = vsel %vm265, %v256, %v269
  %v274 = vsel %vm266, %v258, %v270
  %v275 = vsel %vm267, %v261, %v271
  %v276 = vsel %vm268, %v263, %v272
  %277 = vst.msk [vmem:[%s3] sm:$0xff] %vm201, %v273
  %278 = vst.msk [vmem:[%s3 + $0x8] sm:$0xff] %vm201, %v274
  %279 = vst.msk [vmem:[%s3 + $0x10] sm:$0xff] %vm201, %v275
  %280 = vst.msk [vmem:[%s3 + $0x18] sm:$0xff] %vm201, %v276
  // Predicated region
  $region14: #{closed_call.58} parent=0 // pred_check
    _
  $region15: #{closed_call.58} parent=0 // pred_check_branch
    %282 = sbr.rel (0) target = $region17
  $region16: #{closed_call.58} parent=0 // pred_region
    _
  $region17: #{closed_call.58} parent=0 // pred_fallthru
    _
  // Predicated region
  $region18: #{closed_call.58} parent=0 // pred_check
    _
  $region19: #{closed_call.58} parent=0 // pred_check_branch
    %284 = sbr.rel (0) target = $region21
  $region20: #{closed_call.58} parent=0 // pred_region
    _
  $region21: #{closed_call.58} parent=0 // pred_fallthru
    _

// kernel: closed_call.60
$region0: #{closed_call.60}
  #allocation0 [shape = 'u32[]', space=smem, size = 0x4, offset = 0x4, fixed_abs, tag = 'smem constant byte address 0x4 - core index']
  #allocation1 [shape = 'u32[72,128]{1,0:T(1,128)}', space=vmem, size = 0x9000, scoped, tag = 'internal scratch']
  %s0 = inlined_call_operand.vmem [shape: bf16[32,288], index: 0, kind: input, shape index: {}]
  %s1 = inlined_call_operand.vmem [shape: bf16[288,96], index: 1, kind: input, shape index: {}]
  %s2 = inlined_call_operand.vmem [shape: f32[1,96], index: 2, kind: input, shape index: {}]
  %s3 = inlined_call_operand.vmem [shape: f32[16,96], index: 3, kind: input, shape index: {}]
  %s4 = inlined_call_operand.vmem [shape: f32[16,96], index: 4, kind: input, shape index: {}]
  %s5 = inlined_call_operand.vmem [shape: f32[32,128], index: 5, kind: input, shape index: {}]
  %s6 = inlined_call_operand.vmem [shape: f32[32,32], index: 6, kind: input, shape index: {}]
  %s7 = inlined_call_operand.vmem [shape: f32[32,32], index: 7, kind: output, shape index: {0}]
  %s8 = inlined_call_operand.vmem [shape: f32[32,32], index: 8, kind: output, shape index: {1}]
  %9 = xla_tuple %s7, %s8
  %s10 = sld [smem:[#allocation0]]
  $region46: #{closed_call.60} parent=0
    _
  %s12 = ssub.s32 1, %s10
  %s13 = scalar_select 0, %s12, %s10
  // Predicated region
  $region2: #{closed_call.60} parent=0 // pred_check
    _
  $region3: #{closed_call.60} parent=0 // pred_check_branch
    %15 = sbr.rel (0) target = $region5
  $region4: #{closed_call.60} parent=0 // pred_region
    _
  $region5: #{closed_call.60} parent=0 // pred_fallthru
    _
  // Predicated region
  $region6: #{closed_call.60} parent=0 // pred_check
    _
  $region7: #{closed_call.60} parent=0 // pred_check_branch
    %17 = sbr.rel (0) target = $region9
  $region8: #{closed_call.60} parent=0 // pred_region
    _
  $region9: #{closed_call.60} parent=0 // pred_fallthru
    _
  // Predicated region
  $region10: #{closed_call.60} parent=0 // pred_check
    _
  $region11: #{closed_call.60} parent=0 // pred_check_branch
    %19 = sbr.rel (0) target = $region13
  $region12: #{closed_call.60} parent=0 // pred_region
    _
  $region13: #{closed_call.60} parent=0 // pred_fallthru
    _
  // Predicated region
  $region14: #{closed_call.60} parent=0 // pred_check
    _
  $region15: #{closed_call.60} parent=0 // pred_check_branch
    %21 = sbr.rel (0) target = $region17
  $region16: #{closed_call.60} parent=0 // pred_region
    _
  $region17: #{closed_call.60} parent=0 // pred_fallthru
    _
  // Predicated region
  $region18: #{closed_call.60} parent=0 // pred_check
    _
  $region19: #{closed_call.60} parent=0 // pred_check_branch
    %23 = sbr.rel (0) target = $region21
  $region20: #{closed_call.60} parent=0 // pred_region
    _
  $region21: #{closed_call.60} parent=0 // pred_fallthru
    _
  // Predicated region
  $region22: #{closed_call.60} parent=0 // pred_check
    _
  $region23: #{closed_call.60} parent=0 // pred_check_branch
    %25 = sbr.rel (0) target = $region25
  $region24: #{closed_call.60} parent=0 // pred_region
    _
  $region25: #{closed_call.60} parent=0 // pred_fallthru
    _
  // Predicated region
  $region26: #{closed_call.60} parent=0 // pred_check
    _
  $region27: #{closed_call.60} parent=0 // pred_check_branch
    %27 = sbr.rel (0) target = $region29
  $region28: #{closed_call.60} parent=0 // pred_region
    _
  $region29: #{closed_call.60} parent=0 // pred_fallthru
    _
  %v29 = vld [vmem:[%s0] sm:$0xff]
  %v30 = vld [vmem:[%s0 + $0x8] sm:$0xf]
  %v31 = vld [vmem:[%s0 + $0xc] sm:$0xff]
  %v32 = vld [vmem:[%s0 + $0x14] sm:$0xf]
  %v33 = vld [vmem:[%s0 + $0x18] sm:$0xff]
  %v34 = vld [vmem:[%s0 + $0x20] sm:$0xf]
  %v35 = vld [vmem:[%s0 + $0x24] sm:$0xff]
  %v36 = vld [vmem:[%s0 + $0x2c] sm:$0xf]
  %v37 = vld [vmem:[%s1] sm:$0xf]
  %v38 = vld [vmem:[%s1 + $0x4] sm:$0xf]
  %v39 = vld [vmem:[%s1 + $0x8] sm:$0xf]
  %v40 = vld [vmem:[%s1 + $0xc] sm:$0xf]
  %v41 = vld [vmem:[%s1 + $0x10] sm:$0xf]
  %v42 = vld [vmem:[%s1 + $0x14] sm:$0xf]
  %v43 = vld [vmem:[%s1 + $0x18] sm:$0xf]
  %v44 = vld [vmem:[%s1 + $0x1c] sm:$0xf]
  %v45 = vld [vmem:[%s1 + $0x20] sm:$0xf]
  %v46 = vld [vmem:[%s1 + $0x24] sm:$0xf]
  %v47 = vld [vmem:[%s1 + $0x28] sm:$0xf]
  %v48 = vld [vmem:[%s1 + $0x2c] sm:$0xf]
  %v49 = vld [vmem:[%s1 + $0x30] sm:$0xf]
  %v50 = vld [vmem:[%s1 + $0x34] sm:$0xf]
  %v51 = vld [vmem:[%s1 + $0x38] sm:$0xf]
  %v52 = vld [vmem:[%s1 + $0x3c] sm:$0xf]
  %v53 = vld [vmem:[%s1 + $0x40] sm:$0xf]
  %v54 = vld [vmem:[%s1 + $0x44] sm:$0xf]
  %v55 = vld [vmem:[%s1 + $0x48] sm:$0xf]
  %v56 = vld [vmem:[%s1 + $0x4c] sm:$0xf]
  %v57 = vld [vmem:[%s1 + $0x50] sm:$0xf]
  %v58 = vld [vmem:[%s1 + $0x54] sm:$0xf]
  %v59 = vld [vmem:[%s1 + $0x58] sm:$0xf]
  %v60 = vld [vmem:[%s1 + $0x5c] sm:$0xf]
  %v61 = vld [vmem:[%s1 + $0x60] sm:$0xf]
  %v62 = vld [vmem:[%s1 + $0x64] sm:$0xf]
  %v63 = vld [vmem:[%s1 + $0x68] sm:$0xf]
  %v64 = vld [vmem:[%s1 + $0x6c] sm:$0xf]
  %v65 = vld [vmem:[%s1 + $0x70] sm:$0xf]
  %v66 = vld [vmem:[%s1 + $0x74] sm:$0xf]
  %v67 = vld [vmem:[%s1 + $0x78] sm:$0xf]
  %v68 = vld [vmem:[%s1 + $0x7c] sm:$0xf]
  %v69 = vld [vmem:[%s1 + $0x80] sm:$0xf]
  %v70 = vld [vmem:[%s1 + $0x84] sm:$0xf]
  %v71 = vld [vmem:[%s1 + $0x88] sm:$0xf]
  %v72 = vld [vmem:[%s1 + $0x8c] sm:$0xf]
  %v73 = vld [vmem:[%s2] sm:$0x1]
  %v75 = vperm.slane %v73, 0
  %v85 = vunpack.c.l.b16 %v29
  %v86 = vunpack.c.h.b16 %v29
  %v87 = vunpack.c.l.b16 %v30
  %v88 = vunpack.c.l.b16 %v31
  %v89 = vunpack.c.h.b16 %v31
  %v90 = vunpack.c.l.b16 %v32
  %v91 = vunpack.c.l.b16 %v33
  %v92 = vunpack.c.h.b16 %v33
  %v93 = vunpack.c.l.b16 %v34
  %v94 = vunpack.c.l.b16 %v35
  %v95 = vunpack.c.h.b16 %v35
  %v96 = vunpack.c.l.b16 %v36
  %v97 = vpack.c.b16 %v88, %v85
  %v98 = vpack.c.b16 %v89, %v86
  %v99 = vpack.c.b16 %v90, %v87
  %v100 = vpack.c.b16 %v94, %v91
  %v101 = vpack.c.b16 %v95, %v92
  %v102 = vpack.c.b16 %v96, %v93
  %v143 = vunpack.c.l.b16 %v37
  %v144 = vunpack.c.l.b16 %v38
  %v145 = vunpack.c.l.b16 %v39
  %v146 = vunpack.c.l.b16 %v40
  %v147 = vunpack.c.l.b16 %v41
  %v148 = vunpack.c.l.b16 %v42
  %v149 = vunpack.c.l.b16 %v43
  %v150 = vunpack.c.l.b16 %v44
  %v151 = vunpack.c.l.b16 %v45
  %v152 = vunpack.c.l.b16 %v46
  %v153 = vunpack.c.l.b16 %v47
  %v154 = vunpack.c.l.b16 %v48
  %v155 = vunpack.c.l.b16 %v49
  %v156 = vunpack.c.l.b16 %v50
  %v157 = vunpack.c.l.b16 %v51
  %v158 = vunpack.c.l.b16 %v52
  %v159 = vunpack.c.l.b16 %v53
  %v160 = vunpack.c.l.b16 %v54
  %v161 = vunpack.c.l.b16 %v55
  %v162 = vunpack.c.l.b16 %v56
  %v163 = vunpack.c.l.b16 %v57
  %v164 = vunpack.c.l.b16 %v58
  %v165 = vunpack.c.l.b16 %v59
  %v166 = vunpack.c.l.b16 %v60
  %v167 = vunpack.c.l.b16 %v61
  %v168 = vunpack.c.l.b16 %v62
  %v169 = vunpack.c.l.b16 %v63
  %v170 = vunpack.c.l.b16 %v64
  %v171 = vunpack.c.l.b16 %v65
  %v172 = vunpack.c.l.b16 %v66
  %v173 = vunpack.c.l.b16 %v67
  %v174 = vunpack.c.l.b16 %v68
  %v175 = vunpack.c.l.b16 %v69
  %v176 = vunpack.c.l.b16 %v70
  %v177 = vunpack.c.l.b16 %v71
  %v178 = vunpack.c.l.b16 %v72
  %v179 = vpack.c.b16 %v144, %v143
  %v180 = vpack.c.b16 %v146, %v145
  %v181 = vpack.c.b16 %v148, %v147
  %v182 = vpack.c.b16 %v150, %v149
  %v183 = vpack.c.b16 %v152, %v151
  %v184 = vpack.c.b16 %v154, %v153
  %v185 = vpack.c.b16 %v156, %v155
  %v186 = vpack.c.b16 %v158, %v157
  %v187 = vpack.c.b16 %v160, %v159
  %v188 = vpack.c.b16 %v162, %v161
  %v189 = vpack.c.b16 %v164, %v163
  %v190 = vpack.c.b16 %v166, %v165
  %v191 = vpack.c.b16 %v168, %v167
  %v192 = vpack.c.b16 %v170, %v169
  %v193 = vpack.c.b16 %v172, %v171
  %v194 = vpack.c.b16 %v174, %v173
  %v195 = vpack.c.b16 %v176, %v175
  %v196 = vpack.c.b16 %v178, %v177
  %vm215 = vcmask 261120
  %v217 = vsel %vm215, %v99, 0
  %v220 = vsel %vm215, %v102, 0
  %222 = vmatpush.bf16.msra.mxu0 %v186
  %223 = vmatpush.bf16.msra.mxu0 %v185
  %224 = vmatpush.bf16.msra.mxu0 %v184
  %225 = vmatpush.bf16.msra.mxu0 %v183
  %226 = vmatpush.bf16.msra.mxu0 %v182
  %227 = vmatpush.bf16.msra.mxu0 %v181
  %228 = vmatpush.bf16.msra.mxu0 %v180
  %229 = vmatpush.bf16.msra.mxu0 %v179
  %230 = vmatmul.bf16.gmra.mxu0 %v97
  %v231 = vpop.f32.mrf.mxu0
  %v232 = vadd.f32 %v75, %v231
  %v233 = vpop.f32.mrf.mxu0
  %v234 = vadd.f32 %v75, %v233
  %235 = vmatmul.bf16.gmra.mxu0 %v100
  %v236 = vpop.f32.mrf.mxu0
  %v237 = vadd.f32 %v75, %v236
  %v238 = vpop.f32.mrf.mxu0
  %v239 = vadd.f32 %v75, %v238
  %240 = vdwg.mxu0
  %241 = vmatpush.bf16.msra.mxu0 %v194
  %242 = vmatpush.bf16.msra.mxu0 %v193
  %243 = vmatpush.bf16.msra.mxu0 %v192
  %244 = vmatpush.bf16.msra.mxu0 %v191
  %245 = vmatpush.bf16.msra.mxu0 %v190
  %246 = vmatpush.bf16.msra.mxu0 %v189
  %247 = vmatpush.bf16.msra.mxu0 %v188
  %248 = vmatpush.bf16.msra.mxu0 %v187
  %249 = vmatmul.bf16.gmra.mxu0 %v98
  %v250 = vpop.f32.mrf.mxu0
  %v251 = vadd.f32 %v232, %v250
  %v252 = vpop.f32.mrf.mxu0
  %v253 = vadd.f32 %v234, %v252
  %254 = vmatmul.bf16.gmra.mxu0 %v101
  %v255 = vpop.f32.mrf.mxu0
  %v256 = vadd.f32 %v237, %v255
  %v257 = vpop.f32.mrf.mxu0
  %v258 = vadd.f32 %v239, %v257
  %259 = vdwg.mxu0
  %260 = vmatpush.bf16.msra.mxu0 0
  %261 = vmatpush.bf16.msra.mxu0 0
  %262 = vmatpush.bf16.msra.mxu0 0
  %263 = vmatpush.bf16.msra.mxu0 0
  %264 = vmatpush.bf16.msra.mxu0 0
  %265 = vmatpush.bf16.msra.mxu0 0
  %266 = vmatpush.bf16.msra.mxu0 %v196
  %267 = vmatpush.bf16.msra.mxu0 %v195
  %268 = vmatmul.bf16.gmra.mxu0 %v217
  %v269 = vpop.f32.mrf.mxu0
  %v270 = vadd.f32 %v251, %v269
  %v271 = vpop.f32.mrf.mxu0
  %v272 = vadd.f32 %v253, %v271
  %273 = vmatmul.bf16.gmra.mxu0 %v220
  %v274 = vpop.f32.mrf.mxu0
  %v275 = vadd.f32 %v256, %v274
  %v276 = vpop.f32.mrf.mxu0
  %v277 = vadd.f32 %v258, %v276
  %278 = vdwg.mxu0
  %v279 = vld [vmem:[%s3] sm:$0xff]
  %v280 = vld [vmem:[%s3 + $0x8] sm:$0xff]
  %v281 = vld [vmem:[%s4] sm:$0xff]
  %v282 = vld [vmem:[%s4 + $0x8] sm:$0xff]
  %v283 = vld [vmem:[%s5] sm:$0xff]
  %v284 = vld [vmem:[%s5 + $0x8] sm:$0xff]
  %v285 = vld [vmem:[%s5 + $0x10] sm:$0xff]
  %v286 = vld [vmem:[%s5 + $0x18] sm:$0xff]
  %vm287 = vcmask 785408
  %v288 = vsel %vm287, %v270, 0.0
  %v289 = vsel %vm287, %v272, 0.0
  %v290 = vadd.f32 %v288, %v289
  %291 = vadd.xlane.f32.xlu0 %v290
  %v292 = vpop.xlane.xlu0 %291
  %v293 = vrot.slane %v292, 4
  %v294 = vadd.f32 %v292, %v293
  %v295 = vrot.slane %v294, 2
  %v296 = vadd.f32 %v294, %v295
  %v297 = vrot.slane %v296, 1
  %v298 = vadd.f32 %v296, %v297
  %s299 = vtos %v298
  %v300 = vstv %s299
  %v301 = vrcp.pop 1536.0
  %v302 = vmul.f32 1536.0, %v301
  %v303 = vsub.f32 1.0, %v302
  %v304 = vmul.f32 %v301, %v303
  %v305 = vadd.f32 %v301, %v304
  %vm306 = vweird.f32 %v301
  %v307 = vsel %vm306, %v301, %v305
  %v308 = vmul.f32 %v300, %v307
  %v309 = vsub.f32 %v270, %v308
  %v310 = vsub.f32 %v272, %v308
  %v311 = vmul.f32 %v309, %v309
  %v312 = vmul.f32 %v310, %v310
  %v313 = vsel %vm287, %v311, 0.0
  %v314 = vsel %vm287, %v312, 0.0
  %v315 = vadd.f32 %v313, %v314
  %316 = vadd.xlane.f32.xlu0 %v315
  %v317 = vpop.xlane.xlu0 %316
  %v318 = vrot.slane %v317, 4
  %v319 = vadd.f32 %v317, %v318
  %v320 = vrot.slane %v319, 2
  %v321 = vadd.f32 %v319, %v320
  %v322 = vrot.slane %v321, 1
  %v323 = vadd.f32 %v321, %v322
  %s324 = vtos %v323
  %v325 = vstv %s324
  %v326 = vmul.f32 %v325, %v307
  %v327 = vadd.f32 %v326, 1e-05
  %v328 = vrsqrt.pop %v327
  %v329 = vmul.f32 %v328, %v327
  %v330 = vmul.f32 %v329, %v328
  %v331 = vmul.f32 0.5, %v330
  %v332 = vsub.f32 1.5, %v331
  %v333 = vmul.f32 %v328, %v332
  %vm334 = vweird.f32 %v327
  %vm335 = vweird.f32 %v328
  %vm336 = vmor %vm334, %vm335
  %v337 = vsel %vm336, %v328, %v333
  %v338 = vmul.f32 %v309, %v337
  %v339 = vmul.f32 %v310, %v337
  %v340 = vmul.f32 %v338, %v279
  %v341 = vmul.f32 %v339, %v280
  %v342 = vadd.f32 %v340, %v281
  %v343 = vadd.f32 %v341, %v282
  %v344 = vxor.u32 %v342, 2147483648
  %v345 = vxor.u32 %v343, 2147483648
  %v346 = vmul.f32 %v344, 1.442695
  %v347 = vpow.pop %v346
  %v348 = vmul.f32 %v345, 1.442695
  %v349 = vpow.pop %v348
  %v350 = vadd.f32 %v347, 1.0
  %v351 = vadd.f32 %v349, 1.0
  %v352 = vrcp.pop %v350
  %v353 = vmul.f32 %v350, %v352
  %v354 = vsub.f32 1.0, %v353
  %v355 = vmul.f32 %v352, %v354
  %v356 = vadd.f32 %v352, %v355
  %vm357 = vweird.f32 %v350
  %vm358 = vweird.f32 %v352
  %vm359 = vmor %vm357, %vm358
  %v360 = vsel %vm359, %v352, %v356
  %v361 = vand.u32 2147483647, %v350
  %vm362 = vcmp.eq.f32.partialorder %v361, 8.507059e+37
  %v363 = vand.u32 %v350, 2147483648
  %v364 = vor.u32 1.1754944e-38, %v363
  %v365 = vsel %vm362, %v364, %v360
  %v366 = vmul.f32 1.0, %v365
  %v367 = vrcp.pop %v351
  %v368 = vmul.f32 %v351, %v367
  %v369 = vsub.f32 1.0, %v368
  %v370 = vmul.f32 %v367, %v369
  %v371 = vadd.f32 %v367, %v370
  %vm372 = vweird.f32 %v351
  %vm373 = vweird.f32 %v367
  %vm374 = vmor %vm372, %vm373
  %v375 = vsel %vm374, %v367, %v371
  %v376 = vand.u32 2147483647, %v351
  %vm377 = vcmp.eq.f32.partialorder %v376, 8.507059e+37
  %v378 = vand.u32 %v351, 2147483648
  %v379 = vor.u32 1.1754944e-38, %v378
  %v380 = vsel %vm377, %v379, %v375
  %v381 = vmul.f32 1.0, %v380
  %v382 = vxor.u32 %v283, 2147483648
  %v383 = vxor.u32 %v284, 2147483648
  %v384 = vmul.f32 %v382, 1.442695
  %v385 = vpow.pop %v384
  %v386 = vmul.f32 %v383, 1.442695
  %v387 = vpow.pop %v386
  %v388 = vadd.f32 %v385, 1.0
  %v389 = vadd.f32 %v387, 1.0
  %v390 = vrcp.pop %v388
  %v391 = vmul.f32 %v388, %v390
  %v392 = vsub.f32 1.0, %v391
  %v393 = vmul.f32 %v390, %v392
  %v394 = vadd.f32 %v390, %v393
  %vm395 = vweird.f32 %v388
  %vm396 = vweird.f32 %v390
  %vm397 = vmor %vm395, %vm396
  %v398 = vsel %vm397, %v390, %v394
  %v399 = vand.u32 2147483647, %v388
  %vm400 = vcmp.eq.f32.partialorder %v399, 8.507059e+37
  %v401 = vand.u32 %v388, 2147483648
  %v402 = vor.u32 1.1754944e-38, %v401
  %v403 = vsel %vm400, %v402, %v398
  %v404 = vmul.f32 1.0, %v403
  %v405 = vrcp.pop %v389
  %v406 = vmul.f32 %v389, %v405
  %v407 = vsub.f32 1.0, %v406
  %v408 = vmul.f32 %v405, %v407
  %v409 = vadd.f32 %v405, %v408
  %vm410 = vweird.f32 %v389
  %vm411 = vweird.f32 %v405
  %vm412 = vmor %vm410, %vm411
  %v413 = vsel %vm412, %v405, %v409
  %v414 = vand.u32 2147483647, %v389
  %vm415 = vcmp.eq.f32.partialorder %v414, 8.507059e+37
  %v416 = vand.u32 %v389, 2147483648
  %v417 = vor.u32 1.1754944e-38, %v416
  %v418 = vsel %vm415, %v417, %v413
  %v419 = vmul.f32 1.0, %v418
  %422 = vrot.lane.b32.xlu0 %v342, 96
  %v423 = vpop.permute.xlu0 %422
  %424 = vrot.lane.b32.xlu0 %v343, 96
  %v425 = vpop.permute.xlu0 %424
  %v428 = vmul.f32 %v366, %v423
  %v429 = vmul.f32 %v381, %v425
  %v430 = vsub.f32 1.0, %v366
  %v431 = vsub.f32 1.0, %v381
  %434 = vrot.lane.b32.xlu0 %v283, 64
  %v435 = vpop.permute.xlu0 %434
  %436 = vrot.lane.b32.xlu0 %v284, 64
  %v437 = vpop.permute.xlu0 %436
  %v440 = vmul.f32 %v430, %v435
  %v441 = vmul.f32 %v431, %v437
  %v442 = vadd.f32 %v428, %v440
  %v443 = vadd.f32 %v429, %v441
  %444 = vst.msk [vmem:[%s7] sm:$0xff] %vm215, %v442
  %445 = vst.msk [vmem:[%s7 + $0x8] sm:$0xff] %vm215, %v443
  %v446 = vmul.f32 %v404, %v435
  %v447 = vmul.f32 %v419, %v437
  %v448 = vsub.f32 1.0, %v404
  %v449 = vsub.f32 1.0, %v419
  %v450 = vmul.f32 %v448, %v423
  %v451 = vmul.f32 %v449, %v425
  %v452 = vadd.f32 %v446, %v450
  %v453 = vadd.f32 %v447, %v451
  %456 = vrot.lane.b32.xlu0 %v452, 96
  %v457 = vpop.permute.xlu0 %456
  %458 = vrot.lane.b32.xlu0 %v453, 96
  %v459 = vpop.permute.xlu0 %458
  %462 = vst.msk [vmem:[%s8] sm:$0xff] %vm215, %v457
  %463 = vst.msk [vmem:[%s8 + $0x8] sm:$0xff] %vm215, %v459
  %v464 = vsel %vm287, %v275, 0.0
  %v465 = vsel %vm287, %v277, 0.0
  %v466 = vadd.f32 %v464, %v465
  %467 = vadd.xlane.f32.xlu0 %v466
  %v468 = vpop.xlane.xlu0 %467
  %v469 = vrot.slane %v468, 4
  %v470 = vadd.f32 %v468, %v469
  %v471 = vrot.slane %v470, 2
  %v472 = vadd.f32 %v470, %v471
  %v473 = vrot.slane %v472, 1
  %v474 = vadd.f32 %v472, %v473
  %s475 = vtos %v474
  %v476 = vstv %s475
  %v477 = vmul.f32 %v476, %v307
  %v478 = vsub.f32 %v275, %v477
  %v479 = vsub.f32 %v277, %v477
  %v480 = vmul.f32 %v478, %v478
  %v481 = vmul.f32 %v479, %v479
  %v482 = vsel %vm287, %v480, 0.0
  %v483 = vsel %vm287, %v481, 0.0
  %v484 = vadd.f32 %v482, %v483
  %485 = vadd.xlane.f32.xlu0 %v484
  %v486 = vpop.xlane.xlu0 %485
  %v487 = vrot.slane %v486, 4
  %v488 = vadd.f32 %v486, %v487
  %v489 = vrot.slane %v488, 2
  %v490 = vadd.f32 %v488, %v489
  %v491 = vrot.slane %v490, 1
  %v492 = vadd.f32 %v490, %v491
  %s493 = vtos %v492
  %v494 = vstv %s493
  %v495 = vmul.f32 %v494, %v307
  %v496 = vadd.f32 %v495, 1e-05
  %v497 = vrsqrt.pop %v496
  %v498 = vmul.f32 %v497, %v496
  %v499 = vmul.f32 %v498, %v497
  %v500 = vmul.f32 0.5, %v499
  %v501 = vsub.f32 1.5, %v500
  %v502 = vmul.f32 %v497, %v501
  %vm503 = vweird.f32 %v496
  %vm504 = vweird.f32 %v497
  %vm505 = vmor %vm503, %vm504
  %v506 = vsel %vm505, %v497, %v502
  %v507 = vmul.f32 %v478, %v506
  %v508 = vmul.f32 %v479, %v506
  %v509 = vmul.f32 %v507, %v279
  %v510 = vmul.f32 %v508, %v280
  %v511 = vadd.f32 %v509, %v281
  %v512 = vadd.f32 %v510, %v282
  %v513 = vxor.u32 %v511, 2147483648
  %v514 = vxor.u32 %v512, 2147483648
  %v515 = vmul.f32 %v513, 1.442695
  %v516 = vpow.pop %v515
  %v517 = vmul.f32 %v514, 1.442695
  %v518 = vpow.pop %v517
  %v519 = vadd.f32 %v516, 1.0
  %v520 = vadd.f32 %v518, 1.0
  %v521 = vrcp.pop %v519
  %v522 = vmul.f32 %v519, %v521
  %v523 = vsub.f32 1.0, %v522
  %v524 = vmul.f32 %v521, %v523
  %v525 = vadd.f32 %v521, %v524
  %vm526 = vweird.f32 %v519
  %vm527 = vweird.f32 %v521
  %vm528 = vmor %vm526, %vm527
  %v529 = vsel %vm528, %v521, %v525
  %v530 = vand.u32 2147483647, %v519
  %vm531 = vcmp.eq.f32.partialorder %v530, 8.507059e+37
  %v532 = vand.u32 %v519, 2147483648
  %v533 = vor.u32 1.1754944e-38, %v532
  %v534 = vsel %vm531, %v533, %v529
  %v535 = vmul.f32 1.0, %v534
  %v536 = vrcp.pop %v520
  %v537 = vmul.f32 %v520, %v536
  %v538 = vsub.f32 1.0, %v537
  %v539 = vmul.f32 %v536, %v538
  %v540 = vadd.f32 %v536, %v539
  %vm541 = vweird.f32 %v520
  %vm542 = vweird.f32 %v536
  %vm543 = vmor %vm541, %vm542
  %v544 = vsel %vm543, %v536, %v540
  %v545 = vand.u32 2147483647, %v520
  %vm546 = vcmp.eq.f32.partialorder %v545, 8.507059e+37
  %v547 = vand.u32 %v520, 2147483648
  %v548 = vor.u32 1.1754944e-38, %v547
  %v549 = vsel %vm546, %v548, %v544
  %v550 = vmul.f32 1.0, %v549
  %v551 = vxor.u32 %v285, 2147483648
  %v552 = vxor.u32 %v286, 2147483648
  %v553 = vmul.f32 %v551, 1.442695
  %v554 = vpow.pop %v553
  %v555 = vmul.f32 %v552, 1.442695
  %v556 = vpow.pop %v555
  %v557 = vadd.f32 %v554, 1.0
  %v558 = vadd.f32 %v556, 1.0
  %v559 = vrcp.pop %v557
  %v560 = vmul.f32 %v557, %v559
  %v561 = vsub.f32 1.0, %v560
  %v562 = vmul.f32 %v559, %v561
  %v563 = vadd.f32 %v559, %v562
  %vm564 = vweird.f32 %v557
  %vm565 = vweird.f32 %v559
  %vm566 = vmor %vm564, %vm565
  %v567 = vsel %vm566, %v559, %v563
  %v568 = vand.u32 2147483647, %v557
  %vm569 = vcmp.eq.f32.partialorder %v568, 8.507059e+37
  %v570 = vand.u32 %v557, 2147483648
  %v571 = vor.u32 1.1754944e-38, %v570
  %v572 = vsel %vm569, %v571, %v567
  %v573 = vmul.f32 1.0, %v572
  %v574 = vrcp.pop %v558
  %v575 = vmul.f32 %v558, %v574
  %v576 = vsub.f32 1.0, %v575
  %v577 = vmul.f32 %v574, %v576
  %v578 = vadd.f32 %v574, %v577
  %vm579 = vweird.f32 %v558
  %vm580 = vweird.f32 %v574
  %vm581 = vmor %vm579, %vm580
  %v582 = vsel %vm581, %v574, %v578
  %v583 = vand.u32 2147483647, %v558
  %vm584 = vcmp.eq.f32.partialorder %v583, 8.507059e+37
  %v585 = vand.u32 %v558, 2147483648
  %v586 = vor.u32 1.1754944e-38, %v585
  %v587 = vsel %vm584, %v586, %v582
  %v588 = vmul.f32 1.0, %v587
  %591 = vrot.lane.b32.xlu0 %v511, 96
  %v592 = vpop.permute.xlu0 %591
  %593 = vrot.lane.b32.xlu0 %v512, 96
  %v594 = vpop.permute.xlu0 %593
  %v597 = vmul.f32 %v535, %v592
  %v598 = vmul.f32 %v550, %v594
  %v599 = vsub.f32 1.0, %v535
  %v600 = vsub.f32 1.0, %v550
  %603 = vrot.lane.b32.xlu0 %v285, 64
  %v604 = vpop.permute.xlu0 %603
  %605 = vrot.lane.b32.xlu0 %v286, 64
  %v606 = vpop.permute.xlu0 %605
  %v609 = vmul.f32 %v599, %v604
  %v610 = vmul.f32 %v600, %v606
  %v611 = vadd.f32 %v597, %v609
  %v612 = vadd.f32 %v598, %v610
  %613 = vst.msk [vmem:[%s7 + $0x10] sm:$0xff] %vm215, %v611
  %614 = vst.msk [vmem:[%s7 + $0x18] sm:$0xff] %vm215, %v612
  %v615 = vmul.f32 %v573, %v604
  %v616 = vmul.f32 %v588, %v606
  %v617 = vsub.f32 1.0, %v573
  %v618 = vsub.f32 1.0, %v588
  %v619 = vmul.f32 %v617, %v592
  %v620 = vmul.f32 %v618, %v594
  %v621 = vadd.f32 %v615, %v619
  %v622 = vadd.f32 %v616, %v620
  %625 = vrot.lane.b32.xlu0 %v621, 96
  %v626 = vpop.permute.xlu0 %625
  %627 = vrot.lane.b32.xlu0 %v622, 96
  %v628 = vpop.permute.xlu0 %627
  %631 = vst.msk [vmem:[%s8 + $0x10] sm:$0xff] %vm215, %v626
  %632 = vst.msk [vmem:[%s8 + $0x18] sm:$0xff] %vm215, %v628
  // Predicated region
  $region30: #{closed_call.60} parent=0 // pred_check
    _
  $region31: #{closed_call.60} parent=0 // pred_check_branch
    %634 = sbr.rel (0) target = $region33
  $region32: #{closed_call.60} parent=0 // pred_region
    _
  $region33: #{closed_call.60} parent=0 // pred_fallthru
    _
  // Predicated region
  $region34: #{closed_call.60} parent=0 // pred_check
    _
  $region35: #{closed_call.60} parent=0 // pred_check_branch
    %636 = sbr.rel (0) target = $region37
  $region36: #{closed_call.60} parent=0 // pred_region
    _
  $region37: #{closed_call.60} parent=0 // pred_fallthru
    _
  // Predicated region
  $region38: #{closed_call.60} parent=0 // pred_check
    _
  $region39: #{closed_call.60} parent=0 // pred_check_branch
    %638 = sbr.rel (0) target = $region41
  $region40: #{closed_call.60} parent=0 // pred_region
    _
  $region41: #{closed_call.60} parent=0 // pred_fallthru
    _
  // Predicated region
  $region42: #{closed_call.60} parent=0 // pred_check
    _
  $region43: #{closed_call.60} parent=0 // pred_check_branch
    %640 = sbr.rel (0) target = $region45
  $region44: #{closed_call.60} parent=0 // pred_region
    _
  $region45: #{closed_call.60} parent=0 // pred_fallthru
    _

// kernel: closed_call.59
$region0: #{closed_call.59}
  #allocation0 [shape = 'u32[]', space=smem, size = 0x4, offset = 0x4, fixed_abs, tag = 'smem constant byte address 0x4 - core index']
  #allocation1 [shape = 'u32[72,128]{1,0:T(1,128)}', space=vmem, size = 0x9000, scoped, tag = 'internal scratch']
  %s0 = inlined_call_operand.vmem [shape: bf16[32,288], index: 0, kind: input, shape index: {}]
  %s1 = inlined_call_operand.vmem [shape: bf16[32,288], index: 1, kind: input, shape index: {}]
  %s2 = inlined_call_operand.vmem [shape: bf16[288,128], index: 2, kind: input, shape index: {}]
  %s3 = inlined_call_operand.vmem [shape: f32[1,128], index: 3, kind: input, shape index: {}]
  %s4 = inlined_call_operand.vmem [shape: bf16[288,32], index: 4, kind: input, shape index: {}]
  %s5 = inlined_call_operand.vmem [shape: f32[1,32], index: 5, kind: input, shape index: {}]
  %s6 = inlined_call_operand.vmem [shape: f32[16,32], index: 6, kind: input, shape index: {}]
  %s7 = inlined_call_operand.vmem [shape: f32[16,32], index: 7, kind: input, shape index: {}]
  %s8 = inlined_call_operand.vmem [shape: f32[16,96], index: 8, kind: input, shape index: {}]
  %s9 = inlined_call_operand.vmem [shape: f32[16,96], index: 9, kind: input, shape index: {}]
  %s10 = inlined_call_operand.vmem [shape: f32[16,32], index: 10, kind: input, shape index: {}]
  %s11 = inlined_call_operand.vmem [shape: f32[16,32], index: 11, kind: input, shape index: {}]
  %s12 = inlined_call_operand.vmem [shape: f32[8,16,32], index: 12, kind: input, shape index: {}]
  %s13 = inlined_call_operand.vmem [shape: f32[8,16,32], index: 13, kind: input, shape index: {}]
  %s14 = inlined_call_operand.vmem [shape: f32[2,16,32], index: 14, kind: input, shape index: {}]
  %s15 = inlined_call_operand.vmem [shape: f32[32,128], index: 15, kind: output, shape index: {}]
  %s16 = sld [smem:[#allocation0]]
  $region70: #{closed_call.59} parent=0
    _
  %s18 = ssub.s32 1, %s16
  %s19 = scalar_select 0, %s18, %s16
  // Predicated region
  $region2: #{closed_call.59} parent=0 // pred_check
    _
  $region3: #{closed_call.59} parent=0 // pred_check_branch
    %21 = sbr.rel (0) target = $region5
  $region4: #{closed_call.59} parent=0 // pred_region
    _
  $region5: #{closed_call.59} parent=0 // pred_fallthru
    _
  // Predicated region
  $region6: #{closed_call.59} parent=0 // pred_check
    _
  $region7: #{closed_call.59} parent=0 // pred_check_branch
    %23 = sbr.rel (0) target = $region9
  $region8: #{closed_call.59} parent=0 // pred_region
    _
  $region9: #{closed_call.59} parent=0 // pred_fallthru
    _
  // Predicated region
  $region10: #{closed_call.59} parent=0 // pred_check
    _
  $region11: #{closed_call.59} parent=0 // pred_check_branch
    %25 = sbr.rel (0) target = $region13
  $region12: #{closed_call.59} parent=0 // pred_region
    _
  $region13: #{closed_call.59} parent=0 // pred_fallthru
    _
  // Predicated region
  $region14: #{closed_call.59} parent=0 // pred_check
    _
  $region15: #{closed_call.59} parent=0 // pred_check_branch
    %27 = sbr.rel (0) target = $region17
  $region16: #{closed_call.59} parent=0 // pred_region
    _
  $region17: #{closed_call.59} parent=0 // pred_fallthru
    _
  // Predicated region
  $region18: #{closed_call.59} parent=0 // pred_check
    _
  $region19: #{closed_call.59} parent=0 // pred_check_branch
    %29 = sbr.rel (0) target = $region21
  $region20: #{closed_call.59} parent=0 // pred_region
    _
  $region21: #{closed_call.59} parent=0 // pred_fallthru
    _
  // Predicated region
  $region22: #{closed_call.59} parent=0 // pred_check
    _
  $region23: #{closed_call.59} parent=0 // pred_check_branch
    %31 = sbr.rel (0) target = $region25
  $region24: #{closed_call.59} parent=0 // pred_region
    _
  $region25: #{closed_call.59} parent=0 // pred_fallthru
    _
  // Predicated region
  $region26: #{closed_call.59} parent=0 // pred_check
    _
  $region27: #{closed_call.59} parent=0 // pred_check_branch
    %33 = sbr.rel (0) target = $region29
  $region28: #{closed_call.59} parent=0 // pred_region
    _
  $region29: #{closed_call.59} parent=0 // pred_fallthru
    _
  // Predicated region
  $region30: #{closed_call.59} parent=0 // pred_check
    _
  $region31: #{closed_call.59} parent=0 // pred_check_branch
    %35 = sbr.rel (0) target = $region33
  $region32: #{closed_call.59} parent=0 // pred_region
    _
  $region33: #{closed_call.59} parent=0 // pred_fallthru
    _
  // Predicated region
  $region34: #{closed_call.59} parent=0 // pred_check
    _
  $region35: #{closed_call.59} parent=0 // pred_check_branch
    %37 = sbr.rel (0) target = $region37
  $region36: #{closed_call.59} parent=0 // pred_region
    _
  $region37: #{closed_call.59} parent=0 // pred_fallthru
    _
  // Predicated region
  $region38: #{closed_call.59} parent=0 // pred_check
    _
  $region39: #{closed_call.59} parent=0 // pred_check_branch
    %39 = sbr.rel (0) target = $region41
  $region40: #{closed_call.59} parent=0 // pred_region
    _
  $region41: #{closed_call.59} parent=0 // pred_fallthru
    _
  // Predicated region
  $region42: #{closed_call.59} parent=0 // pred_check
    _
  $region43: #{closed_call.59} parent=0 // pred_check_branch
    %41 = sbr.rel (0) target = $region45
  $region44: #{closed_call.59} parent=0 // pred_region
    _
  $region45: #{closed_call.59} parent=0 // pred_fallthru
    _
  // Predicated region
  $region46: #{closed_call.59} parent=0 // pred_check
    _
  $region47: #{closed_call.59} parent=0 // pred_check_branch
    %43 = sbr.rel (0) target = $region49
  $region48: #{closed_call.59} parent=0 // pred_region
    _
  $region49: #{closed_call.59} parent=0 // pred_fallthru
    _
  // Predicated region
  $region50: #{closed_call.59} parent=0 // pred_check
    _
  $region51: #{closed_call.59} parent=0 // pred_check_branch
    %45 = sbr.rel (0) target = $region53
  $region52: #{closed_call.59} parent=0 // pred_region
    _
  $region53: #{closed_call.59} parent=0 // pred_fallthru
    _
  // Predicated region
  $region54: #{closed_call.59} parent=0 // pred_check
    _
  $region55: #{closed_call.59} parent=0 // pred_check_branch
    %47 = sbr.rel (0) target = $region57
  $region56: #{closed_call.59} parent=0 // pred_region
    _
  $region57: #{closed_call.59} parent=0 // pred_fallthru
    _
  // Predicated region
  $region58: #{closed_call.59} parent=0 // pred_check
    _
  $region59: #{closed_call.59} parent=0 // pred_check_branch
    %49 = sbr.rel (0) target = $region61
  $region60: #{closed_call.59} parent=0 // pred_region
    _
  $region61: #{closed_call.59} parent=0 // pred_fallthru
    _
  %v51 = vld [vmem:[%s0] sm:$0xff]
  %v52 = vld [vmem:[%s0 + $0x8] sm:$0xf]
  %v53 = vld [vmem:[%s0 + $0xc] sm:$0xff]
  %v54 = vld [vmem:[%s0 + $0x14] sm:$0xf]
  %v55 = vld [vmem:[%s0 + $0x18] sm:$0xff]
  %v56 = vld [vmem:[%s0 + $0x20] sm:$0xf]
  %v57 = vld [vmem:[%s0 + $0x24] sm:$0xff]
  %v58 = vld [vmem:[%s0 + $0x2c] sm:$0xf]
  %v59 = vld [vmem:[%s2] sm:$0xf]
  %v60 = vld [vmem:[%s2 + $0x4] sm:$0xf]
  %v61 = vld [vmem:[%s2 + $0x8] sm:$0xf]
  %v62 = vld [vmem:[%s2 + $0xc] sm:$0xf]
  %v63 = vld [vmem:[%s2 + $0x10] sm:$0xf]
  %v64 = vld [vmem:[%s2 + $0x14] sm:$0xf]
  %v65 = vld [vmem:[%s2 + $0x18] sm:$0xf]
  %v66 = vld [vmem:[%s2 + $0x1c] sm:$0xf]
  %v67 = vld [vmem:[%s2 + $0x20] sm:$0xf]
  %v68 = vld [vmem:[%s2 + $0x24] sm:$0xf]
  %v69 = vld [vmem:[%s2 + $0x28] sm:$0xf]
  %v70 = vld [vmem:[%s2 + $0x2c] sm:$0xf]
  %v71 = vld [vmem:[%s2 + $0x30] sm:$0xf]
  %v72 = vld [vmem:[%s2 + $0x34] sm:$0xf]
  %v73 = vld [vmem:[%s2 + $0x38] sm:$0xf]
  %v74 = vld [vmem:[%s2 + $0x3c] sm:$0xf]
  %v75 = vld [vmem:[%s2 + $0x40] sm:$0xf]
  %v76 = vld [vmem:[%s2 + $0x44] sm:$0xf]
  %v77 = vld [vmem:[%s2 + $0x48] sm:$0xf]
  %v78 = vld [vmem:[%s2 + $0x4c] sm:$0xf]
  %v79 = vld [vmem:[%s2 + $0x50] sm:$0xf]
  %v80 = vld [vmem:[%s2 + $0x54] sm:$0xf]
  %v81 = vld [vmem:[%s2 + $0x58] sm:$0xf]
  %v82 = vld [vmem:[%s2 + $0x5c] sm:$0xf]
  %v83 = vld [vmem:[%s2 + $0x60] sm:$0xf]
  %v84 = vld [vmem:[%s2 + $0x64] sm:$0xf]
  %v85 = vld [vmem:[%s2 + $0x68] sm:$0xf]
  %v86 = vld [vmem:[%s2 + $0x6c] sm:$0xf]
  %v87 = vld [vmem:[%s2 + $0x70] sm:$0xf]
  %v88 = vld [vmem:[%s2 + $0x74] sm:$0xf]
  %v89 = vld [vmem:[%s2 + $0x78] sm:$0xf]
  %v90 = vld [vmem:[%s2 + $0x7c] sm:$0xf]
  %v91 = vld [vmem:[%s2 + $0x80] sm:$0xf]
  %v92 = vld [vmem:[%s2 + $0x84] sm:$0xf]
  %v93 = vld [vmem:[%s2 + $0x88] sm:$0xf]
  %v94 = vld [vmem:[%s2 + $0x8c] sm:$0xf]
  %v95 = vld [vmem:[%s3] sm:$0x1]
  %v97 = vperm.slane %v95, 0
  %v107 = vunpack.c.l.b16 %v51
  %v108 = vunpack.c.h.b16 %v51
  %v109 = vunpack.c.l.b16 %v52
  %v110 = vunpack.c.l.b16 %v53
  %v111 = vunpack.c.h.b16 %v53
  %v112 = vunpack.c.l.b16 %v54
  %v113 = vunpack.c.l.b16 %v55
  %v114 = vunpack.c.h.b16 %v55
  %v115 = vunpack.c.l.b16 %v56
  %v116 = vunpack.c.l.b16 %v57
  %v117 = vunpack.c.h.b16 %v57
  %v118 = vunpack.c.l.b16 %v58
  %v119 = vpack.c.b16 %v110, %v107
  %v120 = vpack.c.b16 %v111, %v108
  %v121 = vpack.c.b16 %v112, %v109
  %v122 = vpack.c.b16 %v116, %v113
  %v123 = vpack.c.b16 %v117, %v114
  %v124 = vpack.c.b16 %v118, %v115
  %v165 = vunpack.c.l.b16 %v59
  %v166 = vunpack.c.l.b16 %v60
  %v167 = vunpack.c.l.b16 %v61
  %v168 = vunpack.c.l.b16 %v62
  %v169 = vunpack.c.l.b16 %v63
  %v170 = vunpack.c.l.b16 %v64
  %v171 = vunpack.c.l.b16 %v65
  %v172 = vunpack.c.l.b16 %v66
  %v173 = vunpack.c.l.b16 %v67
  %v174 = vunpack.c.l.b16 %v68
  %v175 = vunpack.c.l.b16 %v69
  %v176 = vunpack.c.l.b16 %v70
  %v177 = vunpack.c.l.b16 %v71
  %v178 = vunpack.c.l.b16 %v72
  %v179 = vunpack.c.l.b16 %v73
  %v180 = vunpack.c.l.b16 %v74
  %v181 = vunpack.c.l.b16 %v75
  %v182 = vunpack.c.l.b16 %v76
  %v183 = vunpack.c.l.b16 %v77
  %v184 = vunpack.c.l.b16 %v78
  %v185 = vunpack.c.l.b16 %v79
  %v186 = vunpack.c.l.b16 %v80
  %v187 = vunpack.c.l.b16 %v81
  %v188 = vunpack.c.l.b16 %v82
  %v189 = vunpack.c.l.b16 %v83
  %v190 = vunpack.c.l.b16 %v84
  %v191 = vunpack.c.l.b16 %v85
  %v192 = vunpack.c.l.b16 %v86
  %v193 = vunpack.c.l.b16 %v87
  %v194 = vunpack.c.l.b16 %v88
  %v195 = vunpack.c.l.b16 %v89
  %v196 = vunpack.c.l.b16 %v90
  %v197 = vunpack.c.l.b16 %v91
  %v198 = vunpack.c.l.b16 %v92
  %v199 = vunpack.c.l.b16 %v93
  %v200 = vunpack.c.l.b16 %v94
  %v201 = vpack.c.b16 %v166, %v165
  %v202 = vpack.c.b16 %v168, %v167
  %v203 = vpack.c.b16 %v170, %v169
  %v204 = vpack.c.b16 %v172, %v171
  %v205 = vpack.c.b16 %v174, %v173
  %v206 = vpack.c.b16 %v176, %v175
  %v207 = vpack.c.b16 %v178, %v177
  %v208 = vpack.c.b16 %v180, %v179
  %v209 = vpack.c.b16 %v182, %v181
  %v210 = vpack.c.b16 %v184, %v183
  %v211 = vpack.c.b16 %v186, %v185
  %v212 = vpack.c.b16 %v188, %v187
  %v213 = vpack.c.b16 %v190, %v189
  %v214 = vpack.c.b16 %v192, %v191
  %v215 = vpack.c.b16 %v194, %v193
  %v216 = vpack.c.b16 %v196, %v195
  %v217 = vpack.c.b16 %v198, %v197
  %v218 = vpack.c.b16 %v200, %v199
  %vm237 = vcmask 261120
  %v239 = vsel %vm237, %v121, 0
  %v242 = vsel %vm237, %v124, 0
  %244 = vmatpush.bf16.msra.mxu0 %v208
  %245 = vmatpush.bf16.msra.mxu0 %v207
  %246 = vmatpush.bf16.msra.mxu0 %v206
  %247 = vmatpush.bf16.msra.mxu0 %v205
  %248 = vmatpush.bf16.msra.mxu0 %v204
  %249 = vmatpush.bf16.msra.mxu0 %v203
  %250 = vmatpush.bf16.msra.mxu0 %v202
  %251 = vmatpush.bf16.msra.mxu0 %v201
  %252 = vmatmul.bf16.gmra.mxu0 %v119
  %v253 = vpop.f32.mrf.mxu0
  %v254 = vadd.f32 %v97, %v253
  %v255 = vpop.f32.mrf.mxu0
  %v256 = vadd.f32 %v97, %v255
  %257 = vmatmul.bf16.gmra.mxu0 %v122
  %v258 = vpop.f32.mrf.mxu0
  %v259 = vadd.f32 %v97, %v258
  %v260 = vpop.f32.mrf.mxu0
  %v261 = vadd.f32 %v97, %v260
  %262 = vdwg.mxu0
  %263 = vmatpush.bf16.msra.mxu0 %v216
  %264 = vmatpush.bf16.msra.mxu0 %v215
  %265 = vmatpush.bf16.msra.mxu0 %v214
  %266 = vmatpush.bf16.msra.mxu0 %v213
  %267 = vmatpush.bf16.msra.mxu0 %v212
  %268 = vmatpush.bf16.msra.mxu0 %v211
  %269 = vmatpush.bf16.msra.mxu0 %v210
  %270 = vmatpush.bf16.msra.mxu0 %v209
  %271 = vmatmul.bf16.gmra.mxu0 %v120
  %v272 = vpop.f32.mrf.mxu0
  %v273 = vadd.f32 %v254, %v272
  %v274 = vpop.f32.mrf.mxu0
  %v275 = vadd.f32 %v256, %v274
  %276 = vmatmul.bf16.gmra.mxu0 %v123
  %v277 = vpop.f32.mrf.mxu0
  %v278 = vadd.f32 %v259, %v277
  %v279 = vpop.f32.mrf.mxu0
  %v280 = vadd.f32 %v261, %v279
  %281 = vdwg.mxu0
  %282 = vmatpush.bf16.msra.mxu0 0
  %283 = vmatpush.bf16.msra.mxu0 0
  %284 = vmatpush.bf16.msra.mxu0 0
  %285 = vmatpush.bf16.msra.mxu0 0
  %286 = vmatpush.bf16.msra.mxu0 0
  %287 = vmatpush.bf16.msra.mxu0 0
  %288 = vmatpush.bf16.msra.mxu0 %v218
  %289 = vmatpush.bf16.msra.mxu0 %v217
  %290 = vmatmul.bf16.gmra.mxu0 %v239
  %v291 = vpop.f32.mrf.mxu0
  %v292 = vadd.f32 %v273, %v291
  %v293 = vpop.f32.mrf.mxu0
  %v294 = vadd.f32 %v275, %v293
  %295 = vmatmul.bf16.gmra.mxu0 %v242
  %v296 = vpop.f32.mrf.mxu0
  %v297 = vadd.f32 %v278, %v296
  %v298 = vpop.f32.mrf.mxu0
  %v299 = vadd.f32 %v280, %v298
  %300 = vdwg.mxu0
  %v301 = vld [vmem:[%s1] sm:$0xff]
  %v302 = vld [vmem:[%s1 + $0x8] sm:$0xf]
  %v303 = vld [vmem:[%s1 + $0xc] sm:$0xff]
  %v304 = vld [vmem:[%s1 + $0x14] sm:$0xf]
  %v305 = vld [vmem:[%s1 + $0x18] sm:$0xff]
  %v306 = vld [vmem:[%s1 + $0x20] sm:$0xf]
  %v307 = vld [vmem:[%s1 + $0x24] sm:$0xff]
  %v308 = vld [vmem:[%s1 + $0x2c] sm:$0xf]
  %v309 = vld [vmem:[%s4] sm:$0xf]
  %v310 = vld [vmem:[%s4 + $0x4] sm:$0xf]
  %v311 = vld [vmem:[%s4 + $0x8] sm:$0xf]
  %v312 = vld [vmem:[%s4 + $0xc] sm:$0xf]
  %v313 = vld [vmem:[%s4 + $0x10] sm:$0xf]
  %v314 = vld [vmem:[%s4 + $0x14] sm:$0xf]
  %v315 = vld [vmem:[%s4 + $0x18] sm:$0xf]
  %v316 = vld [vmem:[%s4 + $0x1c] sm:$0xf]
  %v317 = vld [vmem:[%s4 + $0x20] sm:$0xf]
  %v318 = vld [vmem:[%s4 + $0x24] sm:$0xf]
  %v319 = vld [vmem:[%s4 + $0x28] sm:$0xf]
  %v320 = vld [vmem:[%s4 + $0x2c] sm:$0xf]
  %v321 = vld [vmem:[%s4 + $0x30] sm:$0xf]
  %v322 = vld [vmem:[%s4 + $0x34] sm:$0xf]
  %v323 = vld [vmem:[%s4 + $0x38] sm:$0xf]
  %v324 = vld [vmem:[%s4 + $0x3c] sm:$0xf]
  %v325 = vld [vmem:[%s4 + $0x40] sm:$0xf]
  %v326 = vld [vmem:[%s4 + $0x44] sm:$0xf]
  %v327 = vld [vmem:[%s4 + $0x48] sm:$0xf]
  %v328 = vld [vmem:[%s4 + $0x4c] sm:$0xf]
  %v329 = vld [vmem:[%s4 + $0x50] sm:$0xf]
  %v330 = vld [vmem:[%s4 + $0x54] sm:$0xf]
  %v331 = vld [vmem:[%s4 + $0x58] sm:$0xf]
  %v332 = vld [vmem:[%s4 + $0x5c] sm:$0xf]
  %v333 = vld [vmem:[%s4 + $0x60] sm:$0xf]
  %v334 = vld [vmem:[%s4 + $0x64] sm:$0xf]
  %v335 = vld [vmem:[%s4 + $0x68] sm:$0xf]
  %v336 = vld [vmem:[%s4 + $0x6c] sm:$0xf]
  %v337 = vld [vmem:[%s4 + $0x70] sm:$0xf]
  %v338 = vld [vmem:[%s4 + $0x74] sm:$0xf]
  %v339 = vld [vmem:[%s4 + $0x78] sm:$0xf]
  %v340 = vld [vmem:[%s4 + $0x7c] sm:$0xf]
  %v341 = vld [vmem:[%s4 + $0x80] sm:$0xf]
  %v342 = vld [vmem:[%s4 + $0x84] sm:$0xf]
  %v343 = vld [vmem:[%s4 + $0x88] sm:$0xf]
  %v344 = vld [vmem:[%s4 + $0x8c] sm:$0xf]
  %v345 = vld [vmem:[%s5] sm:$0x1]
  %v347 = vperm.slane %v345, 0
  %v357 = vunpack.c.l.b16 %v301
  %v358 = vunpack.c.h.b16 %v301
  %v359 = vunpack.c.l.b16 %v302
  %v360 = vunpack.c.l.b16 %v303
  %v361 = vunpack.c.h.b16 %v303
  %v362 = vunpack.c.l.b16 %v304
  %v363 = vunpack.c.l.b16 %v305
  %v364 = vunpack.c.h.b16 %v305
  %v365 = vunpack.c.l.b16 %v306
  %v366 = vunpack.c.l.b16 %v307
  %v367 = vunpack.c.h.b16 %v307
  %v368 = vunpack.c.l.b16 %v308
  %v369 = vpack.c.b16 %v360, %v357
  %v370 = vpack.c.b16 %v361, %v358
  %v371 = vpack.c.b16 %v362, %v359
  %v372 = vpack.c.b16 %v366, %v363
  %v373 = vpack.c.b16 %v367, %v364
  %v374 = vpack.c.b16 %v368, %v365
  %v415 = vunpack.c.l.b16 %v309
  %v416 = vunpack.c.l.b16 %v310
  %v417 = vunpack.c.l.b16 %v311
  %v418 = vunpack.c.l.b16 %v312
  %v419 = vunpack.c.l.b16 %v313
  %v420 = vunpack.c.l.b16 %v314
  %v421 = vunpack.c.l.b16 %v315
  %v422 = vunpack.c.l.b16 %v316
  %v423 = vunpack.c.l.b16 %v317
  %v424 = vunpack.c.l.b16 %v318
  %v425 = vunpack.c.l.b16 %v319
  %v426 = vunpack.c.l.b16 %v320
  %v427 = vunpack.c.l.b16 %v321
  %v428 = vunpack.c.l.b16 %v322
  %v429 = vunpack.c.l.b16 %v323
  %v430 = vunpack.c.l.b16 %v324
  %v431 = vunpack.c.l.b16 %v325
  %v432 = vunpack.c.l.b16 %v326
  %v433 = vunpack.c.l.b16 %v327
  %v434 = vunpack.c.l.b16 %v328
  %v435 = vunpack.c.l.b16 %v329
  %v436 = vunpack.c.l.b16 %v330
  %v437 = vunpack.c.l.b16 %v331
  %v438 = vunpack.c.l.b16 %v332
  %v439 = vunpack.c.l.b16 %v333
  %v440 = vunpack.c.l.b16 %v334
  %v441 = vunpack.c.l.b16 %v335
  %v442 = vunpack.c.l.b16 %v336
  %v443 = vunpack.c.l.b16 %v337
  %v444 = vunpack.c.l.b16 %v338
  %v445 = vunpack.c.l.b16 %v339
  %v446 = vunpack.c.l.b16 %v340
  %v447 = vunpack.c.l.b16 %v341
  %v448 = vunpack.c.l.b16 %v342
  %v449 = vunpack.c.l.b16 %v343
  %v450 = vunpack.c.l.b16 %v344
  %v451 = vpack.c.b16 %v416, %v415
  %v452 = vpack.c.b16 %v418, %v417
  %v453 = vpack.c.b16 %v420, %v419
  %v454 = vpack.c.b16 %v422, %v421
  %v455 = vpack.c.b16 %v424, %v423
  %v456 = vpack.c.b16 %v426, %v425
  %v457 = vpack.c.b16 %v428, %v427
  %v458 = vpack.c.b16 %v430, %v429
  %v459 = vpack.c.b16 %v432, %v431
  %v460 = vpack.c.b16 %v434, %v433
  %v461 = vpack.c.b16 %v436, %v435
  %v462 = vpack.c.b16 %v438, %v437
  %v463 = vpack.c.b16 %v440, %v439
  %v464 = vpack.c.b16 %v442, %v441
  %v465 = vpack.c.b16 %v444, %v443
  %v466 = vpack.c.b16 %v446, %v445
  %v467 = vpack.c.b16 %v448, %v447
  %v468 = vpack.c.b16 %v450, %v449
  %v488 = vsel %vm237, %v371, 0
  %v491 = vsel %vm237, %v374, 0
  %493 = vmatpush.bf16.msra.mxu0 %v458
  %494 = vmatpush.bf16.msra.mxu0 %v457
  %495 = vmatpush.bf16.msra.mxu0 %v456
  %496 = vmatpush.bf16.msra.mxu0 %v455
  %497 = vmatpush.bf16.msra.mxu0 %v454
  %498 = vmatpush.bf16.msra.mxu0 %v453
  %499 = vmatpush.bf16.msra.mxu0 %v452
  %500 = vmatpush.bf16.msra.mxu0 %v451
  %501 = vmatmul.bf16.gmra.mxu0 %v369
  %v502 = vpop.f32.mrf.mxu0
  %v503 = vadd.f32 %v347, %v502
  %v504 = vpop.f32.mrf.mxu0
  %v505 = vadd.f32 %v347, %v504
  %506 = vmatmul.bf16.gmra.mxu0 %v372
  %v507 = vpop.f32.mrf.mxu0
  %v508 = vadd.f32 %v347, %v507
  %v509 = vpop.f32.mrf.mxu0
  %v510 = vadd.f32 %v347, %v509
  %511 = vdwg.mxu0
  %512 = vmatpush.bf16.msra.mxu0 %v466
  %513 = vmatpush.bf16.msra.mxu0 %v465
  %514 = vmatpush.bf16.msra.mxu0 %v464
  %515 = vmatpush.bf16.msra.mxu0 %v463
  %516 = vmatpush.bf16.msra.mxu0 %v462
  %517 = vmatpush.bf16.msra.mxu0 %v461
  %518 = vmatpush.bf16.msra.mxu0 %v460
  %519 = vmatpush.bf16.msra.mxu0 %v459
  %520 = vmatmul.bf16.gmra.mxu0 %v370
  %v521 = vpop.f32.mrf.mxu0
  %v522 = vadd.f32 %v503, %v521
  %v523 = vpop.f32.mrf.mxu0
  %v524 = vadd.f32 %v505, %v523
  %525 = vmatmul.bf16.gmra.mxu0 %v373
  %v526 = vpop.f32.mrf.mxu0
  %v527 = vadd.f32 %v508, %v526
  %v528 = vpop.f32.mrf.mxu0
  %v529 = vadd.f32 %v510, %v528
  %530 = vdwg.mxu0
  %531 = vmatpush.bf16.msra.mxu0 0
  %532 = vmatpush.bf16.msra.mxu0 0
  %533 = vmatpush.bf16.msra.mxu0 0
  %534 = vmatpush.bf16.msra.mxu0 0
  %535 = vmatpush.bf16.msra.mxu0 0
  %536 = vmatpush.bf16.msra.mxu0 0
  %537 = vmatpush.bf16.msra.mxu0 %v468
  %538 = vmatpush.bf16.msra.mxu0 %v467
  %539 = vmatmul.bf16.gmra.mxu0 %v488
  %v540 = vpop.f32.mrf.mxu0
  %v541 = vadd.f32 %v522, %v540
  %v542 = vpop.f32.mrf.mxu0
  %v543 = vadd.f32 %v524, %v542
  %544 = vmatmul.bf16.gmra.mxu0 %v491
  %v545 = vpop.f32.mrf.mxu0
  %v546 = vadd.f32 %v527, %v545
  %v547 = vpop.f32.mrf.mxu0
  %v548 = vadd.f32 %v529, %v547
  %549 = vdwg.mxu0
  %v550 = vld [vmem:[%s6] sm:$0xff]
  %v551 = vld [vmem:[%s6 + $0x8] sm:$0xff]
  %v552 = vld [vmem:[%s7] sm:$0xff]
  %v553 = vld [vmem:[%s7 + $0x8] sm:$0xff]
  %v554 = vld [vmem:[%s8] sm:$0xff]
  %v555 = vld [vmem:[%s8 + $0x8] sm:$0xff]
  %v556 = vld [vmem:[%s9] sm:$0xff]
  %v557 = vld [vmem:[%s9 + $0x8] sm:$0xff]
  %v558 = vld [vmem:[%s10] sm:$0xff]
  %v559 = vld [vmem:[%s10 + $0x8] sm:$0xff]
  %v560 = vld [vmem:[%s11] sm:$0xff]
  %v561 = vld [vmem:[%s11 + $0x8] sm:$0xff]
  %v562 = vsel %vm237, %v292, 0.0
  %v563 = vsel %vm237, %v294, 0.0
  %v564 = vadd.f32 %v562, %v563
  %565 = vadd.xlane.f32.xlu0 %v564
  %v566 = vpop.xlane.xlu0 %565
  %v567 = vrot.slane %v566, 4
  %v568 = vadd.f32 %v566, %v567
  %v569 = vrot.slane %v568, 2
  %v570 = vadd.f32 %v568, %v569
  %v571 = vrot.slane %v570, 1
  %v572 = vadd.f32 %v570, %v571
  %s573 = vtos %v572
  %v574 = vstv %s573
  %v575 = vrcp.pop 512.0
  %v576 = vmul.f32 512.0, %v575
  %v577 = vsub.f32 1.0, %v576
  %v578 = vmul.f32 %v575, %v577
  %v579 = vadd.f32 %v575, %v578
  %vm580 = vweird.f32 %v575
  %v581 = vsel %vm580, %v575, %v579
  %v582 = vmul.f32 %v574, %v581
  %v583 = vsub.f32 %v292, %v582
  %v584 = vsub.f32 %v294, %v582
  %v585 = vmul.f32 %v583, %v583
  %v586 = vmul.f32 %v584, %v584
  %v587 = vsel %vm237, %v585, 0.0
  %v588 = vsel %vm237, %v586, 0.0
  %v589 = vadd.f32 %v587, %v588
  %590 = vadd.xlane.f32.xlu0 %v589
  %v591 = vpop.xlane.xlu0 %590
  %v592 = vrot.slane %v591, 4
  %v593 = vadd.f32 %v591, %v592
  %v594 = vrot.slane %v593, 2
  %v595 = vadd.f32 %v593, %v594
  %v596 = vrot.slane %v595, 1
  %v597 = vadd.f32 %v595, %v596
  %s598 = vtos %v597
  %v599 = vstv %s598
  %v600 = vmul.f32 %v599, %v581
  %v601 = vadd.f32 %v600, 1e-05
  %v602 = vrsqrt.pop %v601
  %v603 = vmul.f32 %v602, %v601
  %v604 = vmul.f32 %v603, %v602
  %v605 = vmul.f32 0.5, %v604
  %v606 = vsub.f32 1.5, %v605
  %v607 = vmul.f32 %v602, %v606
  %vm608 = vweird.f32 %v601
  %vm609 = vweird.f32 %v602
  %vm610 = vmor %vm608, %vm609
  %v611 = vsel %vm610, %v602, %v607
  %v612 = vmul.f32 %v583, %v611
  %v613 = vmul.f32 %v584, %v611
  %v614 = vmul.f32 %v612, %v550
  %v615 = vmul.f32 %v613, %v551
  %v616 = vadd.f32 %v614, %v552
  %v617 = vadd.f32 %v615, %v553
  %620 = vrot.lane.b32.xlu0 %v292, 96
  %v621 = vpop.permute.xlu0 %620
  %622 = vrot.lane.b32.xlu0 %v294, 96
  %v623 = vpop.permute.xlu0 %622
  %vm626 = vcmask 785408
  %v627 = vsel %vm626, %v621, 0.0
  %v628 = vsel %vm626, %v623, 0.0
  %v629 = vadd.f32 %v627, %v628
  %630 = vadd.xlane.f32.xlu0 %v629
  %v631 = vpop.xlane.xlu0 %630
  %v632 = vrot.slane %v631, 4
  %v633 = vadd.f32 %v631, %v632
  %v634 = vrot.slane %v633, 2
  %v635 = vadd.f32 %v633, %v634
  %v636 = vrot.slane %v635, 1
  %v637 = vadd.f32 %v635, %v636
  %s638 = vtos %v637
  %v639 = vstv %s638
  %v640 = vrcp.pop 1536.0
  %v641 = vmul.f32 1536.0, %v640
  %v642 = vsub.f32 1.0, %v641
  %v643 = vmul.f32 %v640, %v642
  %v644 = vadd.f32 %v640, %v643
  %vm645 = vweird.f32 %v640
  %v646 = vsel %vm645, %v640, %v644
  %v647 = vmul.f32 %v639, %v646
  %v648 = vsub.f32 %v292, %v647
  %v649 = vsub.f32 %v294, %v647
  %v650 = vmul.f32 %v648, %v648
  %v651 = vmul.f32 %v649, %v649
  %654 = vrot.lane.b32.xlu0 %v650, 96
  %v655 = vpop.permute.xlu0 %654
  %656 = vrot.lane.b32.xlu0 %v651, 96
  %v657 = vpop.permute.xlu0 %656
  %v660 = vsel %vm626, %v655, 0.0
  %v661 = vsel %vm626, %v657, 0.0
  %v662 = vadd.f32 %v660, %v661
  %663 = vadd.xlane.f32.xlu0 %v662
  %v664 = vpop.xlane.xlu0 %663
  %v665 = vrot.slane %v664, 4
  %v666 = vadd.f32 %v664, %v665
  %v667 = vrot.slane %v666, 2
  %v668 = vadd.f32 %v666, %v667
  %v669 = vrot.slane %v668, 1
  %v670 = vadd.f32 %v668, %v669
  %s671 = vtos %v670
  %v672 = vstv %s671
  %v673 = vmul.f32 %v672, %v646
  %v674 = vadd.f32 %v673, 1e-05
  %v675 = vrsqrt.pop %v674
  %v676 = vmul.f32 %v675, %v674
  %v677 = vmul.f32 %v676, %v675
  %v678 = vmul.f32 0.5, %v677
  %v679 = vsub.f32 1.5, %v678
  %v680 = vmul.f32 %v675, %v679
  %vm681 = vweird.f32 %v674
  %vm682 = vweird.f32 %v675
  %vm683 = vmor %vm681, %vm682
  %v684 = vsel %vm683, %v675, %v680
  %v685 = vmul.f32 %v648, %v684
  %v686 = vmul.f32 %v649, %v684
  %689 = vrot.lane.b32.xlu0 %v554, 32
  %v690 = vpop.permute.xlu0 %689
  %691 = vrot.lane.b32.xlu0 %v555, 32
  %v692 = vpop.permute.xlu0 %691
  %v695 = vmul.f32 %v685, %v690
  %v696 = vmul.f32 %v686, %v692
  %699 = vrot.lane.b32.xlu0 %v556, 32
  %v700 = vpop.permute.xlu0 %699
  %701 = vrot.lane.b32.xlu0 %v557, 32
  %v702 = vpop.permute.xlu0 %701
  %v705 = vadd.f32 %v695, %v700
  %v706 = vadd.f32 %v696, %v702
  %v707 = vsel %vm237, %v541, 0.0
  %v708 = vsel %vm237, %v543, 0.0
  %v709 = vadd.f32 %v707, %v708
  %710 = vadd.xlane.f32.xlu0 %v709
  %v711 = vpop.xlane.xlu0 %710
  %v712 = vrot.slane %v711, 4
  %v713 = vadd.f32 %v711, %v712
  %v714 = vrot.slane %v713, 2
  %v715 = vadd.f32 %v713, %v714
  %v716 = vrot.slane %v715, 1
  %v717 = vadd.f32 %v715, %v716
  %s718 = vtos %v717
  %v719 = vstv %s718
  %v720 = vmul.f32 %v719, %v581
  %v721 = vsub.f32 %v541, %v720
  %v722 = vsub.f32 %v543, %v720
  %v723 = vmul.f32 %v721, %v721
  %v724 = vmul.f32 %v722, %v722
  %v725 = vsel %vm237, %v723, 0.0
  %v726 = vsel %vm237, %v724, 0.0
  %v727 = vadd.f32 %v725, %v726
  %728 = vadd.xlane.f32.xlu0 %v727
  %v729 = vpop.xlane.xlu0 %728
  %v730 = vrot.slane %v729, 4
  %v731 = vadd.f32 %v729, %v730
  %v732 = vrot.slane %v731, 2
  %v733 = vadd.f32 %v731, %v732
  %v734 = vrot.slane %v733, 1
  %v735 = vadd.f32 %v733, %v734
  %s736 = vtos %v735
  %v737 = vstv %s736
  %v738 = vmul.f32 %v737, %v581
  %v739 = vadd.f32 %v738, 1e-05
  %v740 = vrsqrt.pop %v739
  %v741 = vmul.f32 %v740, %v739
  %v742 = vmul.f32 %v741, %v740
  %v743 = vmul.f32 0.5, %v742
  %v744 = vsub.f32 1.5, %v743
  %v745 = vmul.f32 %v740, %v744
  %vm746 = vweird.f32 %v739
  %vm747 = vweird.f32 %v740
  %vm748 = vmor %vm746, %vm747
  %v749 = vsel %vm748, %v740, %v745
  %v750 = vmul.f32 %v721, %v749
  %v751 = vmul.f32 %v722, %v749
  %v752 = vmul.f32 %v750, %v558
  %v753 = vmul.f32 %v751, %v559
  %v754 = vadd.f32 %v752, %v560
  %v755 = vadd.f32 %v753, %v561
  %v756 = vld [vmem:[%s12] sm:$0xff]
  %v757 = vld [vmem:[%s12 + $0x8] sm:$0xff]
  %v758 = vmul.f32 %v756, %v616
  %v759 = vmul.f32 %v757, %v617
  %v760 = vsel %vm237, %v758, 0.0
  %v761 = vsel %vm237, %v759, 0.0
  %v762 = vadd.f32 %v760, %v761
  %763 = vadd.xlane.f32.xlu0 %v762
  %v764 = vpop.xlane.xlu0 %763
  %v765 = vrot.slane %v764, 4
  %v766 = vadd.f32 %v764, %v765
  %v767 = vrot.slane %v766, 2
  %v768 = vadd.f32 %v766, %v767
  %v769 = vrot.slane %v768, 1
  %v770 = vadd.f32 %v768, %v769
  %s771 = vtos %v770
  %v772 = vstv %s771
  %v773 = vmul.f32 %v772, 0.044194173
  %s774 = scalar_lea.vmem %s12, 32
  %v775 = vld [vmem:[%s774] sm:$0xff]
  %v776 = vld [vmem:[%s774 + $0x8] sm:$0xff]
  %v777 = vmul.f32 %v775, %v616
  %v778 = vmul.f32 %v776, %v617
  %v779 = vsel %vm237, %v777, 0.0
  %v780 = vsel %vm237, %v778, 0.0
  %v781 = vadd.f32 %v779, %v780
  %782 = vadd.xlane.f32.xlu0 %v781
  %v783 = vpop.xlane.xlu0 %782
  %v784 = vrot.slane %v783, 4
  %v785 = vadd.f32 %v783, %v784
  %v786 = vrot.slane %v785, 2
  %v787 = vadd.f32 %v785, %v786
  %v788 = vrot.slane %v787, 1
  %v789 = vadd.f32 %v787, %v788
  %s790 = vtos %v789
  %v791 = vstv %s790
  %v792 = vmul.f32 %v791, 0.044194173
  %s793 = scalar_lea.vmem %s12, 64
  %v794 = vld [vmem:[%s793] sm:$0xff]
  %v795 = vld [vmem:[%s793 + $0x8] sm:$0xff]
  %v796 = vmul.f32 %v794, %v616
  %v797 = vmul.f32 %v795, %v617
  %v798 = vsel %vm237, %v796, 0.0
  %v799 = vsel %vm237, %v797, 0.0
  %v800 = vadd.f32 %v798, %v799
  %801 = vadd.xlane.f32.xlu0 %v800
  %v802 = vpop.xlane.xlu0 %801
  %v803 = vrot.slane %v802, 4
  %v804 = vadd.f32 %v802, %v803
  %v805 = vrot.slane %v804, 2
  %v806 = vadd.f32 %v804, %v805
  %v807 = vrot.slane %v806, 1
  %v808 = vadd.f32 %v806, %v807
  %s809 = vtos %v808
  %v810 = vstv %s809
  %v811 = vmul.f32 %v810, 0.044194173
  %s812 = scalar_lea.vmem %s12, 96
  %v813 = vld [vmem:[%s812] sm:$0xff]
  %v814 = vld [vmem:[%s812 + $0x8] sm:$0xff]
  %v815 = vmul.f32 %v813, %v616
  %v816 = vmul.f32 %v814, %v617
  %v817 = vsel %vm237, %v815, 0.0
  %v818 = vsel %vm237, %v816, 0.0
  %v819 = vadd.f32 %v817, %v818
  %820 = vadd.xlane.f32.xlu0 %v819
  %v821 = vpop.xlane.xlu0 %820
  %v822 = vrot.slane %v821, 4
  %v823 = vadd.f32 %v821, %v822
  %v824 = vrot.slane %v823, 2
  %v825 = vadd.f32 %v823, %v824
  %v826 = vrot.slane %v825, 1
  %v827 = vadd.f32 %v825, %v826
  %s828 = vtos %v827
  %v829 = vstv %s828
  %v830 = vmul.f32 %v829, 0.044194173
  %vm831 = vcmask 7168
  %v832 = vsel %vm831, %v773, %v792
  %vm833 = vcmask 15360
  %v834 = vsel %vm833, %v832, %v811
  %vm835 = vcmask 23552
  %v836 = vsel %vm835, %v834, %v830
  %vm837 = vcmask 24576
  %v838 = vsel %vm837, %v836, -inf
  %839 = vmax.xlane.f32.xlu0 %v838
  %v840 = vpop.xlane.xlu0 %839
  %v841 = vsub.f32 %v836, %v840
  %v842 = vmul.f32 %v841, 1.442695
  %v843 = vpow.pop %v842
  %v844 = vsel %vm837, %v843, 0.0
  %845 = vadd.xlane.f32.xlu0 %v844
  %v846 = vpop.xlane.xlu0 %845
  %v847 = vrcp.pop %v846
  %v848 = vmul.f32 %v843, %v847
  %v849 = vld [vmem:[%s13] sm:$0xff]
  %v850 = vld [vmem:[%s13 + $0x8] sm:$0xff]
  %s852 = vtos %v848
  %v853 = vstv %s852
  %v855 = vmul.f32 %v849, %v853
  %v856 = vmul.f32 %v850, %v853
  %v857 = vadd.f32 %v855, 0.0
  %v858 = vadd.f32 %v856, 0.0
  %s859 = scalar_lea.vmem %s13, 32
  %v860 = vld [vmem:[%s859] sm:$0xff]
  %v861 = vld [vmem:[%s859 + $0x8] sm:$0xff]
  %862 = vrot.lane.b32.xlu0 %v848, 127
  %v863 = vpop.permute.xlu0 %862
  %s864 = vtos %v863
  %v865 = vstv %s864
  %v867 = vmul.f32 %v860, %v865
  %v868 = vmul.f32 %v861, %v865
  %v869 = vadd.f32 %v857, %v867
  %v870 = vadd.f32 %v858, %v868
  %s871 = scalar_lea.vmem %s13, 64
  %v872 = vld [vmem:[%s871] sm:$0xff]
  %v873 = vld [vmem:[%s871 + $0x8] sm:$0xff]
  %874 = vrot.lane.b32.xlu0 %v848, 126
  %v875 = vpop.permute.xlu0 %874
  %s876 = vtos %v875
  %v877 = vstv %s876
  %v879 = vmul.f32 %v872, %v877
  %v880 = vmul.f32 %v873, %v877
  %v881 = vadd.f32 %v869, %v879
  %v882 = vadd.f32 %v870, %v880
  %s883 = scalar_lea.vmem %s13, 96
  %v884 = vld [vmem:[%s883] sm:$0xff]
  %v885 = vld [vmem:[%s883 + $0x8] sm:$0xff]
  %886 = vrot.lane.b32.xlu0 %v848, 125
  %v887 = vpop.permute.xlu0 %886
  %s888 = vtos %v887
  %v889 = vstv %s888
  %v891 = vmul.f32 %v884, %v889
  %v892 = vmul.f32 %v885, %v889
  %v893 = vadd.f32 %v881, %v891
  %v894 = vadd.f32 %v882, %v892
  %v895 = vxor.u32 %v754, 2147483648
  %v896 = vxor.u32 %v755, 2147483648
  %v897 = vmul.f32 %v895, 1.442695
  %v898 = vpow.pop %v897
  %v899 = vmul.f32 %v896, 1.442695
  %v900 = vpow.pop %v899
  %v901 = vadd.f32 %v898, 1.0
  %v902 = vadd.f32 %v900, 1.0
  %v903 = vrcp.pop %v901
  %v904 = vmul.f32 %v901, %v903
  %v905 = vsub.f32 1.0, %v904
  %v906 = vmul.f32 %v903, %v905
  %v907 = vadd.f32 %v903, %v906
  %vm908 = vweird.f32 %v901
  %vm909 = vweird.f32 %v903
  %vm910 = vmor %vm908, %vm909
  %v911 = vsel %vm910, %v903, %v907
  %v912 = vand.u32 2147483647, %v901
  %vm913 = vcmp.eq.f32.partialorder %v912, 8.507059e+37
  %v914 = vand.u32 %v901, 2147483648
  %v915 = vor.u32 1.1754944e-38, %v914
  %v916 = vsel %vm913, %v915, %v911
  %v917 = vmul.f32 1.0, %v916
  %v918 = vrcp.pop %v902
  %v919 = vmul.f32 %v902, %v918
  %v920 = vsub.f32 1.0, %v919
  %v921 = vmul.f32 %v918, %v920
  %v922 = vadd.f32 %v918, %v921
  %vm923 = vweird.f32 %v902
  %vm924 = vweird.f32 %v918
  %vm925 = vmor %vm923, %vm924
  %v926 = vsel %vm925, %v918, %v922
  %v927 = vand.u32 2147483647, %v902
  %vm928 = vcmp.eq.f32.partialorder %v927, 8.507059e+37
  %v929 = vand.u32 %v902, 2147483648
  %v930 = vor.u32 1.1754944e-38, %v929
  %v931 = vsel %vm928, %v930, %v926
  %v932 = vmul.f32 1.0, %v931
  %v933 = vld [vmem:[%s14] sm:$0xff]
  %v934 = vld [vmem:[%s14 + $0x8] sm:$0xff]
  %v935 = vmul.f32 %v933, %v917
  %v936 = vmul.f32 %v934, %v932
  %v937 = vsub.f32 1.0, %v917
  %v938 = vsub.f32 1.0, %v932
  %v939 = vmul.f32 %v937, %v893
  %v940 = vmul.f32 %v938, %v894
  %v941 = vadd.f32 %v935, %v939
  %v942 = vadd.f32 %v936, %v940
  %v943 = vsel %vm237, %v941, %v705
  %v944 = vsel %vm237, %v942, %v706
  %945 = vst [vmem:[%s15] sm:$0xff] %v943
  %946 = vst [vmem:[%s15 + $0x8] sm:$0xff] %v944
  %v947 = vsel %vm237, %v297, 0.0
  %v948 = vsel %vm237, %v299, 0.0
  %v949 = vadd.f32 %v947, %v948
  %950 = vadd.xlane.f32.xlu0 %v949
  %v951 = vpop.xlane.xlu0 %950
  %v952 = vrot.slane %v951, 4
  %v953 = vadd.f32 %v951, %v952
  %v954 = vrot.slane %v953, 2
  %v955 = vadd.f32 %v953, %v954
  %v956 = vrot.slane %v955, 1
  %v957 = vadd.f32 %v955, %v956
  %s958 = vtos %v957
  %v959 = vstv %s958
  %v960 = vmul.f32 %v959, %v581
  %v961 = vsub.f32 %v297, %v960
  %v962 = vsub.f32 %v299, %v960
  %v963 = vmul.f32 %v961, %v961
  %v964 = vmul.f32 %v962, %v962
  %v965 = vsel %vm237, %v963, 0.0
  %v966 = vsel %vm237, %v964, 0.0
  %v967 = vadd.f32 %v965, %v966
  %968 = vadd.xlane.f32.xlu0 %v967
  %v969 = vpop.xlane.xlu0 %968
  %v970 = vrot.slane %v969, 4
  %v971 = vadd.f32 %v969, %v970
  %v972 = vrot.slane %v971, 2
  %v973 = vadd.f32 %v971, %v972
  %v974 = vrot.slane %v973, 1
  %v975 = vadd.f32 %v973, %v974
  %s976 = vtos %v975
  %v977 = vstv %s976
  %v978 = vmul.f32 %v977, %v581
  %v979 = vadd.f32 %v978, 1e-05
  %v980 = vrsqrt.pop %v979
  %v981 = vmul.f32 %v980, %v979
  %v982 = vmul.f32 %v981, %v980
  %v983 = vmul.f32 0.5, %v982
  %v984 = vsub.f32 1.5, %v983
  %v985 = vmul.f32 %v980, %v984
  %vm986 = vweird.f32 %v979
  %vm987 = vweird.f32 %v980
  %vm988 = vmor %vm986, %vm987
  %v989 = vsel %vm988, %v980, %v985
  %v990 = vmul.f32 %v961, %v989
  %v991 = vmul.f32 %v962, %v989
  %v992 = vmul.f32 %v990, %v550
  %v993 = vmul.f32 %v991, %v551
  %v994 = vadd.f32 %v992, %v552
  %v995 = vadd.f32 %v993, %v553
  %998 = vrot.lane.b32.xlu0 %v297, 96
  %v999 = vpop.permute.xlu0 %998
  %1000 = vrot.lane.b32.xlu0 %v299, 96
  %v1001 = vpop.permute.xlu0 %1000
  %v1004 = vsel %vm626, %v999, 0.0
  %v1005 = vsel %vm626, %v1001, 0.0
  %v1006 = vadd.f32 %v1004, %v1005
  %1007 = vadd.xlane.f32.xlu0 %v1006
  %v1008 = vpop.xlane.xlu0 %1007
  %v1009 = vrot.slane %v1008, 4
  %v1010 = vadd.f32 %v1008, %v1009
  %v1011 = vrot.slane %v1010, 2
  %v1012 = vadd.f32 %v1010, %v1011
  %v1013 = vrot.slane %v1012, 1
  %v1014 = vadd.f32 %v1012, %v1013
  %s1015 = vtos %v1014
  %v1016 = vstv %s1015
  %v1017 = vmul.f32 %v1016, %v646
  %v1018 = vsub.f32 %v297, %v1017
  %v1019 = vsub.f32 %v299, %v1017
  %v1020 = vmul.f32 %v1018, %v1018
  %v1021 = vmul.f32 %v1019, %v1019
  %1024 = vrot.lane.b32.xlu0 %v1020, 96
  %v1025 = vpop.permute.xlu0 %1024
  %1026 = vrot.lane.b32.xlu0 %v1021, 96
  %v1027 = vpop.permute.xlu0 %1026
  %v1030 = vsel %vm626, %v1025, 0.0
  %v1031 = vsel %vm626, %v1027, 0.0
  %v1032 = vadd.f32 %v1030, %v1031
  %1033 = vadd.xlane.f32.xlu0 %v1032
  %v1034 = vpop.xlane.xlu0 %1033
  %v1035 = vrot.slane %v1034, 4
  %v1036 = vadd.f32 %v1034, %v1035
  %v1037 = vrot.slane %v1036, 2
  %v1038 = vadd.f32 %v1036, %v1037
  %v1039 = vrot.slane %v1038, 1
  %v1040 = vadd.f32 %v1038, %v1039
  %s1041 = vtos %v1040
  %v1042 = vstv %s1041
  %v1043 = vmul.f32 %v1042, %v646
  %v1044 = vadd.f32 %v1043, 1e-05
  %v1045 = vrsqrt.pop %v1044
  %v1046 = vmul.f32 %v1045, %v1044
  %v1047 = vmul.f32 %v1046, %v1045
  %v1048 = vmul.f32 0.5, %v1047
  %v1049 = vsub.f32 1.5, %v1048
  %v1050 = vmul.f32 %v1045, %v1049
  %vm1051 = vweird.f32 %v1044
  %vm1052 = vweird.f32 %v1045
  %vm1053 = vmor %vm1051, %vm1052
  %v1054 = vsel %vm1053, %v1045, %v1050
  %v1055 = vmul.f32 %v1018, %v1054
  %v1056 = vmul.f32 %v1019, %v1054
  %v1057 = vmul.f32 %v1055, %v690
  %v1058 = vmul.f32 %v1056, %v692
  %v1059 = vadd.f32 %v1057, %v700
  %v1060 = vadd.f32 %v1058, %v702
  %v1061 = vsel %vm237, %v546, 0.0
  %v1062 = vsel %vm237, %v548, 0.0
  %v1063 = vadd.f32 %v1061, %v1062
  %1064 = vadd.xlane.f32.xlu0 %v1063
  %v1065 = vpop.xlane.xlu0 %1064
  %v1066 = vrot.slane %v1065, 4
  %v1067 = vadd.f32 %v1065, %v1066
  %v1068 = vrot.slane %v1067, 2
  %v1069 = vadd.f32 %v1067, %v1068
  %v1070 = vrot.slane %v1069, 1
  %v1071 = vadd.f32 %v1069, %v1070
  %s1072 = vtos %v1071
  %v1073 = vstv %s1072
  %v1074 = vmul.f32 %v1073, %v581
  %v1075 = vsub.f32 %v546, %v1074
  %v1076 = vsub.f32 %v548, %v1074
  %v1077 = vmul.f32 %v1075, %v1075
  %v1078 = vmul.f32 %v1076, %v1076
  %v1079 = vsel %vm237, %v1077, 0.0
  %v1080 = vsel %vm237, %v1078, 0.0
  %v1081 = vadd.f32 %v1079, %v1080
  %1082 = vadd.xlane.f32.xlu0 %v1081
  %v1083 = vpop.xlane.xlu0 %1082
  %v1084 = vrot.slane %v1083, 4
  %v1085 = vadd.f32 %v1083, %v1084
  %v1086 = vrot.slane %v1085, 2
  %v1087 = vadd.f32 %v1085, %v1086
  %v1088 = vrot.slane %v1087, 1
  %v1089 = vadd.f32 %v1087, %v1088
  %s1090 = vtos %v1089
  %v1091 = vstv %s1090
  %v1092 = vmul.f32 %v1091, %v581
  %v1093 = vadd.f32 %v1092, 1e-05
  %v1094 = vrsqrt.pop %v1093
  %v1095 = vmul.f32 %v1094, %v1093
  %v1096 = vmul.f32 %v1095, %v1094
  %v1097 = vmul.f32 0.5, %v1096
  %v1098 = vsub.f32 1.5, %v1097
  %v1099 = vmul.f32 %v1094, %v1098
  %vm1100 = vweird.f32 %v1093
  %vm1101 = vweird.f32 %v1094
  %vm1102 = vmor %vm1100, %vm1101
  %v1103 = vsel %vm1102, %v1094, %v1099
  %v1104 = vmul.f32 %v1075, %v1103
  %v1105 = vmul.f32 %v1076, %v1103
  %v1106 = vmul.f32 %v1104, %v558
  %v1107 = vmul.f32 %v1105, %v559
  %v1108 = vadd.f32 %v1106, %v560
  %v1109 = vadd.f32 %v1107, %v561
  %s1110 = scalar_lea.vmem %s12, 16
  %v1111 = vld [vmem:[%s1110] sm:$0xff]
  %v1112 = vld [vmem:[%s1110 + $0x8] sm:$0xff]
  %v1113 = vmul.f32 %v1111, %v994
  %v1114 = vmul.f32 %v1112, %v995
  %v1115 = vsel %vm237, %v1113, 0.0
  %v1116 = vsel %vm237, %v1114, 0.0
  %v1117 = vadd.f32 %v1115, %v1116
  %1118 = vadd.xlane.f32.xlu0 %v1117
  %v1119 = vpop.xlane.xlu0 %1118
  %v1120 = vrot.slane %v1119, 4
  %v1121 = vadd.f32 %v1119, %v1120
  %v1122 = vrot.slane %v1121, 2
  %v1123 = vadd.f32 %v1121, %v1122
  %v1124 = vrot.slane %v1123, 1
  %v1125 = vadd.f32 %v1123, %v1124
  %s1126 = vtos %v1125
  %v1127 = vstv %s1126
  %v1128 = vmul.f32 %v1127, 0.044194173
  %s1129 = scalar_lea.vmem %s12, 48
  %v1130 = vld [vmem:[%s1129] sm:$0xff]
  %v1131 = vld [vmem:[%s1129 + $0x8] sm:$0xff]
  %v1132 = vmul.f32 %v1130, %v994
  %v1133 = vmul.f32 %v1131, %v995
  %v1134 = vsel %vm237, %v1132, 0.0
  %v1135 = vsel %vm237, %v1133, 0.0
  %v1136 = vadd.f32 %v1134, %v1135
  %1137 = vadd.xlane.f32.xlu0 %v1136
  %v1138 = vpop.xlane.xlu0 %1137
  %v1139 = vrot.slane %v1138, 4
  %v1140 = vadd.f32 %v1138, %v1139
  %v1141 = vrot.slane %v1140, 2
  %v1142 = vadd.f32 %v1140, %v1141
  %v1143 = vrot.slane %v1142, 1
  %v1144 = vadd.f32 %v1142, %v1143
  %s1145 = vtos %v1144
  %v1146 = vstv %s1145
  %v1147 = vmul.f32 %v1146, 0.044194173
  %s1148 = scalar_lea.vmem %s12, 80
  %v1149 = vld [vmem:[%s1148] sm:$0xff]
  %v1150 = vld [vmem:[%s1148 + $0x8] sm:$0xff]
  %v1151 = vmul.f32 %v1149, %v994
  %v1152 = vmul.f32 %v1150, %v995
  %v1153 = vsel %vm237, %v1151, 0.0
  %v1154 = vsel %vm237, %v1152, 0.0
  %v1155 = vadd.f32 %v1153, %v1154
  %1156 = vadd.xlane.f32.xlu0 %v1155
  %v1157 = vpop.xlane.xlu0 %1156
  %v1158 = vrot.slane %v1157, 4
  %v1159 = vadd.f32 %v1157, %v1158
  %v1160 = vrot.slane %v1159, 2
  %v1161 = vadd.f32 %v1159, %v1160
  %v1162 = vrot.slane %v1161, 1
  %v1163 = vadd.f32 %v1161, %v1162
  %s1164 = vtos %v1163
  %v1165 = vstv %s1164
  %v1166 = vmul.f32 %v1165, 0.044194173
  %s1167 = scalar_lea.vmem %s12, 112
  %v1168 = vld [vmem:[%s1167] sm:$0xff]
  %v1169 = vld [vmem:[%s1167 + $0x8] sm:$0xff]
  %v1170 = vmul.f32 %v1168, %v994
  %v1171 = vmul.f32 %v1169, %v995
  %v1172 = vsel %vm237, %v1170, 0.0
  %v1173 = vsel %vm237, %v1171, 0.0
  %v1174 = vadd.f32 %v1172, %v1173
  %1175 = vadd.xlane.f32.xlu0 %v1174
  %v1176 = vpop.xlane.xlu0 %1175
  %v1177 = vrot.slane %v1176, 4
  %v1178 = vadd.f32 %v1176, %v1177
  %v1179 = vrot.slane %v1178, 2
  %v1180 = vadd.f32 %v1178, %v1179
  %v1181 = vrot.slane %v1180, 1
  %v1182 = vadd.f32 %v1180, %v1181
  %s1183 = vtos %v1182
  %v1184 = vstv %s1183
  %v1185 = vmul.f32 %v1184, 0.044194173
  %v1186 = vsel %vm831, %v1128, %v1147
  %v1187 = vsel %vm833, %v1186, %v1166
  %v1188 = vsel %vm835, %v1187, %v1185
  %v1189 = vsel %vm837, %v1188, -inf
  %1190 = vmax.xlane.f32.xlu0 %v1189
  %v1191 = vpop.xlane.xlu0 %1190
  %v1192 = vsub.f32 %v1188, %v1191
  %v1193 = vmul.f32 %v1192, 1.442695
  %v1194 = vpow.pop %v1193
  %v1195 = vsel %vm837, %v1194, 0.0
  %1196 = vadd.xlane.f32.xlu0 %v1195
  %v1197 = vpop.xlane.xlu0 %1196
  %v1198 = vrcp.pop %v1197
  %v1199 = vmul.f32 %v1194, %v1198
  %s1200 = scalar_lea.vmem %s13, 16
  %v1201 = vld [vmem:[%s1200] sm:$0xff]
  %v1202 = vld [vmem:[%s1200 + $0x8] sm:$0xff]
  %s1204 = vtos %v1199
  %v1205 = vstv %s1204
  %v1207 = vmul.f32 %v1201, %v1205
  %v1208 = vmul.f32 %v1202, %v1205
  %v1209 = vadd.f32 %v1207, 0.0
  %v1210 = vadd.f32 %v1208, 0.0
  %s1211 = scalar_lea.vmem %s13, 48
  %v1212 = vld [vmem:[%s1211] sm:$0xff]
  %v1213 = vld [vmem:[%s1211 + $0x8] sm:$0xff]
  %1214 = vrot.lane.b32.xlu0 %v1199, 127
  %v1215 = vpop.permute.xlu0 %1214
  %s1216 = vtos %v1215
  %v1217 = vstv %s1216
  %v1219 = vmul.f32 %v1212, %v1217
  %v1220 = vmul.f32 %v1213, %v1217
  %v1221 = vadd.f32 %v1209, %v1219
  %v1222 = vadd.f32 %v1210, %v1220
  %s1223 = scalar_lea.vmem %s13, 80
  %v1224 = vld [vmem:[%s1223] sm:$0xff]
  %v1225 = vld [vmem:[%s1223 + $0x8] sm:$0xff]
  %1226 = vrot.lane.b32.xlu0 %v1199, 126
  %v1227 = vpop.permute.xlu0 %1226
  %s1228 = vtos %v1227
  %v1229 = vstv %s1228
  %v1231 = vmul.f32 %v1224, %v1229
  %v1232 = vmul.f32 %v1225, %v1229
  %v1233 = vadd.f32 %v1221, %v1231
  %v1234 = vadd.f32 %v1222, %v1232
  %s1235 = scalar_lea.vmem %s13, 112
  %v1236 = vld [vmem:[%s1235] sm:$0xff]
  %v1237 = vld [vmem:[%s1235 + $0x8] sm:$0xff]
  %1238 = vrot.lane.b32.xlu0 %v1199, 125
  %v1239 = vpop.permute.xlu0 %1238
  %s1240 = vtos %v1239
  %v1241 = vstv %s1240
  %v1243 = vmul.f32 %v1236, %v1241
  %v1244 = vmul.f32 %v1237, %v1241
  %v1245 = vadd.f32 %v1233, %v1243
  %v1246 = vadd.f32 %v1234, %v1244
  %v1247 = vxor.u32 %v1108, 2147483648
  %v1248 = vxor.u32 %v1109, 2147483648
  %v1249 = vmul.f32 %v1247, 1.442695
  %v1250 = vpow.pop %v1249
  %v1251 = vmul.f32 %v1248, 1.442695
  %v1252 = vpow.pop %v1251
  %v1253 = vadd.f32 %v1250, 1.0
  %v1254 = vadd.f32 %v1252, 1.0
  %v1255 = vrcp.pop %v1253
  %v1256 = vmul.f32 %v1253, %v1255
  %v1257 = vsub.f32 1.0, %v1256
  %v1258 = vmul.f32 %v1255, %v1257
  %v1259 = vadd.f32 %v1255, %v1258
  %vm1260 = vweird.f32 %v1253
  %vm1261 = vweird.f32 %v1255
  %vm1262 = vmor %vm1260, %vm1261
  %v1263 = vsel %vm1262, %v1255, %v1259
  %v1264 = vand.u32 2147483647, %v1253
  %vm1265 = vcmp.eq.f32.partialorder %v1264, 8.507059e+37
  %v1266 = vand.u32 %v1253, 2147483648
  %v1267 = vor.u32 1.1754944e-38, %v1266
  %v1268 = vsel %vm1265, %v1267, %v1263
  %v1269 = vmul.f32 1.0, %v1268
  %v1270 = vrcp.pop %v1254
  %v1271 = vmul.f32 %v1254, %v1270
  %v1272 = vsub.f32 1.0, %v1271
  %v1273 = vmul.f32 %v1270, %v1272
  %v1274 = vadd.f32 %v1270, %v1273
  %vm1275 = vweird.f32 %v1254
  %vm1276 = vweird.f32 %v1270
  %vm1277 = vmor %vm1275, %vm1276
  %v1278 = vsel %vm1277, %v1270, %v1274
  %v1279 = vand.u32 2147483647, %v1254
  %vm1280 = vcmp.eq.f32.partialorder %v1279, 8.507059e+37
  %v1281 = vand.u32 %v1254, 2147483648
  %v1282 = vor.u32 1.1754944e-38, %v1281
  %v1283 = vsel %vm1280, %v1282, %v1278
  %v1284 = vmul.f32 1.0, %v1283
  %s1285 = scalar_lea.vmem %s14, 16
  %v1286 = vld [vmem:[%s1285] sm:$0xff]
  %v1287 = vld [vmem:[%s1285 + $0x8] sm:$0xff]
  %v1288 = vmul.f32 %v1286, %v1269
  %v1289 = vmul.f32 %v1287, %v1284
  %v1290 = vsub.f32 1.0, %v1269
  %v1291 = vsub.f32 1.0, %v1284
  %v1292 = vmul.f32 %v1290, %v1245
  %v1293 = vmul.f32 %v1291, %v1246
  %v1294 = vadd.f32 %v1288, %v1292
  %v1295 = vadd.f32 %v1289, %v1293
  %v1296 = vsel %vm237, %v1294, %v1059
  %v1297 = vsel %vm237, %v1295, %v1060
  %1298 = vst [vmem:[%s15 + $0x10] sm:$0xff] %v1296
  %1299 = vst [vmem:[%s15 + $0x18] sm:$0xff] %v1297
  // Predicated region
  $region62: #{closed_call.59} parent=0 // pred_check
    _
  $region63: #{closed_call.59} parent=0 // pred_check_branch
    %1301 = sbr.rel (0) target = $region65
  $region64: #{closed_call.59} parent=0 // pred_region
    _
  $region65: #{closed_call.59} parent=0 // pred_fallthru
    _
  // Predicated region
  $region66: #{closed_call.59} parent=0 // pred_check
    _
  $region67: #{closed_call.59} parent=0 // pred_check_branch
    %1303 = sbr.rel (0) target = $region69
  $region68: #{closed_call.59} parent=0 // pred_region
    _
  $region69: #{closed_call.59} parent=0 // pred_fallthru
    _

// kernel: closed_call.64
$region0: #{closed_call.64}
  #allocation0 [shape = 'u32[]', space=smem, size = 0x4, offset = 0x4, fixed_abs, tag = 'smem constant byte address 0x4 - core index']
  #allocation1 [shape = 'u32[72,128]{1,0:T(1,128)}', space=vmem, size = 0x9000, scoped, tag = 'internal scratch']
  %s0 = inlined_call_operand.vmem [shape: bf16[128,32], index: 0, kind: input, shape index: {}]
  %s1 = inlined_call_operand.vmem [shape: bf16[32,4], index: 1, kind: input, shape index: {}]
  %s2 = inlined_call_operand.vmem [shape: f32[1,4], index: 2, kind: input, shape index: {}]
  %s3 = inlined_call_operand.vmem [shape: f32[128,4], index: 3, kind: output, shape index: {}]
  %s4 = sld [smem:[#allocation0]]
  $region22: #{closed_call.64} parent=0
    _
  %s6 = ssub.s32 1, %s4
  %s7 = scalar_select 0, %s6, %s4
  // Predicated region
  $region2: #{closed_call.64} parent=0 // pred_check
    _
  $region3: #{closed_call.64} parent=0 // pred_check_branch
    %9 = sbr.rel (0) target = $region5
  $region4: #{closed_call.64} parent=0 // pred_region
    _
  $region5: #{closed_call.64} parent=0 // pred_fallthru
    _
  // Predicated region
  $region6: #{closed_call.64} parent=0 // pred_check
    _
  $region7: #{closed_call.64} parent=0 // pred_check_branch
    %11 = sbr.rel (0) target = $region9
  $region8: #{closed_call.64} parent=0 // pred_region
    _
  $region9: #{closed_call.64} parent=0 // pred_fallthru
    _
  // Predicated region
  $region10: #{closed_call.64} parent=0 // pred_check
    _
  $region11: #{closed_call.64} parent=0 // pred_check_branch
    %13 = sbr.rel (0) target = $region13
  $region12: #{closed_call.64} parent=0 // pred_region
    _
  $region13: #{closed_call.64} parent=0 // pred_fallthru
    _
  %v15 = vld [vmem:[%s0] sm:$0xf]
  %v16 = vld [vmem:[%s0 + $0x4] sm:$0xf]
  %v17 = vld [vmem:[%s0 + $0x8] sm:$0xf]
  %v18 = vld [vmem:[%s0 + $0xc] sm:$0xf]
  %v19 = vld [vmem:[%s0 + $0x10] sm:$0xf]
  %v20 = vld [vmem:[%s0 + $0x14] sm:$0xf]
  %v21 = vld [vmem:[%s0 + $0x18] sm:$0xf]
  %v22 = vld [vmem:[%s0 + $0x1c] sm:$0xf]
  %v23 = vld [vmem:[%s0 + $0x20] sm:$0xf]
  %v24 = vld [vmem:[%s0 + $0x24] sm:$0xf]
  %v25 = vld [vmem:[%s0 + $0x28] sm:$0xf]
  %v26 = vld [vmem:[%s0 + $0x2c] sm:$0xf]
  %v27 = vld [vmem:[%s0 + $0x30] sm:$0xf]
  %v28 = vld [vmem:[%s0 + $0x34] sm:$0xf]
  %v29 = vld [vmem:[%s0 + $0x38] sm:$0xf]
  %v30 = vld [vmem:[%s0 + $0x3c] sm:$0xf]
  %v31 = vld [vmem:[%s1] sm:$0xf]
  %v32 = vld [vmem:[%s1 + $0x4] sm:$0xf]
  %v33 = vld [vmem:[%s1 + $0x8] sm:$0xf]
  %v34 = vld [vmem:[%s1 + $0xc] sm:$0xf]
  %v35 = vld [vmem:[%s2] sm:$0x1]
  %v37 = vperm.slane %v35, 0
  %v55 = vunpack.c.l.b16 %v15
  %v56 = vunpack.c.l.b16 %v16
  %v57 = vunpack.c.l.b16 %v17
  %v58 = vunpack.c.l.b16 %v18
  %v59 = vunpack.c.l.b16 %v19
  %v60 = vunpack.c.l.b16 %v20
  %v61 = vunpack.c.l.b16 %v21
  %v62 = vunpack.c.l.b16 %v22
  %v63 = vunpack.c.l.b16 %v23
  %v64 = vunpack.c.l.b16 %v24
  %v65 = vunpack.c.l.b16 %v25
  %v66 = vunpack.c.l.b16 %v26
  %v67 = vunpack.c.l.b16 %v27
  %v68 = vunpack.c.l.b16 %v28
  %v69 = vunpack.c.l.b16 %v29
  %v70 = vunpack.c.l.b16 %v30
  %v71 = vpack.c.b16 %v56, %v55
  %v72 = vpack.c.b16 %v58, %v57
  %v73 = vpack.c.b16 %v60, %v59
  %v74 = vpack.c.b16 %v62, %v61
  %v75 = vpack.c.b16 %v64, %v63
  %v76 = vpack.c.b16 %v66, %v65
  %v77 = vpack.c.b16 %v68, %v67
  %v78 = vpack.c.b16 %v70, %v69
  %v83 = vunpack.c.l.b16 %v31
  %v84 = vunpack.c.l.b16 %v32
  %v85 = vunpack.c.l.b16 %v33
  %v86 = vunpack.c.l.b16 %v34
  %v87 = vpack.c.b16 %v84, %v83
  %v88 = vpack.c.b16 %v86, %v85
  %vm91 = vcmask 261120
  %v93 = vsel %vm91, %v71, 0
  %v96 = vsel %vm91, %v72, 0
  %v99 = vsel %vm91, %v73, 0
  %v102 = vsel %vm91, %v74, 0
  %v105 = vsel %vm91, %v75, 0
  %v108 = vsel %vm91, %v76, 0
  %v111 = vsel %vm91, %v77, 0
  %v114 = vsel %vm91, %v78, 0
  %116 = vmatpush.bf16.msra.mxu0 0
  %117 = vmatpush.bf16.msra.mxu0 0
  %118 = vmatpush.bf16.msra.mxu0 0
  %119 = vmatpush.bf16.msra.mxu0 0
  %120 = vmatpush.bf16.msra.mxu0 0
  %121 = vmatpush.bf16.msra.mxu0 0
  %122 = vmatpush.bf16.msra.mxu0 %v88
  %123 = vmatpush.bf16.msra.mxu0 %v87
  %124 = vmatmul.bf16.gmra.mxu0 %v93
  %v125 = vpop.f32.mrf.mxu0
  %v126 = vadd.f32 %v37, %v125
  %v127 = vpop.f32.mrf.mxu0
  %v128 = vadd.f32 %v37, %v127
  %129 = vmatmul.bf16.gmra.mxu0 %v96
  %v130 = vpop.f32.mrf.mxu0
  %v131 = vadd.f32 %v37, %v130
  %v132 = vpop.f32.mrf.mxu0
  %v133 = vadd.f32 %v37, %v132
  %134 = vmatmul.bf16.gmra.mxu0 %v99
  %v135 = vpop.f32.mrf.mxu0
  %v136 = vadd.f32 %v37, %v135
  %v137 = vpop.f32.mrf.mxu0
  %v138 = vadd.f32 %v37, %v137
  %139 = vmatmul.bf16.gmra.mxu0 %v102
  %v140 = vpop.f32.mrf.mxu0
  %v141 = vadd.f32 %v37, %v140
  %v142 = vpop.f32.mrf.mxu0
  %v143 = vadd.f32 %v37, %v142
  %144 = vmatmul.bf16.gmra.mxu0 %v105
  %v145 = vpop.f32.mrf.mxu0
  %v146 = vadd.f32 %v37, %v145
  %v147 = vpop.f32.mrf.mxu0
  %v148 = vadd.f32 %v37, %v147
  %149 = vmatmul.bf16.gmra.mxu0 %v108
  %v150 = vpop.f32.mrf.mxu0
  %v151 = vadd.f32 %v37, %v150
  %v152 = vpop.f32.mrf.mxu0
  %v153 = vadd.f32 %v37, %v152
  %154 = vmatmul.bf16.gmra.mxu0 %v111
  %v155 = vpop.f32.mrf.mxu0
  %v156 = vadd.f32 %v37, %v155
  %v157 = vpop.f32.mrf.mxu0
  %v158 = vadd.f32 %v37, %v157
  %159 = vmatmul.bf16.gmra.mxu0 %v114
  %v160 = vpop.f32.mrf.mxu0
  %v161 = vadd.f32 %v37, %v160
  %v162 = vpop.f32.mrf.mxu0
  %v163 = vadd.f32 %v37, %v162
  %164 = vdwg.mxu0
  %vm165 = vcmask 31744
  %166 = vst.msk [vmem:[%s3] sm:$0xff] %vm165, %v126
  %167 = vst.msk [vmem:[%s3 + $0x8] sm:$0xff] %vm165, %v128
  %168 = vst.msk [vmem:[%s3 + $0x10] sm:$0xff] %vm165, %v131
  %169 = vst.msk [vmem:[%s3 + $0x18] sm:$0xff] %vm165, %v133
  %170 = vst.msk [vmem:[%s3 + $0x20] sm:$0xff] %vm165, %v136
  %171 = vst.msk [vmem:[%s3 + $0x28] sm:$0xff] %vm165, %v138
  %172 = vst.msk [vmem:[%s3 + $0x30] sm:$0xff] %vm165, %v141
  %173 = vst.msk [vmem:[%s3 + $0x38] sm:$0xff] %vm165, %v143
  %174 = vst.msk [vmem:[%s3 + $0x40] sm:$0xff] %vm165, %v146
  %175 = vst.msk [vmem:[%s3 + $0x48] sm:$0xff] %vm165, %v148
  %176 = vst.msk [vmem:[%s3 + $0x50] sm:$0xff] %vm165, %v151
  %177 = vst.msk [vmem:[%s3 + $0x58] sm:$0xff] %vm165, %v153
  %178 = vst.msk [vmem:[%s3 + $0x60] sm:$0xff] %vm165, %v156
  %179 = vst.msk [vmem:[%s3 + $0x68] sm:$0xff] %vm165, %v158
  %180 = vst.msk [vmem:[%s3 + $0x70] sm:$0xff] %vm165, %v161
  %181 = vst.msk [vmem:[%s3 + $0x78] sm:$0xff] %vm165, %v163
  // Predicated region
  $region14: #{closed_call.64} parent=0 // pred_check
    _
  $region15: #{closed_call.64} parent=0 // pred_check_branch
    %183 = sbr.rel (0) target = $region17
  $region16: #{closed_call.64} parent=0 // pred_region
    _
  $region17: #{closed_call.64} parent=0 // pred_fallthru
    _
  // Predicated region
  $region18: #{closed_call.64} parent=0 // pred_check
    _
  $region19: #{closed_call.64} parent=0 // pred_check_branch
    %185 = sbr.rel (0) target = $region21
  $region20: #{closed_call.64} parent=0 // pred_region
    _
  $region21: #{closed_call.64} parent=0 // pred_fallthru
    _

// kernel: closed_call.63
$region0: #{closed_call.63}
  #allocation0 [shape = 'u32[]', space=smem, size = 0x4, offset = 0x4, fixed_abs, tag = 'smem constant byte address 0x4 - core index']
  #allocation1 [shape = 'u32[72,128]{1,0:T(1,128)}', space=vmem, size = 0x9000, scoped, tag = 'internal scratch']
  %s0 = inlined_call_operand.vmem [shape: bf16[128,288], index: 0, kind: input, shape index: {}]
  %s1 = inlined_call_operand.vmem [shape: bf16[288,32], index: 1, kind: input, shape index: {}]
  %s2 = inlined_call_operand.vmem [shape: f32[1,32], index: 2, kind: input, shape index: {}]
  %s3 = inlined_call_operand.vmem [shape: f32[128,32], index: 3, kind: output, shape index: {}]
  %s4 = sld [smem:[#allocation0]]
  $region22: #{closed_call.63} parent=0
    _
  %s6 = ssub.s32 1, %s4
  %s7 = scalar_select 0, %s6, %s4
  // Predicated region
  $region2: #{closed_call.63} parent=0 // pred_check
    _
  $region3: #{closed_call.63} parent=0 // pred_check_branch
    %9 = sbr.rel (0) target = $region5
  $region4: #{closed_call.63} parent=0 // pred_region
    _
  $region5: #{closed_call.63} parent=0 // pred_fallthru
    _
  // Predicated region
  $region6: #{closed_call.63} parent=0 // pred_check
    _
  $region7: #{closed_call.63} parent=0 // pred_check_branch
    %11 = sbr.rel (0) target = $region9
  $region8: #{closed_call.63} parent=0 // pred_region
    _
  $region9: #{closed_call.63} parent=0 // pred_fallthru
    _
  // Predicated region
  $region10: #{closed_call.63} parent=0 // pred_check
    _
  $region11: #{closed_call.63} parent=0 // pred_check_branch
    %13 = sbr.rel (0) target = $region13
  $region12: #{closed_call.63} parent=0 // pred_region
    _
  $region13: #{closed_call.63} parent=0 // pred_fallthru
    _
  %v15 = vld [vmem:[%s0] sm:$0xff]
  %v16 = vld [vmem:[%s0 + $0x8] sm:$0xf]
  %v17 = vld [vmem:[%s0 + $0xc] sm:$0xff]
  %v18 = vld [vmem:[%s0 + $0x14] sm:$0xf]
  %v19 = vld [vmem:[%s0 + $0x18] sm:$0xff]
  %v20 = vld [vmem:[%s0 + $0x20] sm:$0xf]
  %v21 = vld [vmem:[%s0 + $0x24] sm:$0xff]
  %v22 = vld [vmem:[%s0 + $0x2c] sm:$0xf]
  %v23 = vld [vmem:[%s0 + $0x30] sm:$0xff]
  %v24 = vld [vmem:[%s0 + $0x38] sm:$0xf]
  %v25 = vld [vmem:[%s0 + $0x3c] sm:$0xff]
  %v26 = vld [vmem:[%s0 + $0x44] sm:$0xf]
  %v27 = vld [vmem:[%s0 + $0x48] sm:$0xff]
  %v28 = vld [vmem:[%s0 + $0x50] sm:$0xf]
  %v29 = vld [vmem:[%s0 + $0x54] sm:$0xff]
  %v30 = vld [vmem:[%s0 + $0x5c] sm:$0xf]
  %v31 = vld [vmem:[%s0 + $0x60] sm:$0xff]
  %v32 = vld [vmem:[%s0 + $0x68] sm:$0xf]
  %v33 = vld [vmem:[%s0 + $0x6c] sm:$0xff]
  %v34 = vld [vmem:[%s0 + $0x74] sm:$0xf]
  %v35 = vld [vmem:[%s0 + $0x78] sm:$0xff]
  %v36 = vld [vmem:[%s0 + $0x80] sm:$0xf]
  %v37 = vld [vmem:[%s0 + $0x84] sm:$0xff]
  %v38 = vld [vmem:[%s0 + $0x8c] sm:$0xf]
  %v39 = vld [vmem:[%s0 + $0x90] sm:$0xff]
  %v40 = vld [vmem:[%s0 + $0x98] sm:$0xf]
  %v41 = vld [vmem:[%s0 + $0x9c] sm:$0xff]
  %v42 = vld [vmem:[%s0 + $0xa4] sm:$0xf]
  %v43 = vld [vmem:[%s0 + $0xa8] sm:$0xff]
  %v44 = vld [vmem:[%s0 + $0xb0] sm:$0xf]
  %v45 = vld [vmem:[%s0 + $0xb4] sm:$0xff]
  %v46 = vld [vmem:[%s0 + $0xbc] sm:$0xf]
  %v47 = vld [vmem:[%s1] sm:$0xf]
  %v48 = vld [vmem:[%s1 + $0x4] sm:$0xf]
  %v49 = vld [vmem:[%s1 + $0x8] sm:$0xf]
  %v50 = vld [vmem:[%s1 + $0xc] sm:$0xf]
  %v51 = vld [vmem:[%s1 + $0x10] sm:$0xf]
  %v52 = vld [vmem:[%s1 + $0x14] sm:$0xf]
  %v53 = vld [vmem:[%s1 + $0x18] sm:$0xf]
  %v54 = vld [vmem:[%s1 + $0x1c] sm:$0xf]
  %v55 = vld [vmem:[%s1 + $0x20] sm:$0xf]
  %v56 = vld [vmem:[%s1 + $0x24] sm:$0xf]
  %v57 = vld [vmem:[%s1 + $0x28] sm:$0xf]
  %v58 = vld [vmem:[%s1 + $0x2c] sm:$0xf]
  %v59 = vld [vmem:[%s1 + $0x30] sm:$0xf]
  %v60 = vld [vmem:[%s1 + $0x34] sm:$0xf]
  %v61 = vld [vmem:[%s1 + $0x38] sm:$0xf]
  %v62 = vld [vmem:[%s1 + $0x3c] sm:$0xf]
  %v63 = vld [vmem:[%s1 + $0x40] sm:$0xf]
  %v64 = vld [vmem:[%s1 + $0x44] sm:$0xf]
  %v65 = vld [vmem:[%s1 + $0x48] sm:$0xf]
  %v66 = vld [vmem:[%s1 + $0x4c] sm:$0xf]
  %v67 = vld [vmem:[%s1 + $0x50] sm:$0xf]
  %v68 = vld [vmem:[%s1 + $0x54] sm:$0xf]
  %v69 = vld [vmem:[%s1 + $0x58] sm:$0xf]
  %v70 = vld [vmem:[%s1 + $0x5c] sm:$0xf]
  %v71 = vld [vmem:[%s1 + $0x60] sm:$0xf]
  %v72 = vld [vmem:[%s1 + $0x64] sm:$0xf]
  %v73 = vld [vmem:[%s1 + $0x68] sm:$0xf]
  %v74 = vld [vmem:[%s1 + $0x6c] sm:$0xf]
  %v75 = vld [vmem:[%s1 + $0x70] sm:$0xf]
  %v76 = vld [vmem:[%s1 + $0x74] sm:$0xf]
  %v77 = vld [vmem:[%s1 + $0x78] sm:$0xf]
  %v78 = vld [vmem:[%s1 + $0x7c] sm:$0xf]
  %v79 = vld [vmem:[%s1 + $0x80] sm:$0xf]
  %v80 = vld [vmem:[%s1 + $0x84] sm:$0xf]
  %v81 = vld [vmem:[%s1 + $0x88] sm:$0xf]
  %v82 = vld [vmem:[%s1 + $0x8c] sm:$0xf]
  %v83 = vld [vmem:[%s2] sm:$0x1]
  %v85 = vperm.slane %v83, 0
  %v119 = vunpack.c.l.b16 %v15
  %v120 = vunpack.c.h.b16 %v15
  %v121 = vunpack.c.l.b16 %v16
  %v122 = vunpack.c.l.b16 %v17
  %v123 = vunpack.c.h.b16 %v17
  %v124 = vunpack.c.l.b16 %v18
  %v125 = vunpack.c.l.b16 %v19
  %v126 = vunpack.c.h.b16 %v19
  %v127 = vunpack.c.l.b16 %v20
  %v128 = vunpack.c.l.b16 %v21
  %v129 = vunpack.c.h.b16 %v21
  %v130 = vunpack.c.l.b16 %v22
  %v131 = vunpack.c.l.b16 %v23
  %v132 = vunpack.c.h.b16 %v23
  %v133 = vunpack.c.l.b16 %v24
  %v134 = vunpack.c.l.b16 %v25
  %v135 = vunpack.c.h.b16 %v25
  %v136 = vunpack.c.l.b16 %v26
  %v137 = vunpack.c.l.b16 %v27
  %v138 = vunpack.c.h.b16 %v27
  %v139 = vunpack.c.l.b16 %v28
  %v140 = vunpack.c.l.b16 %v29
  %v141 = vunpack.c.h.b16 %v29
  %v142 = vunpack.c.l.b16 %v30
  %v143 = vunpack.c.l.b16 %v31
  %v144 = vunpack.c.h.b16 %v31
  %v145 = vunpack.c.l.b16 %v32
  %v146 = vunpack.c.l.b16 %v33
  %v147 = vunpack.c.h.b16 %v33
  %v148 = vunpack.c.l.b16 %v34
  %v149 = vunpack.c.l.b16 %v35
  %v150 = vunpack.c.h.b16 %v35
  %v151 = vunpack.c.l.b16 %v36
  %v152 = vunpack.c.l.b16 %v37
  %v153 = vunpack.c.h.b16 %v37
  %v154 = vunpack.c.l.b16 %v38
  %v155 = vunpack.c.l.b16 %v39
  %v156 = vunpack.c.h.b16 %v39
  %v157 = vunpack.c.l.b16 %v40
  %v158 = vunpack.c.l.b16 %v41
  %v159 = vunpack.c.h.b16 %v41
  %v160 = vunpack.c.l.b16 %v42
  %v161 = vunpack.c.l.b16 %v43
  %v162 = vunpack.c.h.b16 %v43
  %v163 = vunpack.c.l.b16 %v44
  %v164 = vunpack.c.l.b16 %v45
  %v165 = vunpack.c.h.b16 %v45
  %v166 = vunpack.c.l.b16 %v46
  %v167 = vpack.c.b16 %v122, %v119
  %v168 = vpack.c.b16 %v123, %v120
  %v169 = vpack.c.b16 %v124, %v121
  %v170 = vpack.c.b16 %v128, %v125
  %v171 = vpack.c.b16 %v129, %v126
  %v172 = vpack.c.b16 %v130, %v127
  %v173 = vpack.c.b16 %v134, %v131
  %v174 = vpack.c.b16 %v135, %v132
  %v175 = vpack.c.b16 %v136, %v133
  %v176 = vpack.c.b16 %v140, %v137
  %v177 = vpack.c.b16 %v141, %v138
  %v178 = vpack.c.b16 %v142, %v139
  %v179 = vpack.c.b16 %v146, %v143
  %v180 = vpack.c.b16 %v147, %v144
  %v181 = vpack.c.b16 %v148, %v145
  %v182 = vpack.c.b16 %v152, %v149
  %v183 = vpack.c.b16 %v153, %v150
  %v184 = vpack.c.b16 %v154, %v151
  %v185 = vpack.c.b16 %v158, %v155
  %v186 = vpack.c.b16 %v159, %v156
  %v187 = vpack.c.b16 %v160, %v157
  %v188 = vpack.c.b16 %v164, %v161
  %v189 = vpack.c.b16 %v165, %v162
  %v190 = vpack.c.b16 %v166, %v163
  %v243 = vunpack.c.l.b16 %v47
  %v244 = vunpack.c.l.b16 %v48
  %v245 = vunpack.c.l.b16 %v49
  %v246 = vunpack.c.l.b16 %v50
  %v247 = vunpack.c.l.b16 %v51
  %v248 = vunpack.c.l.b16 %v52
  %v249 = vunpack.c.l.b16 %v53
  %v250 = vunpack.c.l.b16 %v54
  %v251 = vunpack.c.l.b16 %v55
  %v252 = vunpack.c.l.b16 %v56
  %v253 = vunpack.c.l.b16 %v57
  %v254 = vunpack.c.l.b16 %v58
  %v255 = vunpack.c.l.b16 %v59
  %v256 = vunpack.c.l.b16 %v60
  %v257 = vunpack.c.l.b16 %v61
  %v258 = vunpack.c.l.b16 %v62
  %v259 = vunpack.c.l.b16 %v63
  %v260 = vunpack.c.l.b16 %v64
  %v261 = vunpack.c.l.b16 %v65
  %v262 = vunpack.c.l.b16 %v66
  %v263 = vunpack.c.l.b16 %v67
  %v264 = vunpack.c.l.b16 %v68
  %v265 = vunpack.c.l.b16 %v69
  %v266 = vunpack.c.l.b16 %v70
  %v267 = vunpack.c.l.b16 %v71
  %v268 = vunpack.c.l.b16 %v72
  %v269 = vunpack.c.l.b16 %v73
  %v270 = vunpack.c.l.b16 %v74
  %v271 = vunpack.c.l.b16 %v75
  %v272 = vunpack.c.l.b16 %v76
  %v273 = vunpack.c.l.b16 %v77
  %v274 = vunpack.c.l.b16 %v78
  %v275 = vunpack.c.l.b16 %v79
  %v276 = vunpack.c.l.b16 %v80
  %v277 = vunpack.c.l.b16 %v81
  %v278 = vunpack.c.l.b16 %v82
  %v279 = vpack.c.b16 %v244, %v243
  %v280 = vpack.c.b16 %v246, %v245
  %v281 = vpack.c.b16 %v248, %v247
  %v282 = vpack.c.b16 %v250, %v249
  %v283 = vpack.c.b16 %v252, %v251
  %v284 = vpack.c.b16 %v254, %v253
  %v285 = vpack.c.b16 %v256, %v255
  %v286 = vpack.c.b16 %v258, %v257
  %v287 = vpack.c.b16 %v260, %v259
  %v288 = vpack.c.b16 %v262, %v261
  %v289 = vpack.c.b16 %v264, %v263
  %v290 = vpack.c.b16 %v266, %v265
  %v291 = vpack.c.b16 %v268, %v267
  %v292 = vpack.c.b16 %v270, %v269
  %v293 = vpack.c.b16 %v272, %v271
  %v294 = vpack.c.b16 %v274, %v273
  %v295 = vpack.c.b16 %v276, %v275
  %v296 = vpack.c.b16 %v278, %v277
  %vm315 = vcmask 261120
  %v317 = vsel %vm315, %v169, 0
  %v320 = vsel %vm315, %v172, 0
  %v323 = vsel %vm315, %v175, 0
  %v326 = vsel %vm315, %v178, 0
  %v329 = vsel %vm315, %v181, 0
  %v332 = vsel %vm315, %v184, 0
  %v335 = vsel %vm315, %v187, 0
  %v338 = vsel %vm315, %v190, 0
  %340 = vmatpush.bf16.msra.mxu0 %v286
  %341 = vmatpush.bf16.msra.mxu0 %v285
  %342 = vmatpush.bf16.msra.mxu0 %v284
  %343 = vmatpush.bf16.msra.mxu0 %v283
  %344 = vmatpush.bf16.msra.mxu0 %v282
  %345 = vmatpush.bf16.msra.mxu0 %v281
  %346 = vmatpush.bf16.msra.mxu0 %v280
  %347 = vmatpush.bf16.msra.mxu0 %v279
  %348 = vmatmul.bf16.gmra.mxu0 %v167
  %v349 = vpop.f32.mrf.mxu0
  %v350 = vadd.f32 %v85, %v349
  %v351 = vpop.f32.mrf.mxu0
  %v352 = vadd.f32 %v85, %v351
  %353 = vmatmul.bf16.gmra.mxu0 %v170
  %v354 = vpop.f32.mrf.mxu0
  %v355 = vadd.f32 %v85, %v354
  %v356 = vpop.f32.mrf.mxu0
  %v357 = vadd.f32 %v85, %v356
  %358 = vmatmul.bf16.gmra.mxu0 %v173
  %v359 = vpop.f32.mrf.mxu0
  %v360 = vadd.f32 %v85, %v359
  %v361 = vpop.f32.mrf.mxu0
  %v362 = vadd.f32 %v85, %v361
  %363 = vmatmul.bf16.gmra.mxu0 %v176
  %v364 = vpop.f32.mrf.mxu0
  %v365 = vadd.f32 %v85, %v364
  %v366 = vpop.f32.mrf.mxu0
  %v367 = vadd.f32 %v85, %v366
  %368 = vmatmul.bf16.gmra.mxu0 %v179
  %v369 = vpop.f32.mrf.mxu0
  %v370 = vadd.f32 %v85, %v369
  %v371 = vpop.f32.mrf.mxu0
  %v372 = vadd.f32 %v85, %v371
  %373 = vmatmul.bf16.gmra.mxu0 %v182
  %v374 = vpop.f32.mrf.mxu0
  %v375 = vadd.f32 %v85, %v374
  %v376 = vpop.f32.mrf.mxu0
  %v377 = vadd.f32 %v85, %v376
  %378 = vmatmul.bf16.gmra.mxu0 %v185
  %v379 = vpop.f32.mrf.mxu0
  %v380 = vadd.f32 %v85, %v379
  %v381 = vpop.f32.mrf.mxu0
  %v382 = vadd.f32 %v85, %v381
  %383 = vmatmul.bf16.gmra.mxu0 %v188
  %v384 = vpop.f32.mrf.mxu0
  %v385 = vadd.f32 %v85, %v384
  %v386 = vpop.f32.mrf.mxu0
  %v387 = vadd.f32 %v85, %v386
  %388 = vdwg.mxu0
  %389 = vmatpush.bf16.msra.mxu0 %v294
  %390 = vmatpush.bf16.msra.mxu0 %v293
  %391 = vmatpush.bf16.msra.mxu0 %v292
  %392 = vmatpush.bf16.msra.mxu0 %v291
  %393 = vmatpush.bf16.msra.mxu0 %v290
  %394 = vmatpush.bf16.msra.mxu0 %v289
  %395 = vmatpush.bf16.msra.mxu0 %v288
  %396 = vmatpush.bf16.msra.mxu0 %v287
  %397 = vmatmul.bf16.gmra.mxu0 %v168
  %v398 = vpop.f32.mrf.mxu0
  %v399 = vadd.f32 %v350, %v398
  %v400 = vpop.f32.mrf.mxu0
  %v401 = vadd.f32 %v352, %v400
  %402 = vmatmul.bf16.gmra.mxu0 %v171
  %v403 = vpop.f32.mrf.mxu0
  %v404 = vadd.f32 %v355, %v403
  %v405 = vpop.f32.mrf.mxu0
  %v406 = vadd.f32 %v357, %v405
  %407 = vmatmul.bf16.gmra.mxu0 %v174
  %v408 = vpop.f32.mrf.mxu0
  %v409 = vadd.f32 %v360, %v408
  %v410 = vpop.f32.mrf.mxu0
  %v411 = vadd.f32 %v362, %v410
  %412 = vmatmul.bf16.gmra.mxu0 %v177
  %v413 = vpop.f32.mrf.mxu0
  %v414 = vadd.f32 %v365, %v413
  %v415 = vpop.f32.mrf.mxu0
  %v416 = vadd.f32 %v367, %v415
  %417 = vmatmul.bf16.gmra.mxu0 %v180
  %v418 = vpop.f32.mrf.mxu0
  %v419 = vadd.f32 %v370, %v418
  %v420 = vpop.f32.mrf.mxu0
  %v421 = vadd.f32 %v372, %v420
  %422 = vmatmul.bf16.gmra.mxu0 %v183
  %v423 = vpop.f32.mrf.mxu0
  %v424 = vadd.f32 %v375, %v423
  %v425 = vpop.f32.mrf.mxu0
  %v426 = vadd.f32 %v377, %v425
  %427 = vmatmul.bf16.gmra.mxu0 %v186
  %v428 = vpop.f32.mrf.mxu0
  %v429 = vadd.f32 %v380, %v428
  %v430 = vpop.f32.mrf.mxu0
  %v431 = vadd.f32 %v382, %v430
  %432 = vmatmul.bf16.gmra.mxu0 %v189
  %v433 = vpop.f32.mrf.mxu0
  %v434 = vadd.f32 %v385, %v433
  %v435 = vpop.f32.mrf.mxu0
  %v436 = vadd.f32 %v387, %v435
  %437 = vdwg.mxu0
  %438 = vmatpush.bf16.msra.mxu0 0
  %439 = vmatpush.bf16.msra.mxu0 0
  %440 = vmatpush.bf16.msra.mxu0 0
  %441 = vmatpush.bf16.msra.mxu0 0
  %442 = vmatpush.bf16.msra.mxu0 0
  %443 = vmatpush.bf16.msra.mxu0 0
  %444 = vmatpush.bf16.msra.mxu0 %v296
  %445 = vmatpush.bf16.msra.mxu0 %v295
  %446 = vmatmul.bf16.gmra.mxu0 %v317
  %v447 = vpop.f32.mrf.mxu0
  %v448 = vadd.f32 %v399, %v447
  %v449 = vpop.f32.mrf.mxu0
  %v450 = vadd.f32 %v401, %v449
  %451 = vmatmul.bf16.gmra.mxu0 %v320
  %v452 = vpop.f32.mrf.mxu0
  %v453 = vadd.f32 %v404, %v452
  %v454 = vpop.f32.mrf.mxu0
  %v455 = vadd.f32 %v406, %v454
  %456 = vmatmul.bf16.gmra.mxu0 %v323
  %v457 = vpop.f32.mrf.mxu0
  %v458 = vadd.f32 %v409, %v457
  %v459 = vpop.f32.mrf.mxu0
  %v460 = vadd.f32 %v411, %v459
  %461 = vmatmul.bf16.gmra.mxu0 %v326
  %v462 = vpop.f32.mrf.mxu0
  %v463 = vadd.f32 %v414, %v462
  %v464 = vpop.f32.mrf.mxu0
  %v465 = vadd.f32 %v416, %v464
  %466 = vmatmul.bf16.gmra.mxu0 %v329
  %v467 = vpop.f32.mrf.mxu0
  %v468 = vadd.f32 %v419, %v467
  %v469 = vpop.f32.mrf.mxu0
  %v470 = vadd.f32 %v421, %v469
  %471 = vmatmul.bf16.gmra.mxu0 %v332
  %v472 = vpop.f32.mrf.mxu0
  %v473 = vadd.f32 %v424, %v472
  %v474 = vpop.f32.mrf.mxu0
  %v475 = vadd.f32 %v426, %v474
  %476 = vmatmul.bf16.gmra.mxu0 %v335
  %v477 = vpop.f32.mrf.mxu0
  %v478 = vadd.f32 %v429, %v477
  %v479 = vpop.f32.mrf.mxu0
  %v480 = vadd.f32 %v431, %v479
  %481 = vmatmul.bf16.gmra.mxu0 %v338
  %v482 = vpop.f32.mrf.mxu0
  %v483 = vadd.f32 %v434, %v482
  %v484 = vpop.f32.mrf.mxu0
  %v485 = vadd.f32 %v436, %v484
  %486 = vdwg.mxu0
  %487 = vst.msk [vmem:[%s3] sm:$0xff] %vm315, %v448
  %488 = vst.msk [vmem:[%s3 + $0x8] sm:$0xff] %vm315, %v450
  %489 = vst.msk [vmem:[%s3 + $0x10] sm:$0xff] %vm315, %v453
  %490 = vst.msk [vmem:[%s3 + $0x18] sm:$0xff] %vm315, %v455
  %491 = vst.msk [vmem:[%s3 + $0x20] sm:$0xff] %vm315, %v458
  %492 = vst.msk [vmem:[%s3 + $0x28] sm:$0xff] %vm315, %v460
  %493 = vst.msk [vmem:[%s3 + $0x30] sm:$0xff] %vm315, %v463
  %494 = vst.msk [vmem:[%s3 + $0x38] sm:$0xff] %vm315, %v465
  %495 = vst.msk [vmem:[%s3 + $0x40] sm:$0xff] %vm315, %v468
  %496 = vst.msk [vmem:[%s3 + $0x48] sm:$0xff] %vm315, %v470
  %497 = vst.msk [vmem:[%s3 + $0x50] sm:$0xff] %vm315, %v473
  %498 = vst.msk [vmem:[%s3 + $0x58] sm:$0xff] %vm315, %v475
  %499 = vst.msk [vmem:[%s3 + $0x60] sm:$0xff] %vm315, %v478
  %500 = vst.msk [vmem:[%s3 + $0x68] sm:$0xff] %vm315, %v480
  %501 = vst.msk [vmem:[%s3 + $0x70] sm:$0xff] %vm315, %v483
  %502 = vst.msk [vmem:[%s3 + $0x78] sm:$0xff] %vm315, %v485
  // Predicated region
  $region14: #{closed_call.63} parent=0 // pred_check
    _
  $region15: #{closed_call.63} parent=0 // pred_check_branch
    %504 = sbr.rel (0) target = $region17
  $region16: #{closed_call.63} parent=0 // pred_region
    _
  $region17: #{closed_call.63} parent=0 // pred_fallthru
    _
  // Predicated region
  $region18: #{closed_call.63} parent=0 // pred_check
    _
  $region19: #{closed_call.63} parent=0 // pred_check_branch
    %506 = sbr.rel (0) target = $region21
  $region20: #{closed_call.63} parent=0 // pred_region
    _
  $region21: #{closed_call.63} parent=0 // pred_fallthru
    _

</llo_original>
